<compile_context>
chip_gen: v6e
topology: v6e:2x2x1
jax: 0.10.0
libtpu: 0.0.40
codegen_flags: <defaults>
</compile_context>

<pallas_src>
import jax
import jax.numpy as jnp
from jax import lax
from jax.experimental import pallas as pl
from jax.experimental.pallas import tpu as pltpu


# ---------------------------------------------------------------------------
# Fused kernel
# ---------------------------------------------------------------------------

def _make_fused_kernel(*, stride, expand, use_res, tho, W, Cin, Ch, oup,
                       compute_dtype):
    """Build the fused InvertedResidual kernel for one (batch, row-tile) step.

    Ref layout (in the order of in_specs / out_specs / scratch_shapes):
      x_main : (1, tho*stride, W, Cin)   input rows of this tile
      x_top  : (1, 1, W, Cin)            row just above the tile (clamped)
      x_bot  : (1, 1, W, Cin)            row just below the tile (stride==1 only)
      w1,b1  : (Cin, Ch), (1, Ch)        expand weights (BN1 folded)  [if expand]
      wdw    : (9, Ch)                   depthwise weights (BN2 folded), f32
      b2     : (1, Ch)
      w3,b3  : (Ch, oup), (1, oup)       project weights (BN3 folded)
      out    : (1, tho, Wo, oup)
      hp     : VMEM (tho*stride + 2, W + 2, Ch)  zero-padded hidden slab
    """
    th_in = tho * stride
    Wp = W + 2
    Wo = W if stride == 1 else W // 2
    f32 = jnp.float32

    def kernel(*refs):
        it = iter(refs)
        x_ref = next(it)
        xt_ref = next(it)
        xb_ref = next(it) if stride == 1 else None
        if expand:
            w1_ref = next(it)
            b1_ref = next(it)
        wdw_ref = next(it)
        b2_ref = next(it)
        w3_ref = next(it)
        b3_ref = next(it)
        o_ref = next(it)
        hp_ref = next(it)

        i = pl.program_id(1)
        nt = pl.num_programs(1)

        def expand_rows(xv):
            # xv: (r, W, Cin) -> hidden rows (r, W, Ch) in f32.
            r = xv.shape[0]
            if expand:
                h = jnp.dot(xv.reshape(r * W, Cin).astype(compute_dtype),
                            w1_ref[...],
                            preferred_element_type=f32)
                h = jnp.clip(h + b1_ref[...], 0.0, 6.0)
                return h.reshape(r, W, Ch)
            # expand_ratio == 1: hidden is the input itself (no BN/ReLU here).
            return xv.astype(f32)

        # ---- stage 1: build zero-padded hidden slab in VMEM -----------------
        zcol = jnp.zeros((th_in + 2, 1, Ch), compute_dtype)
        hp_ref[:, 0:1, :] = zcol                 # left  zero-pad column
        hp_ref[:, Wp - 1:Wp, :] = zcol           # right zero-pad column

        hp_ref[1:1 + th_in, 1:1 + W, :] = (
            expand_rows(x_ref[0]).astype(compute_dtype))

        h_top = expand_rows(xt_ref[0])           # (1, W, Ch)
        h_top = jnp.where(i > 0, h_top, 0.0)     # image-top zero pad row
        hp_ref[0:1, 1:1 + W, :] = h_top.astype(compute_dtype)

        if stride == 1:
            h_bot = expand_rows(xb_ref[0])
            h_bot = jnp.where(i < nt - 1, h_bot, 0.0)  # image-bottom zero pad
            hp_ref[th_in + 1:th_in + 2, 1:1 + W, :] = h_bot.astype(compute_dtype)

        # ---- stage 2: 3x3 depthwise conv + BN bias + ReLU6 ------------------
        wdw = wdw_ref[...].astype(f32)           # (9, Ch)
        acc = jnp.zeros((tho, Wo, Ch), f32)
        for dh in range(3):
            for dw in range(3):
                k = dh * 3 + dw
                if stride == 1:
                    win = hp_ref[dh:dh + tho, dw:dw + W, :].astype(f32)
                else:
                    # Only the strided positions are read: strided columns via
                    # pl.ds, even rows via a leading-dim reshape.
                    win = hp_ref[dh:dh + 2 * tho, pl.ds(dw, Wo, 2), :]
                    win = win.reshape(tho, 2, Wo, Ch)[:, 0].astype(f32)
                acc = acc + win * wdw[k:k + 1, :]
        y = jnp.clip(acc + b2_ref[...], 0.0, 6.0)        # (tho, Wo, Ch) f32

        # ---- stage 3: 1x1 project conv + BN bias [+ residual] ---------------
        out = jnp.dot(y.reshape(tho * Wo, Ch).astype(compute_dtype),
                      w3_ref[...],
                      preferred_element_type=f32)
        out = out + b3_ref[...]                          # (tho*Wo, oup)
        if use_res:
            # residual is exactly the main input block (stride==1, Cin==oup)
            out = out + x_ref[0].reshape(tho * W, Cin).astype(f32)
        o_ref[0] = out.reshape(tho, Wo, oup).astype(o_ref.dtype)

    return kernel


# ---------------------------------------------------------------------------
# Wrapper
# ---------------------------------------------------------------------------

def _choose_row_tile(Ho, stride, W, Ch, comp_bytes, budget=6 * 1024 * 1024):
    """Largest output-row tile whose working set stays well inside VMEM
    (re-derived per shape so the same kernel fits v7x's smaller VMEM)."""
    cands = [t for t in range(8, Ho + 1, 8) if Ho % t == 0] or [Ho]
    best = cands[0]
    for t in cands:
        slab = (t * stride + 2) * (W + 2) * Ch * comp_bytes   # hidden slab
        work = 3 * t * W * Ch * 4                             # f32 temporaries
        if slab + work <= budget:
            best = t
    return best


def _fused_inverted_residual_nhwc(x, p, compute_dtype):
    """x: (N, H, W, Cin) NHWC.  Returns (N, Ho, Wo, oup) NHWC."""
    N, H, W, Cin = x.shape
    stride = p["stride"]
    expand = p["expand_ratio"] != 1
    use_res = p["use_res_connect"]
    Ch = p["hidden"]
    oup = p["oup"]

    if stride == 2:
        assert H % 2 == 0 and W % 2 == 0, "stride-2 path assumes even H, W"
        # TODO(synk): odd spatial dims with stride 2 need a ragged last tile.
    Ho = H if stride == 1 else H // 2
    Wo = W if stride == 1 else W // 2

    comp_bytes = jnp.dtype(compute_dtype).itemsize
    tho = _choose_row_tile(Ho, stride, W, Ch, comp_bytes)
    nt = Ho // tho
    th_in = tho * stride

    # Fold BN scales into the conv weights once, outside the kernel.
    f32 = jnp.float32
    if expand:
        w1 = (p["w1"].astype(f32) * p["bn1_scale"][None, :]).astype(compute_dtype)
        b1 = p["bn1_bias"].reshape(1, Ch).astype(f32)
    wdw = (p["w_dw"].astype(f32) * p["bn2_scale"]).reshape(9, Ch)
    b2 = p["bn2_bias"].reshape(1, Ch).astype(f32)
    w3 = (p["w3"].astype(f32) * p["bn3_scale"][None, :]).astype(compute_dtype)
    b3 = p["bn3_bias"].reshape(1, oup).astype(f32)

    in_specs = [
        pl.BlockSpec((1, th_in, W, Cin), lambda n, i: (n, i, 0, 0)),
        pl.BlockSpec((1, 1, W, Cin),
                     lambda n, i: (n, jnp.maximum(i * th_in - 1, 0), 0, 0)),
    ]
    args = [x, x]
    if stride == 1:
        in_specs.append(
            pl.BlockSpec((1, 1, W, Cin),
                         lambda n, i: (n, jnp.minimum((i + 1) * th_in, H - 1),
                                       0, 0)))
        args.append(x)
    if expand:
        in_specs += [pl.BlockSpec((Cin, Ch), lambda n, i: (0, 0)),
                     pl.BlockSpec((1, Ch), lambda n, i: (0, 0))]
        args += [w1, b1]
    in_specs += [pl.BlockSpec((9, Ch), lambda n, i: (0, 0)),
                 pl.BlockSpec((1, Ch), lambda n, i: (0, 0)),
                 pl.BlockSpec((Ch, oup), lambda n, i: (0, 0)),
                 pl.BlockSpec((1, oup), lambda n, i: (0, 0))]
    args += [wdw, b2, w3, b3]

    kernel = _make_fused_kernel(stride=stride, expand=expand, use_res=use_res,
                                tho=tho, W=W, Cin=Cin, Ch=Ch, oup=oup,
                                compute_dtype=compute_dtype)

    out = pl.pallas_call(
        kernel,
        out_shape=jax.ShapeDtypeStruct((N, Ho, Wo, oup), x.dtype),
        grid_spec=pltpu.PrefetchScalarGridSpec(
            num_scalar_prefetch=0,
            grid=(N, nt),
            in_specs=in_specs,
            out_specs=pl.BlockSpec((1, tho, Wo, oup), lambda n, i: (n, i, 0, 0)),
            scratch_shapes=[pltpu.VMEM((th_in + 2, W + 2, Ch), compute_dtype)],
        ),
        compiler_params=pltpu.CompilerParams(
            dimension_semantics=("parallel", "parallel"),
            vmem_limit_bytes=32 * 1024 * 1024),
    )(*args)
    return out


def inverted_residual_forward_nhwc(params, x_nhwc, compute_dtype=jnp.bfloat16):
    """NHWC in/out -- use this to avoid HBM layout transposes in an NHWC net."""
    return _fused_inverted_residual_nhwc(x_nhwc, params, compute_dtype)


def inverted_residual_forward(params, x_nchw, compute_dtype=jnp.bfloat16):
    """Matches PyTorch InvertedResidual.forward (inference-mode BN), NCHW in/out."""
    x = jnp.transpose(x_nchw, (0, 2, 3, 1))          # NCHW -> NHWC
    out = _fused_inverted_residual_nhwc(x, params, compute_dtype)
    return jnp.transpose(out, (0, 3, 1, 2))          # NHWC -> NCHW


# ---------------------------------------------------------------------------
# Parameters (inference-mode BatchNorm folded to per-channel scale/bias)
# ---------------------------------------------------------------------------

def _fold_bn(gamma, beta, mean, var, eps=1e-5):
    scale = gamma / jnp.sqrt(var + eps)
    bias = beta - mean * scale
    return scale.astype(jnp.float32), bias.astype(jnp.float32)


def init_inverted_residual_params(key, inp, oup, stride, expand_ratio):
    hidden = int(inp * expand_ratio)
    ks = jax.random.split(key, 8)
    p = {"inp": inp, "oup": oup, "stride": stride, "expand_ratio": expand_ratio,
         "hidden": hidden,
         "use_res_connect": (stride == 1 and inp == oup)}

    def bn(k, c):
        k1, k2, k3, k4 = jax.random.split(k, 4)
        gamma = 1.0 + 0.1 * jax.random.normal(k1, (c,), jnp.float32)
        beta = 0.1 * jax.random.normal(k2, (c,), jnp.float32)
        mean = 0.1 * jax.random.normal(k3, (c,), jnp.float32)
        var = 1.0 + 0.1 * jax.random.uniform(k4, (c,), jnp.float32)
        return _fold_bn(gamma, beta, mean, var)

    if expand_ratio != 1:
        # PyTorch 1x1 weight (hidden, inp, 1, 1) -> matmul weight (inp, hidden)
        p["w1"] = 0.1 * jax.random.normal(ks[0], (inp, hidden), jnp.float32)
        p["bn1_scale"], p["bn1_bias"] = bn(ks[1], hidden)
    # PyTorch depthwise weight (hidden, 1, 3, 3) -> (3, 3, hidden)
    p["w_dw"] = 0.1 * jax.random.normal(ks[2], (3, 3, hidden), jnp.float32)
    p["bn2_scale"], p["bn2_bias"] = bn(ks[3], hidden)
    # PyTorch 1x1 weight (oup, hidden, 1, 1) -> (hidden, oup)
    p["w3"] = 0.1 * jax.random.normal(ks[4], (hidden, oup), jnp.float32)
    p["bn3_scale"], p["bn3_bias"] = bn(ks[5], oup)
    return p


# ---------------------------------------------------------------------------
# Pure-JAX reference (lax.conv, high precision) for correctness checking
# ---------------------------------------------------------------------------

def inverted_residual_reference(params, x_nchw):
    x = jnp.transpose(x_nchw, (0, 2, 3, 1))  # NHWC
    stride = params["stride"]
    hidden = params["hidden"]
    dn = ("NHWC", "HWIO", "NHWC")
    prec = lax.Precision.HIGHEST

    h = x
    if params["expand_ratio"] != 1:
        w1 = params["w1"].reshape(1, 1, params["inp"], hidden)
        h = lax.conv_general_dilated(h, w1, (1, 1), "VALID",
                                     dimension_numbers=dn, precision=prec)
        h = h * params["bn1_scale"] + params["bn1_bias"]
        h = jnp.clip(h, 0.0, 6.0)

    wdw = params["w_dw"].reshape(3, 3, 1, hidden)
    h = lax.conv_general_dilated(h, wdw, (stride, stride), [(1, 1), (1, 1)],
                                 dimension_numbers=dn,
                                 feature_group_count=hidden, precision=prec)
    h = h * params["bn2_scale"] + params["bn2_bias"]
    h = jnp.clip(h, 0.0, 6.0)

    w3 = params["w3"].reshape(1, 1, hidden, params["oup"])
    h = lax.conv_general_dilated(h, w3, (1, 1), "VALID",
                                 dimension_numbers=dn, precision=prec)
    h = h * params["bn3_scale"] + params["bn3_bias"]

    if params["use_res_connect"]:
        h = x + h
    return jnp.transpose(h, (0, 3, 1, 2))


# ---------------------------------------------------------------------------
# Demo
# ---------------------------------------------------------------------------

if __name__ == "__main__":
    key = jax.random.PRNGKey(0)

    configs = [
        # (inp, oup, stride, expand_ratio, N, H, W)
        (16, 16, 1, 6, 2, 16, 16),   # residual path, expand 6x
        (16, 24, 2, 6, 2, 16, 16),   # stride-2 path
        (16, 16, 1, 1, 2, 16, 16),   # expand_ratio == 1 path (with residual)
    ]

    for idx, (inp, oup, stride, er, N, H, W) in enumerate(configs):
        k_x, k_p = jax.random.split(jax.random.fold_in(key, idx))
        x = jax.random.normal(k_x, (N, inp, H, W), jnp.float32)  # NCHW
        params = init_inverted_residual_params(k_p, inp, oup, stride, er)
        ref = inverted_residual_reference(params, x)

        # f32 compute path (tight check of the fused indexing / halo / stride)
        out_f32 = jax.block_until_ready(
            inverted_residual_forward(params, x, compute_dtype=jnp.float32))
        assert out_f32.shape == ref.shape, (out_f32.shape, ref.shape)
        assert jnp.allclose(out_f32, ref, atol=3e-2, rtol=3e-2), (
            f"f32 mismatch in config {idx}: "
            f"max err {jnp.max(jnp.abs(out_f32 - ref))}")

        # default bf16-MXU path (looser tolerance for bf16 operand rounding)
        out_bf16 = jax.block_until_ready(inverted_residual_forward(params, x))
        assert out_bf16.shape == ref.shape
        assert jnp.allclose(out_bf16, ref, atol=1e-1, rtol=1e-1), (
            f"bf16 mismatch in config {idx}: "
            f"max err {jnp.max(jnp.abs(out_bf16 - ref))}")

    print("KERNEL_OK")
</pallas_src>

<mosaic_0001>
module attributes {stable_mosaic.version = 11 : i64} {
  func.func @kernel(%arg0: i32, %arg1: i32, %arg2: memref<1x16x16x16xf32, #tpu.memory_space<vmem>>, %arg3: memref<1x1x16x16xf32, #tpu.memory_space<vmem>>, %arg4: memref<1x1x16x16xf32, #tpu.memory_space<vmem>>, %arg5: memref<16x96xf32, #tpu.memory_space<vmem>>, %arg6: memref<1x96xf32, #tpu.memory_space<vmem>>, %arg7: memref<9x96xf32, #tpu.memory_space<vmem>>, %arg8: memref<1x96xf32, #tpu.memory_space<vmem>>, %arg9: memref<96x16xf32, #tpu.memory_space<vmem>>, %arg10: memref<1x16xf32, #tpu.memory_space<vmem>>, %arg11: memref<1x16x16x16xf32, #tpu.memory_space<vmem>>, %arg12: memref<18x18x96xf32, #tpu.memory_space<vmem>>) attributes {dimension_semantics = [#tpu.dimension_semantics<parallel>, #tpu.dimension_semantics<parallel>], iteration_bounds = array<i64: 2, 1>, scalar_prefetch = 0 : i64, scratch_operands = 1 : i64, tpu.core_type = #tpu.core_type<tc>, window_params = [{transform_indices = @transform_0, window_bounds = array<i64: 1, 16, 16, 16>}, {transform_indices = @transform_1, window_bounds = array<i64: 1, 1, 16, 16>}, {transform_indices = @transform_2, window_bounds = array<i64: 1, 1, 16, 16>}, {pipeline_mode = #tpu.pipeline_mode<synchronous>, transform_indices = @transform_3, window_bounds = array<i64: 16, 96>}, {pipeline_mode = #tpu.pipeline_mode<synchronous>, transform_indices = @transform_4, window_bounds = array<i64: 1, 96>}, {pipeline_mode = #tpu.pipeline_mode<synchronous>, transform_indices = @transform_5, window_bounds = array<i64: 9, 96>}, {pipeline_mode = #tpu.pipeline_mode<synchronous>, transform_indices = @transform_6, window_bounds = array<i64: 1, 96>}, {pipeline_mode = #tpu.pipeline_mode<synchronous>, transform_indices = @transform_7, window_bounds = array<i64: 96, 16>}, {pipeline_mode = #tpu.pipeline_mode<synchronous>, transform_indices = @transform_8, window_bounds = array<i64: 1, 16>}, {transform_indices = @transform_9, window_bounds = array<i64: 1, 16, 16, 16>}]} {
    %cst = arith.constant 0.000000e+00 : f32
    %0 = vector.broadcast %cst : f32 to vector<18x1x96xf32>
    %c0 = arith.constant 0 : index
    %c0_0 = arith.constant 0 : index
    %c0_1 = arith.constant 0 : index
    %1 = vector.load %arg12[%c0, %c0_0, %c0_1] : memref<18x18x96xf32, #tpu.memory_space<vmem>>, vector<18x1x96xf32>
    tpu.vector_store %arg12[%c0, %c0_0, %c0_1], %0 {strides = array<i32>} : memref<18x18x96xf32, #tpu.memory_space<vmem>>, vector<18x1x96xf32>,
    %c0_2 = arith.constant 0 : index
    %c17 = arith.constant 17 : index
    %c0_3 = arith.constant 0 : index
    %2 = vector.load %arg12[%c0_2, %c17, %c0_3] : memref<18x18x96xf32, #tpu.memory_space<vmem>>, vector<18x1x96xf32>
    tpu.vector_store %arg12[%c0_2, %c17, %c0_3], %0 {strides = array<i32>} : memref<18x18x96xf32, #tpu.memory_space<vmem>>, vector<18x1x96xf32>,
    %c0_4 = arith.constant 0 : index
    %c0_5 = arith.constant 0 : index
    %c0_6 = arith.constant 0 : index
    %c0_7 = arith.constant 0 : index
    %3 = vector.load %arg2[%c0_4, %c0_5, %c0_6, %c0_7] : memref<1x16x16x16xf32, #tpu.memory_space<vmem>>, vector<1x16x16x16xf32>
    %4 = vector.shape_cast %3 : vector<1x16x16x16xf32> to vector<16x16x16xf32>
    %5 = vector.shape_cast %4 : vector<16x16x16xf32> to vector<256x16xf32>
    %c0_8 = arith.constant 0 : index
    %c0_9 = arith.constant 0 : index
    %6 = vector.load %arg5[%c0_8, %c0_9] : memref<16x96xf32, #tpu.memory_space<vmem>>, vector<16x96xf32>
    %cst_10 = arith.constant dense<0.000000e+00> : vector<256x96xf32>
    %7 = tpu.matmul %5, %6, %cst_10 {dimension_numbers = #tpu.dot_dimension_numbers<[1], [0], [0], [1], [0, 0, 1, 1], [], []>} : vector<256x16xf32>, vector<16x96xf32>, vector<256x96xf32> -> vector<256x96xf32>
    %c0_11 = arith.constant 0 : index
    %c0_12 = arith.constant 0 : index
    %8 = vector.load %arg6[%c0_11, %c0_12] : memref<1x96xf32, #tpu.memory_space<vmem>>, vector<1x96xf32>
    %9 = vector.broadcast %8 : vector<1x96xf32> to vector<256x96xf32>
    %10 = arith.addf %7, %9 : vector<256x96xf32>
    %cst_13 = arith.constant 0.000000e+00 : f32
    %cst_14 = arith.constant 6.000000e+00 : f32
    %11 = vector.broadcast %cst_13 : f32 to vector<256x96xf32>
    %12 = arith.maximumf %11, %10 : vector<256x96xf32>
    %13 = vector.broadcast %cst_14 : f32 to vector<256x96xf32>
    %14 = arith.minimumf %13, %12 : vector<256x96xf32>
    %15 = vector.shape_cast %14 : vector<256x96xf32> to vector<16x16x96xf32>
    %c1 = arith.constant 1 : index
    %c1_15 = arith.constant 1 : index
    %c0_16 = arith.constant 0 : index
    %16 = vector.load %arg12[%c1, %c1_15, %c0_16] : memref<18x18x96xf32, #tpu.memory_space<vmem>>, vector<16x16x96xf32>
    tpu.vector_store %arg12[%c1, %c1_15, %c0_16], %15 {strides = array<i32>} : memref<18x18x96xf32, #tpu.memory_space<vmem>>, vector<16x16x96xf32>,
    %c0_17 = arith.constant 0 : index
    %c0_18 = arith.constant 0 : index
    %c0_19 = arith.constant 0 : index
    %c0_20 = arith.constant 0 : index
    %17 = vector.load %arg3[%c0_17, %c0_18, %c0_19, %c0_20] : memref<1x1x16x16xf32, #tpu.memory_space<vmem>>, vector<1x1x16x16xf32>
    %18 = vector.shape_cast %17 : vector<1x1x16x16xf32> to vector<1x16x16xf32>
    %19 = vector.shape_cast %18 : vector<1x16x16xf32> to vector<16x16xf32>
    %c0_21 = arith.constant 0 : index
    %c0_22 = arith.constant 0 : index
    %20 = vector.load %arg5[%c0_21, %c0_22] : memref<16x96xf32, #tpu.memory_space<vmem>>, vector<16x96xf32>
    %cst_23 = arith.constant dense<0.000000e+00> : vector<16x96xf32>
    %21 = tpu.matmul %19, %20, %cst_23 {dimension_numbers = #tpu.dot_dimension_numbers<[1], [0], [0], [1], [0, 0, 1, 1], [], []>} : vector<16x16xf32>, vector<16x96xf32>, vector<16x96xf32> -> vector<16x96xf32>
    %c0_24 = arith.constant 0 : index
    %c0_25 = arith.constant 0 : index
    %22 = vector.load %arg6[%c0_24, %c0_25] : memref<1x96xf32, #tpu.memory_space<vmem>>, vector<1x96xf32>
    %23 = vector.broadcast %22 : vector<1x96xf32> to vector<16x96xf32>
    %24 = arith.addf %21, %23 : vector<16x96xf32>
    %cst_26 = arith.constant 0.000000e+00 : f32
    %cst_27 = arith.constant 6.000000e+00 : f32
    %25 = vector.broadcast %cst_26 : f32 to vector<16x96xf32>
    %26 = arith.maximumf %25, %24 : vector<16x96xf32>
    %27 = vector.broadcast %cst_27 : f32 to vector<16x96xf32>
    %28 = arith.minimumf %27, %26 : vector<16x96xf32>
    %29 = vector.shape_cast %28 : vector<16x96xf32> to vector<1x16x96xf32>
    %c0_i32 = arith.constant 0 : i32
    %30 = arith.cmpi sgt, %arg1, %c0_i32 : i32
    %cst_28 = arith.constant 0.000000e+00 : f32
    %31 = vector.broadcast %cst_28 : f32 to vector<1x16x96xf32>
    %32 = arith.select %30, %29, %31 : vector<1x16x96xf32>
    %c0_29 = arith.constant 0 : index
    %c1_30 = arith.constant 1 : index
    %c0_31 = arith.constant 0 : index
    %33 = vector.load %arg12[%c0_29, %c1_30, %c0_31] : memref<18x18x96xf32, #tpu.memory_space<vmem>>, vector<1x16x96xf32>
    tpu.vector_store %arg12[%c0_29, %c1_30, %c0_31], %32 {strides = array<i32>} : memref<18x18x96xf32, #tpu.memory_space<vmem>>, vector<1x16x96xf32>,
    %c0_32 = arith.constant 0 : index
    %c0_33 = arith.constant 0 : index
    %c0_34 = arith.constant 0 : index
    %c0_35 = arith.constant 0 : index
    %34 = vector.load %arg4[%c0_32, %c0_33, %c0_34, %c0_35] : memref<1x1x16x16xf32, #tpu.memory_space<vmem>>, vector<1x1x16x16xf32>
    %35 = vector.shape_cast %34 : vector<1x1x16x16xf32> to vector<1x16x16xf32>
    %36 = vector.shape_cast %35 : vector<1x16x16xf32> to vector<16x16xf32>
    %c0_36 = arith.constant 0 : index
    %c0_37 = arith.constant 0 : index
    %37 = vector.load %arg5[%c0_36, %c0_37] : memref<16x96xf32, #tpu.memory_space<vmem>>, vector<16x96xf32>
    %cst_38 = arith.constant dense<0.000000e+00> : vector<16x96xf32>
    %38 = tpu.matmul %36, %37, %cst_38 {dimension_numbers = #tpu.dot_dimension_numbers<[1], [0], [0], [1], [0, 0, 1, 1], [], []>} : vector<16x16xf32>, vector<16x96xf32>, vector<16x96xf32> -> vector<16x96xf32>
    %c0_39 = arith.constant 0 : index
    %c0_40 = arith.constant 0 : index
    %39 = vector.load %arg6[%c0_39, %c0_40] : memref<1x96xf32, #tpu.memory_space<vmem>>, vector<1x96xf32>
    %40 = vector.broadcast %39 : vector<1x96xf32> to vector<16x96xf32>
    %41 = arith.addf %38, %40 : vector<16x96xf32>
    %cst_41 = arith.constant 0.000000e+00 : f32
    %cst_42 = arith.constant 6.000000e+00 : f32
    %42 = vector.broadcast %cst_41 : f32 to vector<16x96xf32>
    %43 = arith.maximumf %42, %41 : vector<16x96xf32>
    %44 = vector.broadcast %cst_42 : f32 to vector<16x96xf32>
    %45 = arith.minimumf %44, %43 : vector<16x96xf32>
    %46 = vector.shape_cast %45 : vector<16x96xf32> to vector<1x16x96xf32>
    %c0_i32_43 = arith.constant 0 : i32
    %47 = arith.cmpi slt, %arg1, %c0_i32_43 : i32
    %cst_44 = arith.constant 0.000000e+00 : f32
    %48 = vector.broadcast %cst_44 : f32 to vector<1x16x96xf32>
    %49 = arith.select %47, %46, %48 : vector<1x16x96xf32>
    %c17_45 = arith.constant 17 : index
    %c1_46 = arith.constant 1 : index
    %c0_47 = arith.constant 0 : index
    %50 = vector.load %arg12[%c17_45, %c1_46, %c0_47] : memref<18x18x96xf32, #tpu.memory_space<vmem>>, vector<1x16x96xf32>
    tpu.vector_store %arg12[%c17_45, %c1_46, %c0_47], %49 {strides = array<i32>} : memref<18x18x96xf32, #tpu.memory_space<vmem>>, vector<1x16x96xf32>,
    %c0_48 = arith.constant 0 : index
    %c0_49 = arith.constant 0 : index
    %51 = vector.load %arg7[%c0_48, %c0_49] : memref<9x96xf32, #tpu.memory_space<vmem>>, vector<9x96xf32>
    %cst_50 = arith.constant 0.000000e+00 : f32
    %52 = vector.broadcast %cst_50 : f32 to vector<16x16x96xf32>
    %c0_51 = arith.constant 0 : index
    %c0_52 = arith.constant 0 : index
    %c0_53 = arith.constant 0 : index
    %53 = vector.load %arg12[%c0_51, %c0_52, %c0_53] : memref<18x18x96xf32, #tpu.memory_space<vmem>>, vector<16x16x96xf32>
    %54 = vector.extract_strided_slice %51 {offsets = [0, 0], sizes = [1, 96], strides = [1, 1]} : vector<9x96xf32> to vector<1x96xf32>
    %55 = vector.shape_cast %54 : vector<1x96xf32> to vector<1x1x96xf32>
    %56 = vector.broadcast %55 : vector<1x1x96xf32> to vector<16x16x96xf32>
    %57 = arith.mulf %53, %56 : vector<16x16x96xf32>
    %58 = arith.addf %52, %57 : vector<16x16x96xf32>
    %c0_54 = arith.constant 0 : index
    %c1_55 = arith.constant 1 : index
    %c0_56 = arith.constant 0 : index
    %59 = vector.load %arg12[%c0_54, %c1_55, %c0_56] : memref<18x18x96xf32, #tpu.memory_space<vmem>>, vector<16x16x96xf32>
    %60 = vector.extract_strided_slice %51 {offsets = [1, 0], sizes = [1, 96], strides = [1, 1]} : vector<9x96xf32> to vector<1x96xf32>
    %61 = vector.shape_cast %60 : vector<1x96xf32> to vector<1x1x96xf32>
    %62 = vector.broadcast %61 : vector<1x1x96xf32> to vector<16x16x96xf32>
    %63 = arith.mulf %59, %62 : vector<16x16x96xf32>
    %64 = arith.addf %58, %63 : vector<16x16x96xf32>
    %c0_57 = arith.constant 0 : index
    %c2 = arith.constant 2 : index
    %c0_58 = arith.constant 0 : index
    %65 = vector.load %arg12[%c0_57, %c2, %c0_58] : memref<18x18x96xf32, #tpu.memory_space<vmem>>, vector<16x16x96xf32>
    %66 = vector.extract_strided_slice %51 {offsets = [2, 0], sizes = [1, 96], strides = [1, 1]} : vector<9x96xf32> to vector<1x96xf32>
    %67 = vector.shape_cast %66 : vector<1x96xf32> to vector<1x1x96xf32>
    %68 = vector.broadcast %67 : vector<1x1x96xf32> to vector<16x16x96xf32>
    %69 = arith.mulf %65, %68 : vector<16x16x96xf32>
    %70 = arith.addf %64, %69 : vector<16x16x96xf32>
    %c1_59 = arith.constant 1 : index
    %c0_60 = arith.constant 0 : index
    %c0_61 = arith.constant 0 : index
    %71 = vector.load %arg12[%c1_59, %c0_60, %c0_61] : memref<18x18x96xf32, #tpu.memory_space<vmem>>, vector<16x16x96xf32>
    %72 = vector.extract_strided_slice %51 {offsets = [3, 0], sizes = [1, 96], strides = [1, 1]} : vector<9x96xf32> to vector<1x96xf32>
    %73 = vector.shape_cast %72 : vector<1x96xf32> to vector<1x1x96xf32>
    %74 = vector.broadcast %73 : vector<1x1x96xf32> to vector<16x16x96xf32>
    %75 = arith.mulf %71, %74 : vector<16x16x96xf32>
    %76 = arith.addf %70, %75 : vector<16x16x96xf32>
    %c1_62 = arith.constant 1 : index
    %c1_63 = arith.constant 1 : index
    %c0_64 = arith.constant 0 : index
    %77 = vector.load %arg12[%c1_62, %c1_63, %c0_64] : memref<18x18x96xf32, #tpu.memory_space<vmem>>, vector<16x16x96xf32>
    %78 = vector.extract_strided_slice %51 {offsets = [4, 0], sizes = [1, 96], strides = [1, 1]} : vector<9x96xf32> to vector<1x96xf32>
    %79 = vector.shape_cast %78 : vector<1x96xf32> to vector<1x1x96xf32>
    %80 = vector.broadcast %79 : vector<1x1x96xf32> to vector<16x16x96xf32>
    %81 = arith.mulf %77, %80 : vector<16x16x96xf32>
    %82 = arith.addf %76, %81 : vector<16x16x96xf32>
    %c1_65 = arith.constant 1 : index
    %c2_66 = arith.constant 2 : index
    %c0_67 = arith.constant 0 : index
    %83 = vector.load %arg12[%c1_65, %c2_66, %c0_67] : memref<18x18x96xf32, #tpu.memory_space<vmem>>, vector<16x16x96xf32>
    %84 = vector.extract_strided_slice %51 {offsets = [5, 0], sizes = [1, 96], strides = [1, 1]} : vector<9x96xf32> to vector<1x96xf32>
    %85 = vector.shape_cast %84 : vector<1x96xf32> to vector<1x1x96xf32>
    %86 = vector.broadcast %85 : vector<1x1x96xf32> to vector<16x16x96xf32>
    %87 = arith.mulf %83, %86 : vector<16x16x96xf32>
    %88 = arith.addf %82, %87 : vector<16x16x96xf32>
    %c2_68 = arith.constant 2 : index
    %c0_69 = arith.constant 0 : index
    %c0_70 = arith.constant 0 : index
    %89 = vector.load %arg12[%c2_68, %c0_69, %c0_70] : memref<18x18x96xf32, #tpu.memory_space<vmem>>, vector<16x16x96xf32>
    %90 = vector.extract_strided_slice %51 {offsets = [6, 0], sizes = [1, 96], strides = [1, 1]} : vector<9x96xf32> to vector<1x96xf32>
    %91 = vector.shape_cast %90 : vector<1x96xf32> to vector<1x1x96xf32>
    %92 = vector.broadcast %91 : vector<1x1x96xf32> to vector<16x16x96xf32>
    %93 = arith.mulf %89, %92 : vector<16x16x96xf32>
    %94 = arith.addf %88, %93 : vector<16x16x96xf32>
    %c2_71 = arith.constant 2 : index
    %c1_72 = arith.constant 1 : index
    %c0_73 = arith.constant 0 : index
    %95 = vector.load %arg12[%c2_71, %c1_72, %c0_73] : memref<18x18x96xf32, #tpu.memory_space<vmem>>, vector<16x16x96xf32>
    %96 = vector.extract_strided_slice %51 {offsets = [7, 0], sizes = [1, 96], strides = [1, 1]} : vector<9x96xf32> to vector<1x96xf32>
    %97 = vector.shape_cast %96 : vector<1x96xf32> to vector<1x1x96xf32>
    %98 = vector.broadcast %97 : vector<1x1x96xf32> to vector<16x16x96xf32>
    %99 = arith.mulf %95, %98 : vector<16x16x96xf32>
    %100 = arith.addf %94, %99 : vector<16x16x96xf32>
    %c2_74 = arith.constant 2 : index
    %c2_75 = arith.constant 2 : index
    %c0_76 = arith.constant 0 : index
    %101 = vector.load %arg12[%c2_74, %c2_75, %c0_76] : memref<18x18x96xf32, #tpu.memory_space<vmem>>, vector<16x16x96xf32>
    %102 = vector.extract_strided_slice %51 {offsets = [8, 0], sizes = [1, 96], strides = [1, 1]} : vector<9x96xf32> to vector<1x96xf32>
    %103 = vector.shape_cast %102 : vector<1x96xf32> to vector<1x1x96xf32>
    %104 = vector.broadcast %103 : vector<1x1x96xf32> to vector<16x16x96xf32>
    %105 = arith.mulf %101, %104 : vector<16x16x96xf32>
    %106 = arith.addf %100, %105 : vector<16x16x96xf32>
    %c0_77 = arith.constant 0 : index
    %c0_78 = arith.constant 0 : index
    %107 = vector.load %arg8[%c0_77, %c0_78] : memref<1x96xf32, #tpu.memory_space<vmem>>, vector<1x96xf32>
    %108 = vector.shape_cast %107 : vector<1x96xf32> to vector<1x1x96xf32>
    %109 = vector.broadcast %108 : vector<1x1x96xf32> to vector<16x16x96xf32>
    %110 = arith.addf %106, %109 : vector<16x16x96xf32>
    %cst_79 = arith.constant 0.000000e+00 : f32
    %cst_80 = arith.constant 6.000000e+00 : f32
    %111 = vector.broadcast %cst_79 : f32 to vector<16x16x96xf32>
    %112 = arith.maximumf %111, %110 : vector<16x16x96xf32>
    %113 = vector.broadcast %cst_80 : f32 to vector<16x16x96xf32>
    %114 = arith.minimumf %113, %112 : vector<16x16x96xf32>
    %115 = vector.shape_cast %114 : vector<16x16x96xf32> to vector<256x96xf32>
    %c0_81 = arith.constant 0 : index
    %c0_82 = arith.constant 0 : index
    %116 = vector.load %arg9[%c0_81, %c0_82] : memref<96x16xf32, #tpu.memory_space<vmem>>, vector<96x16xf32>
    %cst_83 = arith.constant dense<0.000000e+00> : vector<256x16xf32>
    %117 = tpu.matmul %115, %116, %cst_83 {dimension_numbers = #tpu.dot_dimension_numbers<[1], [0], [0], [1], [0, 0, 1, 1], [], []>} : vector<256x96xf32>, vector<96x16xf32>, vector<256x16xf32> -> vector<256x16xf32>
    %c0_84 = arith.constant 0 : index
    %c0_85 = arith.constant 0 : index
    %118 = vector.load %arg10[%c0_84, %c0_85] : memref<1x16xf32, #tpu.memory_space<vmem>>, vector<1x16xf32>
    %119 = vector.broadcast %118 : vector<1x16xf32> to vector<256x16xf32>
    %120 = arith.addf %117, %119 : vector<256x16xf32>
    %c0_86 = arith.constant 0 : index
    %c0_87 = arith.constant 0 : index
    %c0_88 = arith.constant 0 : index
    %c0_89 = arith.constant 0 : index
    %121 = vector.load %arg2[%c0_86, %c0_87, %c0_88, %c0_89] : memref<1x16x16x16xf32, #tpu.memory_space<vmem>>, vector<1x16x16x16xf32>
    %122 = vector.shape_cast %121 : vector<1x16x16x16xf32> to vector<16x16x16xf32>
    %123 = vector.shape_cast %122 : vector<16x16x16xf32> to vector<256x16xf32>
    %124 = arith.addf %120, %123 : vector<256x16xf32>
    %125 = vector.shape_cast %124 : vector<256x16xf32> to vector<16x16x16xf32>
    %c0_90 = arith.constant 0 : index
    %c0_91 = arith.constant 0 : index
    %c0_92 = arith.constant 0 : index
    %c0_93 = arith.constant 0 : index
    %126 = vector.load %arg11[%c0_90, %c0_91, %c0_92, %c0_93] : memref<1x16x16x16xf32, #tpu.memory_space<vmem>>, vector<1x16x16x16xf32>
    %127 = vector.shape_cast %126 : vector<1x16x16x16xf32> to vector<16x16x16xf32>
    %128 = vector.shape_cast %125 : vector<16x16x16xf32> to vector<1x16x16x16xf32>
    tpu.vector_store %arg11[%c0_90, %c0_91, %c0_92, %c0_93], %128 {strides = array<i32>} : memref<1x16x16x16xf32, #tpu.memory_space<vmem>>, vector<1x16x16x16xf32>,
    return
  }
  func.func @transform_0(%arg0: i32, %arg1: i32) -> (i32, i32, i32, i32) {
    %c0_i32 = arith.constant 0 : i32
    %c0_i32_0 = arith.constant 0 : i32
    %c0_i32_1 = arith.constant 0 : i32
    return %arg0, %arg1, %c0_i32, %c0_i32_0 : i32, i32, i32, i32
  }
  func.func @transform_1(%arg0: i32, %arg1: i32) -> (i32, i32, i32, i32) {
    %c16_i32 = arith.constant 16 : i32
    %0 = arith.muli %arg1, %c16_i32 : i32
    %c1_i32 = arith.constant 1 : i32
    %1 = arith.subi %0, %c1_i32 : i32
    %c0_i32 = arith.constant 0 : i32
    %2 = arith.maxsi %1, %c0_i32 : i32
    %c0_i32_0 = arith.constant 0 : i32
    %c0_i32_1 = arith.constant 0 : i32
    %c0_i32_2 = arith.constant 0 : i32
    return %arg0, %2, %c0_i32_0, %c0_i32_1 : i32, i32, i32, i32
  }
  func.func @transform_2(%arg0: i32, %arg1: i32) -> (i32, i32, i32, i32) {
    %c1_i32 = arith.constant 1 : i32
    %0 = arith.addi %arg1, %c1_i32 : i32
    %c16_i32 = arith.constant 16 : i32
    %1 = arith.muli %0, %c16_i32 : i32
    %c15_i32 = arith.constant 15 : i32
    %2 = arith.minsi %1, %c15_i32 : i32
    %c0_i32 = arith.constant 0 : i32
    %c0_i32_0 = arith.constant 0 : i32
    %c0_i32_1 = arith.constant 0 : i32
    return %arg0, %2, %c0_i32, %c0_i32_0 : i32, i32, i32, i32
  }
  func.func @transform_3(%arg0: i32, %arg1: i32) -> (i32, i32) {
    %c0_i32 = arith.constant 0 : i32
    %c0_i32_0 = arith.constant 0 : i32
    %c0_i32_1 = arith.constant 0 : i32
    return %c0_i32, %c0_i32_0 : i32, i32
  }
  func.func @transform_4(%arg0: i32, %arg1: i32) -> (i32, i32) {
    %c0_i32 = arith.constant 0 : i32
    %c0_i32_0 = arith.constant 0 : i32
    %c0_i32_1 = arith.constant 0 : i32
    return %c0_i32, %c0_i32_0 : i32, i32
  }
  func.func @transform_5(%arg0: i32, %arg1: i32) -> (i32, i32) {
    %c0_i32 = arith.constant 0 : i32
    %c0_i32_0 = arith.constant 0 : i32
    %c0_i32_1 = arith.constant 0 : i32
    return %c0_i32, %c0_i32_0 : i32, i32
  }
  func.func @transform_6(%arg0: i32, %arg1: i32) -> (i32, i32) {
    %c0_i32 = arith.constant 0 : i32
    %c0_i32_0 = arith.constant 0 : i32
    %c0_i32_1 = arith.constant 0 : i32
    return %c0_i32, %c0_i32_0 : i32, i32
  }
  func.func @transform_7(%arg0: i32, %arg1: i32) -> (i32, i32) {
    %c0_i32 = arith.constant 0 : i32
    %c0_i32_0 = arith.constant 0 : i32
    %c0_i32_1 = arith.constant 0 : i32
    return %c0_i32, %c0_i32_0 : i32, i32
  }
  func.func @transform_8(%arg0: i32, %arg1: i32) -> (i32, i32) {
    %c0_i32 = arith.constant 0 : i32
    %c0_i32_0 = arith.constant 0 : i32
    %c0_i32_1 = arith.constant 0 : i32
    return %c0_i32, %c0_i32_0 : i32, i32
  }
  func.func @transform_9(%arg0: i32, %arg1: i32) -> (i32, i32, i32, i32) {
    %c0_i32 = arith.constant 0 : i32
    %c0_i32_0 = arith.constant 0 : i32
    %c0_i32_1 = arith.constant 0 : i32
    return %arg0, %arg1, %c0_i32, %c0_i32_0 : i32, i32, i32, i32
  }
}

</mosaic_0001>

<llo_original>
// kernel: tpu_custom_call.1
$region0: #{tpu_custom_call.1}
  #allocation0 [shape = 'u32[]', space=smem, size = 0x4, offset = 0x4, fixed_abs, tag = 'smem constant byte address 0x4 - core index']
  #allocation1 [shape = 'u32[144,128]{1,0:T(1,128)}', space=vmem, size = 0x12000, scoped, tag = 'internal scratch']
  #allocation2 [shape = 'f32[18,18,96]{2,1,0:T(8,128)}', space=vmem, size = 0x36000, scoped, tag = 'scratch operand']
  %s0 = inlined_call_operand.hbm [shape: f32[2,16,16,16], index: 0, kind: input, shape index: {}]
  %s1 = inlined_call_operand.hbm [shape: f32[2,16,16,16], index: 1, kind: input, shape index: {}]
  %s2 = inlined_call_operand.hbm [shape: f32[2,16,16,16], index: 2, kind: input, shape index: {}]
  %s3 = inlined_call_operand.vmem [shape: f32[16,96], index: 3, kind: input, shape index: {}]
  %s4 = inlined_call_operand.vmem [shape: f32[1,96], index: 4, kind: input, shape index: {}]
  %s5 = inlined_call_operand.vmem [shape: f32[9,96], index: 5, kind: input, shape index: {}]
  %s6 = inlined_call_operand.vmem [shape: f32[1,96], index: 6, kind: input, shape index: {}]
  %s7 = inlined_call_operand.vmem [shape: f32[96,16], index: 7, kind: input, shape index: {}]
  %s8 = inlined_call_operand.vmem [shape: f32[1,16], index: 8, kind: input, shape index: {}]
  %s9 = inlined_call_operand.hbm [shape: f32[2,16,16,16], index: 9, kind: output, shape index: {}]
  %s10 = sld [smem:[#allocation0]]
  $region81: #{tpu_custom_call.1} parent=0
    _
  %s12 = ssub.s32 1, %s10
  %s13 = scalar_select 0, %s12, %s10
  $region1: #{tpu_custom_call.1} parent=0
    #allocation3 [shape = 'u8[262144]{0}', space=vmem, size = 0x40000, scoped, tag = 'input window, operand 0']
    #allocation4 [shape = 's32[2]{0}', space=sflag, size = 0x8, scoped, tag = 'scoped memory for tpu_custom_call.1']
    #allocation5 [shape = 's32[2]{0}', space=sflag, size = 0x8, scoped, tag = 'scoped memory for tpu_custom_call.1']
    #allocation6 [shape = 'u8[16384]{0}', space=vmem, size = 0x4000, scoped, tag = 'input window, operand 1']
    #allocation7 [shape = 's32[2]{0}', space=sflag, size = 0x8, scoped, tag = 'scoped memory for tpu_custom_call.1']
    #allocation8 [shape = 'u8[16384]{0}', space=vmem, size = 0x4000, scoped, tag = 'input window, operand 2']
    #allocation9 [shape = 'u8[262144]{0}', space=vmem, size = 0x40000, scoped, tag = 'output window, operand 0']
    %14 = vsyncpa [#allocation4], 0
    %s15 = scalar_lea.sflag [#allocation4], 1
    %16 = vsyncpa %s15, 0
    %17 = vsyncpa [#allocation7], 0
    %s18 = scalar_lea.sflag [#allocation7], 1
    %19 = vsyncpa %s18, 0
    %20 = vsyncpa [#allocation5], 0
    %s21 = scalar_lea.sflag [#allocation5], 1
    %22 = vsyncpa %s21, 0
    loop: start=0, step=1, limit=4
    $region2: #{tpu_custom_call.1} parent=1 // loop_pre_header
      _
    $region3: #{tpu_custom_call.1} parent=1 // loop_header
      %s24 = sphi 0, %s28
      %p25 = scmp.ge.s32.totalorder %s24, 4
      %s31 = sphi 0, %s43
      %s32 = sphi 0, %s39
      %s33 = sphi 0, %s31
      %s34 = sphi 0, %s32
      %s35 = sphi 0, %s33
      %s36 = sphi 0, %s34
      %s48 = sphi 0, %s50
      %s51 = sphi 0, %s48
      %s52 = sphi 0, %s51
      %s68 = sphi 0, %s52
      %s84 = sphi 0, %s86
      %s87 = sphi 0, %s84
      %s88 = sphi 0, %s87
      %s104 = sphi 0, %s88
      %s120 = sphi 0, %s122
      %s123 = sphi 0, %s120
      %s124 = sphi 0, %s123
      %s140 = sphi 0, %s124
      %s144 = sphi 0, %s144
      %s146 = sphi 0, %s144
      %s147 = sphi 0, %s146
      %s161 = sphi 0, %s147
      %s165 = sphi 0, %s165
      %s167 = sphi 0, %s165
      %s168 = sphi 0, %s167
      %s182 = sphi 0, %s168
      %s186 = sphi 0, %s186
      %s188 = sphi 0, %s186
      %s189 = sphi 0, %s188
      %s203 = sphi 0, %s189
      %s207 = sphi 0, %s207
      %s209 = sphi 0, %s207
      %s210 = sphi 0, %s209
      %s224 = sphi 0, %s210
      %s228 = sphi 0, %s228
      %s230 = sphi 0, %s228
      %s231 = sphi 0, %s230
      %s245 = sphi 0, %s231
      %s249 = sphi 0, %s249
      %s251 = sphi 0, %s249
      %s252 = sphi 0, %s251
      %s266 = sphi 0, %s252
      %s274 = sphi 0, %s276
      %s277 = sphi 0, %s274
      %s278 = sphi 0, %s277
      %s294 = sphi 0, %s278
    $region4: #{tpu_custom_call.1} parent=1 // loop_header_branch
      %27 = sbr.rel (%p25) target = $region8
    $region5: #{tpu_custom_call.1} parent=1 // loop_body
      %s29 = ssub.s32 %s24, 1
      %s30 = ssub.s32 %s24, 2
      %s37 = sadd.s32 1, %s32
      %p38 = scmp.ge.s32.totalorder %s37, 1
      %s39 = scalar_select %p38, 0, %s37
      %s40 = sadd.s32 1, %s31
      %s41 = scalar_select %p38, %s40, %s31
      %p42 = scmp.ge.s32.totalorder %s41, 2
      %s43 = scalar_select %p42, 0, %s41
      %s44 = ssub.s32 %s31, %s43
      %s45 = ssub.s32 %s32, %s39
      %s46 = sor.u32 %s44, %s45
      %p47 = scmp.eq.s32.totalorder %s46, 0
      %s49 = sadd.s32 %s48, 1
      %s50 = scalar_select %p47, %s48, %s49
      %p53 = pneg %p47
      %p54 = scmp.eq.s32.totalorder %s24, 1
      %p55 = por %p53, %p54
      %p56 = scmp.ne.s32.totalorder %s48, %s51
      %p57 = scmp.eq.s32.totalorder %s24, 0
      %p58 = por %p56, %p57
      %p59 = scmp.ne.s32.totalorder %s48, %s51
      %p60 = scmp.eq.s32.totalorder %s29, 1
      %p61 = por %p59, %p60
      %p62 = scmp.ne.s32.totalorder %s51, %s52
      %p63 = scmp.eq.s32.totalorder %s29, 0
      %p64 = por %p62, %p63
      %p65 = scmp.ne.s32.totalorder %s51, %s52
      %p66 = scmp.eq.s32.totalorder %s30, 1
      %p67 = por %p65, %p66
      %p69 = scmp.ne.s32.totalorder %s52, %s68
      %p70 = scmp.eq.s32.totalorder %s30, 0
      %p71 = por %p69, %p70
      %s72 = smul.u32 %s32, 16
      %s73 = ssub.s32 %s72, 1
      %p74 = scmp.gt.s32.totalorder %s73, 0
      %s75 = scalar_select %p74, %s73, 0
      %s76 = smul.u32 %s39, 16
      %s77 = ssub.s32 %s76, 1
      %p78 = scmp.gt.s32.totalorder %s77, 0
      %s79 = scalar_select %p78, %s77, 0
      %s80 = ssub.s32 %s31, %s43
      %s81 = ssub.s32 %s75, %s79
      %s82 = sor.u32 %s80, %s81
      %p83 = scmp.eq.s32.totalorder %s82, 0
      %s85 = sadd.s32 %s84, 1
      %s86 = scalar_select %p83, %s84, %s85
      %p89 = pneg %p83
      %p90 = scmp.eq.s32.totalorder %s24, 1
      %p91 = por %p89, %p90
      %p92 = scmp.ne.s32.totalorder %s84, %s87
      %p93 = scmp.eq.s32.totalorder %s24, 0
      %p94 = por %p92, %p93
      %p95 = scmp.ne.s32.totalorder %s84, %s87
      %p96 = scmp.eq.s32.totalorder %s29, 1
      %p97 = por %p95, %p96
      %p98 = scmp.ne.s32.totalorder %s87, %s88
      %p99 = scmp.eq.s32.totalorder %s29, 0
      %p100 = por %p98, %p99
      %p101 = scmp.ne.s32.totalorder %s87, %s88
      %p102 = scmp.eq.s32.totalorder %s30, 1
      %p103 = por %p101, %p102
      %p105 = scmp.ne.s32.totalorder %s88, %s104
      %p106 = scmp.eq.s32.totalorder %s30, 0
      %p107 = por %p105, %p106
      %s108 = sadd.s32 %s32, 1
      %s109 = smul.u32 %s108, 16
      %p110 = scmp.lt.s32.totalorder %s109, 15
      %s111 = scalar_select %p110, %s109, 15
      %s112 = sadd.s32 %s39, 1
      %s113 = smul.u32 %s112, 16
      %p114 = scmp.lt.s32.totalorder %s113, 15
      %s115 = scalar_select %p114, %s113, 15
      %s116 = ssub.s32 %s31, %s43
      %s117 = ssub.s32 %s111, %s115
      %s118 = sor.u32 %s116, %s117
      %p119 = scmp.eq.s32.totalorder %s118, 0
      %s121 = sadd.s32 %s120, 1
      %s122 = scalar_select %p119, %s120, %s121
      %p125 = pneg %p119
      %p126 = scmp.eq.s32.totalorder %s24, 1
      %p127 = por %p125, %p126
      %p128 = scmp.ne.s32.totalorder %s120, %s123
      %p129 = scmp.eq.s32.totalorder %s24, 0
      %p130 = por %p128, %p129
      %p131 = scmp.ne.s32.totalorder %s120, %s123
      %p132 = scmp.eq.s32.totalorder %s29, 1
      %p133 = por %p131, %p132
      %p134 = scmp.ne.s32.totalorder %s123, %s124
      %p135 = scmp.eq.s32.totalorder %s29, 0
      %p136 = por %p134, %p135
      %p137 = scmp.ne.s32.totalorder %s123, %s124
      %p138 = scmp.eq.s32.totalorder %s30, 1
      %p139 = por %p137, %p138
      %p141 = scmp.ne.s32.totalorder %s124, %s140
      %p142 = scmp.eq.s32.totalorder %s30, 0
      %p143 = por %p141, %p142
      %s145 = sadd.s32 %s144, 1
      %p148 = scmp.eq.s32.totalorder %s24, 1
      %p149 = scmp.ne.s32.totalorder %s144, %s146
      %p150 = scmp.eq.s32.totalorder %s24, 0
      %p151 = por %p149, %p150
      %p152 = scmp.ne.s32.totalorder %s144, %s146
      %p153 = scmp.eq.s32.totalorder %s29, 1
      %p154 = por %p152, %p153
      %p155 = scmp.ne.s32.totalorder %s146, %s147
      %p156 = scmp.eq.s32.totalorder %s29, 0
      %p157 = por %p155, %p156
      %p158 = scmp.ne.s32.totalorder %s146, %s147
      %p159 = scmp.eq.s32.totalorder %s30, 1
      %p160 = por %p158, %p159
      %p162 = scmp.ne.s32.totalorder %s147, %s161
      %p163 = scmp.eq.s32.totalorder %s30, 0
      %p164 = por %p162, %p163
      %s166 = sadd.s32 %s165, 1
      %p169 = scmp.eq.s32.totalorder %s24, 1
      %p170 = scmp.ne.s32.totalorder %s165, %s167
      %p171 = scmp.eq.s32.totalorder %s24, 0
      %p172 = por %p170, %p171
      %p173 = scmp.ne.s32.totalorder %s165, %s167
      %p174 = scmp.eq.s32.totalorder %s29, 1
      %p175 = por %p173, %p174
      %p176 = scmp.ne.s32.totalorder %s167, %s168
      %p177 = scmp.eq.s32.totalorder %s29, 0
      %p178 = por %p176, %p177
      %p179 = scmp.ne.s32.totalorder %s167, %s168
      %p180 = scmp.eq.s32.totalorder %s30, 1
      %p181 = por %p179, %p180
      %p183 = scmp.ne.s32.totalorder %s168, %s182
      %p184 = scmp.eq.s32.totalorder %s30, 0
      %p185 = por %p183, %p184
      %s187 = sadd.s32 %s186, 1
      %p190 = scmp.eq.s32.totalorder %s24, 1
      %p191 = scmp.ne.s32.totalorder %s186, %s188
      %p192 = scmp.eq.s32.totalorder %s24, 0
      %p193 = por %p191, %p192
      %p194 = scmp.ne.s32.totalorder %s186, %s188
      %p195 = scmp.eq.s32.totalorder %s29, 1
      %p196 = por %p194, %p195
      %p197 = scmp.ne.s32.totalorder %s188, %s189
      %p198 = scmp.eq.s32.totalorder %s29, 0
      %p199 = por %p197, %p198
      %p200 = scmp.ne.s32.totalorder %s188, %s189
      %p201 = scmp.eq.s32.totalorder %s30, 1
      %p202 = por %p200, %p201
      %p204 = scmp.ne.s32.totalorder %s189, %s203
      %p205 = scmp.eq.s32.totalorder %s30, 0
      %p206 = por %p204, %p205
      %s208 = sadd.s32 %s207, 1
      %p211 = scmp.eq.s32.totalorder %s24, 1
      %p212 = scmp.ne.s32.totalorder %s207, %s209
      %p213 = scmp.eq.s32.totalorder %s24, 0
      %p214 = por %p212, %p213
      %p215 = scmp.ne.s32.totalorder %s207, %s209
      %p216 = scmp.eq.s32.totalorder %s29, 1
      %p217 = por %p215, %p216
      %p218 = scmp.ne.s32.totalorder %s209, %s210
      %p219 = scmp.eq.s32.totalorder %s29, 0
      %p220 = por %p218, %p219
      %p221 = scmp.ne.s32.totalorder %s209, %s210
      %p222 = scmp.eq.s32.totalorder %s30, 1
      %p223 = por %p221, %p222
      %p225 = scmp.ne.s32.totalorder %s210, %s224
      %p226 = scmp.eq.s32.totalorder %s30, 0
      %p227 = por %p225, %p226
      %s229 = sadd.s32 %s228, 1
      %p232 = scmp.eq.s32.totalorder %s24, 1
      %p233 = scmp.ne.s32.totalorder %s228, %s230
      %p234 = scmp.eq.s32.totalorder %s24, 0
      %p235 = por %p233, %p234
      %p236 = scmp.ne.s32.totalorder %s228, %s230
      %p237 = scmp.eq.s32.totalorder %s29, 1
      %p238 = por %p236, %p237
      %p239 = scmp.ne.s32.totalorder %s230, %s231
      %p240 = scmp.eq.s32.totalorder %s29, 0
      %p241 = por %p239, %p240
      %p242 = scmp.ne.s32.totalorder %s230, %s231
      %p243 = scmp.eq.s32.totalorder %s30, 1
      %p244 = por %p242, %p243
      %p246 = scmp.ne.s32.totalorder %s231, %s245
      %p247 = scmp.eq.s32.totalorder %s30, 0
      %p248 = por %p246, %p247
      %s250 = sadd.s32 %s249, 1
      %p253 = scmp.eq.s32.totalorder %s24, 1
      %p254 = scmp.ne.s32.totalorder %s249, %s251
      %p255 = scmp.eq.s32.totalorder %s24, 0
      %p256 = por %p254, %p255
      %p257 = scmp.ne.s32.totalorder %s249, %s251
      %p258 = scmp.eq.s32.totalorder %s29, 1
      %p259 = por %p257, %p258
      %p260 = scmp.ne.s32.totalorder %s251, %s252
      %p261 = scmp.eq.s32.totalorder %s29, 0
      %p262 = por %p260, %p261
      %p263 = scmp.ne.s32.totalorder %s251, %s252
      %p264 = scmp.eq.s32.totalorder %s30, 1
      %p265 = por %p263, %p264
      %p267 = scmp.ne.s32.totalorder %s252, %s266
      %p268 = scmp.eq.s32.totalorder %s30, 0
      %p269 = por %p267, %p268
      %s270 = ssub.s32 %s31, %s43
      %s271 = ssub.s32 %s32, %s39
      %s272 = sor.u32 %s270, %s271
      %p273 = scmp.eq.s32.totalorder %s272, 0
      %s275 = sadd.s32 %s274, 1
      %s276 = scalar_select %p273, %s274, %s275
      %p279 = pneg %p273
      %p280 = scmp.eq.s32.totalorder %s24, 1
      %p281 = por %p279, %p280
      %p282 = scmp.ne.s32.totalorder %s274, %s277
      %p283 = scmp.eq.s32.totalorder %s24, 0
      %p284 = por %p282, %p283
      %p285 = scmp.ne.s32.totalorder %s274, %s277
      %p286 = scmp.eq.s32.totalorder %s29, 1
      %p287 = por %p285, %p286
      %p288 = scmp.ne.s32.totalorder %s277, %s278
      %p289 = scmp.eq.s32.totalorder %s29, 0
      %p290 = por %p288, %p289
      %p291 = scmp.ne.s32.totalorder %s277, %s278
      %p292 = scmp.eq.s32.totalorder %s30, 1
      %p293 = por %p291, %p292
      %p295 = scmp.ne.s32.totalorder %s278, %s294
      %p296 = scmp.eq.s32.totalorder %s30, 0
      %p297 = por %p295, %p296
      %p298 = scmp.le.s32.totalorder 1, %s24
      %p299 = scmp.lt.s32.totalorder %s24, 3
      %p300 = pnand %p298, %p299
      %p301 = pneg %p300
      // Predicated region
      $region9: #{tpu_custom_call.1} parent=5 // pred_check
        _
      $region10: #{tpu_custom_call.1} parent=5 // pred_check_branch
        %303 = sbr.rel (%p300) target = $region12
      $region11: #{tpu_custom_call.1} parent=5 // pred_region
        %s304 = ssub.s32 %s24, 1
        // Predicated region
        $region13: #{tpu_custom_call.1} parent=11 // pred_check
          %p305 = pneg %p157
        $region14: #{tpu_custom_call.1} parent=11 // pred_check_branch
          %307 = sbr.rel (%p305) target = $region16
        $region15: #{tpu_custom_call.1} parent=11 // pred_region
          _
        $region16: #{tpu_custom_call.1} parent=11 // pred_fallthru
          _
        // Predicated region
        $region17: #{tpu_custom_call.1} parent=11 // pred_check
          %p308 = pneg %p178
        $region18: #{tpu_custom_call.1} parent=11 // pred_check_branch
          %310 = sbr.rel (%p308) target = $region20
        $region19: #{tpu_custom_call.1} parent=11 // pred_region
          _
        $region20: #{tpu_custom_call.1} parent=11 // pred_fallthru
          _
        // Predicated region
        $region21: #{tpu_custom_call.1} parent=11 // pred_check
          %p311 = pneg %p199
        $region22: #{tpu_custom_call.1} parent=11 // pred_check_branch
          %313 = sbr.rel (%p311) target = $region24
        $region23: #{tpu_custom_call.1} parent=11 // pred_region
          _
        $region24: #{tpu_custom_call.1} parent=11 // pred_fallthru
          _
        // Predicated region
        $region25: #{tpu_custom_call.1} parent=11 // pred_check
          %p314 = pneg %p220
        $region26: #{tpu_custom_call.1} parent=11 // pred_check_branch
          %316 = sbr.rel (%p314) target = $region28
        $region27: #{tpu_custom_call.1} parent=11 // pred_region
          _
        $region28: #{tpu_custom_call.1} parent=11 // pred_fallthru
          _
        // Predicated region
        $region29: #{tpu_custom_call.1} parent=11 // pred_check
          %p317 = pneg %p241
        $region30: #{tpu_custom_call.1} parent=11 // pred_check_branch
          %319 = sbr.rel (%p317) target = $region32
        $region31: #{tpu_custom_call.1} parent=11 // pred_region
          _
        $region32: #{tpu_custom_call.1} parent=11 // pred_fallthru
          _
        // Predicated region
        $region33: #{tpu_custom_call.1} parent=11 // pred_check
          %p320 = pneg %p262
        $region34: #{tpu_custom_call.1} parent=11 // pred_check_branch
          %322 = sbr.rel (%p320) target = $region36
        $region35: #{tpu_custom_call.1} parent=11 // pred_region
          _
        $region36: #{tpu_custom_call.1} parent=11 // pred_fallthru
          _
      $region12: #{tpu_custom_call.1} parent=5 // pred_fallthru
        _
      %p323 = scmp.lt.s32.totalorder %s24, 2
      // Predicated region
      $region37: #{tpu_custom_call.1} parent=5 // pred_check
        %p324 = pneg %p323
      $region38: #{tpu_custom_call.1} parent=5 // pred_check_branch
        %326 = sbr.rel (%p324) target = $region40
      $region39: #{tpu_custom_call.1} parent=5 // pred_region
        // Predicated region
        $region41: #{tpu_custom_call.1} parent=39 // pred_check
          %p327 = pneg %p58
        $region42: #{tpu_custom_call.1} parent=39 // pred_check_branch
          %329 = sbr.rel (%p327) target = $region44
        $region43: #{tpu_custom_call.1} parent=39 // pred_region
          %s330 = sand.u32 %s48, 1
          %s331 = scalar_lea.sflag [#allocation4], %s330
          %s332 = sand.u32 %s48, 1
          %s333 = smul.addr %s332, 256
          %s334 = scalar_lea.vmem [#allocation3], %s333
          %s335 = smul.u32 16, %s32
          %s337 = ssub.s32 4096, 4096
          %338 = vsyncadd %s331, %s337
          %s339 = smul.addr %s335, 2
          %s340 = smul.addr %s31, 32
          %s341 = sadd.s32 %s339, %s340
          %s342 = smul.addr %s341, 128
          %s343 = scalar_lea.hbm %s0, %s342
          %s344 = sshll.u32 %s334, 4
          %s345 = int_to_ptr.vmem [resolvable:$true] %s344
          %350 = dma.hbm_to_vmem [thread:$0]  %s343, 4096, %s345, %s331, 128, 128, 8
        $region44: #{tpu_custom_call.1} parent=39 // pred_fallthru
          _
        // Predicated region
        $region45: #{tpu_custom_call.1} parent=39 // pred_check
          %p351 = pneg %p94
        $region46: #{tpu_custom_call.1} parent=39 // pred_check_branch
          %353 = sbr.rel (%p351) target = $region48
        $region47: #{tpu_custom_call.1} parent=39 // pred_region
          %s354 = sand.u32 %s24, 1
          %s355 = scalar_lea.sflag [#allocation7], %s354
          %s356 = sand.u32 %s84, 1
          %s357 = smul.addr %s356, 16
          %s358 = scalar_lea.vmem [#allocation6], %s357
          %s359 = smul.u32 %s32, 16
          %s360 = ssub.s32 %s359, 1
          %p361 = scmp.gt.s32.totalorder %s360, 0
          %s362 = scalar_select %p361, %s360, 0
          %s364 = ssub.s32 256, 256
          %365 = vsyncadd %s355, %s364
          %s366 = smul.addr %s362, 2
          %s367 = smul.addr %s31, 32
          %s368 = sadd.s32 %s366, %s367
          %s369 = smul.addr %s368, 128
          %s370 = scalar_lea.hbm %s1, %s369
          %s371 = sshll.u32 %s358, 4
          %s372 = int_to_ptr.vmem [resolvable:$true] %s371
          %377 = dma.hbm_to_vmem [thread:$0]  %s370, 256, %s372, %s355, 128, 128, 8
        $region48: #{tpu_custom_call.1} parent=39 // pred_fallthru
          _
        // Predicated region
        $region49: #{tpu_custom_call.1} parent=39 // pred_check
          %p378 = pneg %p130
        $region50: #{tpu_custom_call.1} parent=39 // pred_check_branch
          %380 = sbr.rel (%p378) target = $region52
        $region51: #{tpu_custom_call.1} parent=39 // pred_region
          %s381 = sand.u32 %s24, 1
          %s382 = scalar_lea.sflag [#allocation7], %s381
          %s383 = sand.u32 %s120, 1
          %s384 = smul.addr %s383, 16
          %s385 = scalar_lea.vmem [#allocation8], %s384
          %s386 = sadd.s32 %s32, 1
          %s387 = smul.u32 %s386, 16
          %p388 = scmp.lt.s32.totalorder %s387, 15
          %s389 = scalar_select %p388, %s387, 15
          %s391 = ssub.s32 256, 256
          %392 = vsyncadd %s382, %s391
          %s393 = smul.addr %s389, 2
          %s394 = smul.addr %s31, 32
          %s395 = sadd.s32 %s393, %s394
          %s396 = smul.addr %s395, 128
          %s397 = scalar_lea.hbm %s2, %s396
          %s398 = sshll.u32 %s385, 4
          %s399 = int_to_ptr.vmem [resolvable:$true] %s398
          %404 = dma.hbm_to_vmem [thread:$0]  %s397, 256, %s399, %s382, 128, 128, 8
        $region52: #{tpu_custom_call.1} parent=39 // pred_fallthru
          _
      $region40: #{tpu_custom_call.1} parent=5 // pred_fallthru
        _
      %p405 = scmp.le.s32.totalorder 1, %s24
      %p406 = scmp.lt.s32.totalorder %s24, 3
      %p407 = pnand %p405, %p406
      %p408 = pneg %p407
      // Predicated region
      $region53: #{tpu_custom_call.1} parent=5 // pred_check
        _
      $region54: #{tpu_custom_call.1} parent=5 // pred_check_branch
        %410 = sbr.rel (%p407) target = $region56
      $region55: #{tpu_custom_call.1} parent=5 // pred_region
        %s411 = ssub.s32 %s24, 1
        %s412 = sand.u32 %s51, 1
        %s413 = scalar_lea.sflag [#allocation4], %s412
        %s414 = sand.u32 %s51, 1
        %s415 = smul.addr %s414, 256
        %s416 = scalar_lea.vmem [#allocation3], %s415
        // Predicated region
        $region57: #{tpu_custom_call.1} parent=55 // pred_check
          %p417 = pneg %p64
        $region58: #{tpu_custom_call.1} parent=55 // pred_check_branch
          %419 = sbr.rel (%p417) target = $region60
        $region59: #{tpu_custom_call.1} parent=55 // pred_region
          %420 = dma.done %s413, 4096
        $region60: #{tpu_custom_call.1} parent=55 // pred_fallthru
          _
        %s421 = sand.u32 %s29, 1
        %s422 = scalar_lea.sflag [#allocation7], %s421
        %s423 = sand.u32 %s87, 1
        %s424 = smul.addr %s423, 16
        %s425 = scalar_lea.vmem [#allocation6], %s424
        // Predicated region
        $region61: #{tpu_custom_call.1} parent=55 // pred_check
          %p426 = pneg %p100
        $region62: #{tpu_custom_call.1} parent=55 // pred_check_branch
          %428 = sbr.rel (%p426) target = $region64
        $region63: #{tpu_custom_call.1} parent=55 // pred_region
          %429 = dma.done %s422, 256
        $region64: #{tpu_custom_call.1} parent=55 // pred_fallthru
          _
        %s430 = sand.u32 %s29, 1
        %s431 = scalar_lea.sflag [#allocation7], %s430
        %s432 = sand.u32 %s123, 1
        %s433 = smul.addr %s432, 16
        %s434 = scalar_lea.vmem [#allocation8], %s433
        // Predicated region
        $region65: #{tpu_custom_call.1} parent=55 // pred_check
          %p435 = pneg %p136
        $region66: #{tpu_custom_call.1} parent=55 // pred_check_branch
          %437 = sbr.rel (%p435) target = $region68
        $region67: #{tpu_custom_call.1} parent=55 // pred_region
          %438 = dma.done %s431, 256
        $region68: #{tpu_custom_call.1} parent=55 // pred_fallthru
          _
        %s439 = sand.u32 %s51, 1
        %s440 = scalar_lea.sflag [#allocation4], %s439
        %s441 = sand.u32 %s51, 1
        %s442 = smul.addr %s441, 256
        %s443 = scalar_lea.vmem [#allocation3], %s442
        %p444 = pneg %p64
        %p445 = pneg %p61
        %s446 = sand.u32 %s29, 1
        %s447 = scalar_lea.sflag [#allocation7], %s446
        %s448 = sand.u32 %s87, 1
        %s449 = smul.addr %s448, 16
        %s450 = scalar_lea.vmem [#allocation6], %s449
        %p451 = pneg %p100
        %p452 = pneg %p97
        %s453 = sand.u32 %s29, 1
        %s454 = scalar_lea.sflag [#allocation7], %s453
        %s455 = sand.u32 %s123, 1
        %s456 = smul.addr %s455, 16
        %s457 = scalar_lea.vmem [#allocation8], %s456
        %p458 = pneg %p136
        %p459 = pneg %p133
        %p460 = pneg %p157
        %p461 = pneg %p154
        %p462 = pneg %p178
        %p463 = pneg %p175
        %p464 = pneg %p199
        %p465 = pneg %p196
        %p466 = pneg %p220
        %p467 = pneg %p217
        %p468 = pneg %p241
        %p469 = pneg %p238
        %p470 = pneg %p262
        %p471 = pneg %p259
        %p472 = pneg %p290
        %p473 = pneg %p287
        %s474 = sand.u32 %s277, 1
        %s475 = scalar_lea.sflag [#allocation5], %s474
        %s476 = sand.u32 %s277, 1
        %s477 = smul.addr %s476, 256
        %s478 = scalar_lea.vmem [#allocation9], %s477
        %s479 = smul.u32 16, %s34
        %s480 = smul.u32 %s34, 16
        %s481 = ssub.s32 %s480, 1
        %p482 = scmp.gt.s32.totalorder %s481, 0
        %s483 = scalar_select %p482, %s481, 0
        %s484 = sadd.s32 %s34, 1
        %s485 = smul.u32 %s484, 16
        %p486 = scmp.lt.s32.totalorder %s485, 15
        %s487 = scalar_select %p486, %s485, 15
        %s488 = smul.u32 16, %s34
        %vm489 = vcmask 778240
        %490 = vst.msk [vmem:[#allocation2] sm:$0x1] %vm489, 0.0
        %491 = vst.msk [vmem:[#allocation2 + $0x18] sm:$0x1] %vm489, 0.0
        %492 = vst.msk [vmem:[#allocation2 + $0x30] sm:$0x1] %vm489, 0.0
        %493 = vst.msk [vmem:[#allocation2 + $0x48] sm:$0x1] %vm489, 0.0
        %494 = vst.msk [vmem:[#allocation2 + $0x60] sm:$0x1] %vm489, 0.0
        %495 = vst.msk [vmem:[#allocation2 + $0x78] sm:$0x1] %vm489, 0.0
        %496 = vst.msk [vmem:[#allocation2 + $0x90] sm:$0x1] %vm489, 0.0
        %497 = vst.msk [vmem:[#allocation2 + $0xa8] sm:$0x1] %vm489, 0.0
        %498 = vst.msk [vmem:[#allocation2 + $0xc0] sm:$0x1] %vm489, 0.0
        %499 = vst.msk [vmem:[#allocation2 + $0xd8] sm:$0x1] %vm489, 0.0
        %500 = vst.msk [vmem:[#allocation2 + $0xf0] sm:$0x1] %vm489, 0.0
        %501 = vst.msk [vmem:[#allocation2 + $0x108] sm:$0x1] %vm489, 0.0
        %502 = vst.msk [vmem:[#allocation2 + $0x120] sm:$0x1] %vm489, 0.0
        %503 = vst.msk [vmem:[#allocation2 + $0x138] sm:$0x1] %vm489, 0.0
        %504 = vst.msk [vmem:[#allocation2 + $0x150] sm:$0x1] %vm489, 0.0
        %505 = vst.msk [vmem:[#allocation2 + $0x168] sm:$0x1] %vm489, 0.0
        %506 = vst.msk [vmem:[#allocation2 + $0x180] sm:$0x1] %vm489, 0.0
        %507 = vst.msk [vmem:[#allocation2 + $0x198] sm:$0x1] %vm489, 0.0
        %508 = vst.msk [vmem:[#allocation2 + $0x11] sm:$0x1] %vm489, 0.0
        %509 = vst.msk [vmem:[#allocation2 + $0x29] sm:$0x1] %vm489, 0.0
        %510 = vst.msk [vmem:[#allocation2 + $0x41] sm:$0x1] %vm489, 0.0
        %511 = vst.msk [vmem:[#allocation2 + $0x59] sm:$0x1] %vm489, 0.0
        %512 = vst.msk [vmem:[#allocation2 + $0x71] sm:$0x1] %vm489, 0.0
        %513 = vst.msk [vmem:[#allocation2 + $0x89] sm:$0x1] %vm489, 0.0
        %514 = vst.msk [vmem:[#allocation2 + $0xa1] sm:$0x1] %vm489, 0.0
        %515 = vst.msk [vmem:[#allocation2 + $0xb9] sm:$0x1] %vm489, 0.0
        %516 = vst.msk [vmem:[#allocation2 + $0xd1] sm:$0x1] %vm489, 0.0
        %517 = vst.msk [vmem:[#allocation2 + $0xe9] sm:$0x1] %vm489, 0.0
        %518 = vst.msk [vmem:[#allocation2 + $0x101] sm:$0x1] %vm489, 0.0
        %519 = vst.msk [vmem:[#allocation2 + $0x119] sm:$0x1] %vm489, 0.0
        %520 = vst.msk [vmem:[#allocation2 + $0x131] sm:$0x1] %vm489, 0.0
        %521 = vst.msk [vmem:[#allocation2 + $0x149] sm:$0x1] %vm489, 0.0
        %522 = vst.msk [vmem:[#allocation2 + $0x161] sm:$0x1] %vm489, 0.0
        %523 = vst.msk [vmem:[#allocation2 + $0x179] sm:$0x1] %vm489, 0.0
        %524 = vst.msk [vmem:[#allocation2 + $0x191] sm:$0x1] %vm489, 0.0
        %525 = vst.msk [vmem:[#allocation2 + $0x1a9] sm:$0x1] %vm489, 0.0
        %v526 = vld [vmem:[%s416] sm:$0xff]
        %v527 = vld [vmem:[%s416 + $0x8] sm:$0xff]
        %v528 = vld [vmem:[%s416 + $0x10] sm:$0xff]
        %v529 = vld [vmem:[%s416 + $0x18] sm:$0xff]
        %v530 = vld [vmem:[%s416 + $0x20] sm:$0xff]
        %v531 = vld [vmem:[%s416 + $0x28] sm:$0xff]
        %v532 = vld [vmem:[%s416 + $0x30] sm:$0xff]
        %v533 = vld [vmem:[%s416 + $0x38] sm:$0xff]
        %v534 = vld [vmem:[%s416 + $0x40] sm:$0xff]
        %v535 = vld [vmem:[%s416 + $0x48] sm:$0xff]
        %v536 = vld [vmem:[%s416 + $0x50] sm:$0xff]
        %v537 = vld [vmem:[%s416 + $0x58] sm:$0xff]
        %v538 = vld [vmem:[%s416 + $0x60] sm:$0xff]
        %v539 = vld [vmem:[%s416 + $0x68] sm:$0xff]
        %v540 = vld [vmem:[%s416 + $0x70] sm:$0xff]
        %v541 = vld [vmem:[%s416 + $0x78] sm:$0xff]
        %v542 = vld [vmem:[%s416 + $0x80] sm:$0xff]
        %v543 = vld [vmem:[%s416 + $0x88] sm:$0xff]
        %v544 = vld [vmem:[%s416 + $0x90] sm:$0xff]
        %v545 = vld [vmem:[%s416 + $0x98] sm:$0xff]
        %v546 = vld [vmem:[%s416 + $0xa0] sm:$0xff]
        %v547 = vld [vmem:[%s416 + $0xa8] sm:$0xff]
        %v548 = vld [vmem:[%s416 + $0xb0] sm:$0xff]
        %v549 = vld [vmem:[%s416 + $0xb8] sm:$0xff]
        %v550 = vld [vmem:[%s416 + $0xc0] sm:$0xff]
        %v551 = vld [vmem:[%s416 + $0xc8] sm:$0xff]
        %v552 = vld [vmem:[%s416 + $0xd0] sm:$0xff]
        %v553 = vld [vmem:[%s416 + $0xd8] sm:$0xff]
        %v554 = vld [vmem:[%s416 + $0xe0] sm:$0xff]
        %v555 = vld [vmem:[%s416 + $0xe8] sm:$0xff]
        %v556 = vld [vmem:[%s416 + $0xf0] sm:$0xff]
        %v557 = vld [vmem:[%s416 + $0xf8] sm:$0xff]
        %v558 = vld [vmem:[%s3] sm:$0xff]
        %v559 = vld [vmem:[%s3 + $0x8] sm:$0xff]
        %v560 = vld [vmem:[%s4] sm:$0x1]
        %v562 = vlaneseq
        %v563 = vshrl.u32 %v562, 7
        %v564 = vsub.s32 0, %v563
        %v565 = vrot.slane %v560, %v564
        %vm567 = vcmask 130048
        %v569 = vsel %vm567, %v526, 0
        %v572 = vsel %vm567, %v527, 0
        %v575 = vsel %vm567, %v528, 0
        %v578 = vsel %vm567, %v529, 0
        %v581 = vsel %vm567, %v530, 0
        %v584 = vsel %vm567, %v531, 0
        %v587 = vsel %vm567, %v532, 0
        %v590 = vsel %vm567, %v533, 0
        %v593 = vsel %vm567, %v534, 0
        %v596 = vsel %vm567, %v535, 0
        %v599 = vsel %vm567, %v536, 0
        %v602 = vsel %vm567, %v537, 0
        %v605 = vsel %vm567, %v538, 0
        %v608 = vsel %vm567, %v539, 0
        %v611 = vsel %vm567, %v540, 0
        %v614 = vsel %vm567, %v541, 0
        %v617 = vsel %vm567, %v542, 0
        %v620 = vsel %vm567, %v543, 0
        %v623 = vsel %vm567, %v544, 0
        %v626 = vsel %vm567, %v545, 0
        %v629 = vsel %vm567, %v546, 0
        %v632 = vsel %vm567, %v547, 0
        %v635 = vsel %vm567, %v548, 0
        %v638 = vsel %vm567, %v549, 0
        %v641 = vsel %vm567, %v550, 0
        %v644 = vsel %vm567, %v551, 0
        %v647 = vsel %vm567, %v552, 0
        %v650 = vsel %vm567, %v553, 0
        %v653 = vsel %vm567, %v554, 0
        %v656 = vsel %vm567, %v555, 0
        %v659 = vsel %vm567, %v556, 0
        %v662 = vsel %vm567, %v557, 0
        %664 = vmatprep.subr.mxu0 0.0
        %665 = vmatpush1.msra.mxu0 0.0
        %666 = vmatprep.subr.mxu0 0.0
        %667 = vmatpush1.msra.mxu0 0.0
        %668 = vmatprep.subr.mxu0 0.0
        %669 = vmatpush1.msra.mxu0 0.0
        %670 = vmatprep.subr.mxu0 0.0
        %671 = vmatpush1.msra.mxu0 0.0
        %672 = vmatprep.subr.mxu0 0.0
        %673 = vmatpush1.msra.mxu0 0.0
        %674 = vmatprep.subr.mxu0 0.0
        %675 = vmatpush1.msra.mxu0 0.0
        %676 = vmatprep.subr.mxu0 0.0
        %677 = vmatpush1.msra.mxu0 0.0
        %678 = vmatprep.subr.mxu0 0.0
        %679 = vmatpush1.msra.mxu0 0.0
        %680 = vmatprep.subr.mxu0 0.0
        %681 = vmatpush1.msra.mxu0 0.0
        %682 = vmatprep.subr.mxu0 0.0
        %683 = vmatpush1.msra.mxu0 0.0
        %684 = vmatprep.subr.mxu0 0.0
        %685 = vmatpush1.msra.mxu0 0.0
        %686 = vmatprep.subr.mxu0 0.0
        %687 = vmatpush1.msra.mxu0 0.0
        %688 = vmatprep.subr.mxu0 0.0
        %689 = vmatpush1.msra.mxu0 0.0
        %690 = vmatprep.subr.mxu0 0.0
        %691 = vmatpush1.msra.mxu0 0.0
        %692 = vmatprep.subr.mxu0 0.0
        %693 = vmatpush1.msra.mxu0 %v559
        %694 = vmatprep.subr.mxu0 0.0
        %695 = vmatpush1.msra.mxu0 %v558
        %696 = vmatprep.subr.mxu0 0.0
        %697 = vmatpush2.msra.mxu0 0.0
        %698 = vmatprep.subr.mxu0 0.0
        %699 = vmatpush2.msra.mxu0 0.0
        %700 = vmatprep.subr.mxu0 0.0
        %701 = vmatpush2.msra.mxu0 0.0
        %702 = vmatprep.subr.mxu0 0.0
        %703 = vmatpush2.msra.mxu0 0.0
        %704 = vmatprep.subr.mxu0 0.0
        %705 = vmatpush2.msra.mxu0 0.0
        %706 = vmatprep.subr.mxu0 0.0
        %707 = vmatpush2.msra.mxu0 0.0
        %708 = vmatprep.subr.mxu0 0.0
        %709 = vmatpush2.msra.mxu0 0.0
        %710 = vmatprep.subr.mxu0 0.0
        %711 = vmatpush2.msra.mxu0 0.0
        %712 = vmatprep.subr.mxu0 0.0
        %713 = vmatpush2.msra.mxu0 0.0
        %714 = vmatprep.subr.mxu0 0.0
        %715 = vmatpush2.msra.mxu0 0.0
        %716 = vmatprep.subr.mxu0 0.0
        %717 = vmatpush2.msra.mxu0 0.0
        %718 = vmatprep.subr.mxu0 0.0
        %719 = vmatpush2.msra.mxu0 0.0
        %720 = vmatprep.subr.mxu0 0.0
        %721 = vmatpush2.msra.mxu0 0.0
        %722 = vmatprep.subr.mxu0 0.0
        %723 = vmatpush2.msra.mxu0 0.0
        %724 = vmatprep.subr.mxu0 0.0
        %725 = vmatpush2.msra.mxu0 0.0
        %726 = vmatprep.subr.mxu0 0.0
        %727 = vmatpush2.msra.mxu0 0.0
        %728 = vmatprep.mubr.f32.mxu0 0.0
        %729 = vmatmul.mubr.f32.gmra.mxu0 %v569
        %v730 = vpop.f32.mrf.mxu0
        %v731 = vadd.f32 %v565, %v730
        %v732 = vpop.f32.mrf.mxu0
        %733 = vmatprep.mubr.f32.mxu0 0.0
        %734 = vmatmul.mubr.f32.gmra.mxu0 %v572
        %v735 = vpop.f32.mrf.mxu0
        %v736 = vadd.f32 %v565, %v735
        %v737 = vpop.f32.mrf.mxu0
        %738 = vmatprep.mubr.f32.mxu0 0.0
        %739 = vmatmul.mubr.f32.gmra.mxu0 %v575
        %v740 = vpop.f32.mrf.mxu0
        %v741 = vadd.f32 %v565, %v740
        %v742 = vpop.f32.mrf.mxu0
        %743 = vmatprep.mubr.f32.mxu0 0.0
        %744 = vmatmul.mubr.f32.gmra.mxu0 %v578
        %v745 = vpop.f32.mrf.mxu0
        %v746 = vadd.f32 %v565, %v745
        %v747 = vpop.f32.mrf.mxu0
        %748 = vmatprep.mubr.f32.mxu0 0.0
        %749 = vmatmul.mubr.f32.gmra.mxu0 %v581
        %v750 = vpop.f32.mrf.mxu0
        %v751 = vadd.f32 %v565, %v750
        %v752 = vpop.f32.mrf.mxu0
        %753 = vmatprep.mubr.f32.mxu0 0.0
        %754 = vmatmul.mubr.f32.gmra.mxu0 %v584
        %v755 = vpop.f32.mrf.mxu0
        %v756 = vadd.f32 %v565, %v755
        %v757 = vpop.f32.mrf.mxu0
        %758 = vmatprep.mubr.f32.mxu0 0.0
        %759 = vmatmul.mubr.f32.gmra.mxu0 %v587
        %v760 = vpop.f32.mrf.mxu0
        %v761 = vadd.f32 %v565, %v760
        %v762 = vpop.f32.mrf.mxu0
        %763 = vmatprep.mubr.f32.mxu0 0.0
        %764 = vmatmul.mubr.f32.gmra.mxu0 %v590
        %v765 = vpop.f32.mrf.mxu0
        %v766 = vadd.f32 %v565, %v765
        %v767 = vpop.f32.mrf.mxu0
        %768 = vmatprep.mubr.f32.mxu0 0.0
        %769 = vmatmul.mubr.f32.gmra.mxu0 %v593
        %v770 = vpop.f32.mrf.mxu0
        %v771 = vadd.f32 %v565, %v770
        %v772 = vpop.f32.mrf.mxu0
        %773 = vmatprep.mubr.f32.mxu0 0.0
        %774 = vmatmul.mubr.f32.gmra.mxu0 %v596
        %v775 = vpop.f32.mrf.mxu0
        %v776 = vadd.f32 %v565, %v775
        %v777 = vpop.f32.mrf.mxu0
        %778 = vmatprep.mubr.f32.mxu0 0.0
        %779 = vmatmul.mubr.f32.gmra.mxu0 %v599
        %v780 = vpop.f32.mrf.mxu0
        %v781 = vadd.f32 %v565, %v780
        %v782 = vpop.f32.mrf.mxu0
        %783 = vmatprep.mubr.f32.mxu0 0.0
        %784 = vmatmul.mubr.f32.gmra.mxu0 %v602
        %v785 = vpop.f32.mrf.mxu0
        %v786 = vadd.f32 %v565, %v785
        %v787 = vpop.f32.mrf.mxu0
        %788 = vmatprep.mubr.f32.mxu0 0.0
        %789 = vmatmul.mubr.f32.gmra.mxu0 %v605
        %v790 = vpop.f32.mrf.mxu0
        %v791 = vadd.f32 %v565, %v790
        %v792 = vpop.f32.mrf.mxu0
        %793 = vmatprep.mubr.f32.mxu0 0.0
        %794 = vmatmul.mubr.f32.gmra.mxu0 %v608
        %v795 = vpop.f32.mrf.mxu0
        %v796 = vadd.f32 %v565, %v795
        %v797 = vpop.f32.mrf.mxu0
        %798 = vmatprep.mubr.f32.mxu0 0.0
        %799 = vmatmul.mubr.f32.gmra.mxu0 %v611
        %v800 = vpop.f32.mrf.mxu0
        %v801 = vadd.f32 %v565, %v800
        %v802 = vpop.f32.mrf.mxu0
        %803 = vmatprep.mubr.f32.mxu0 0.0
        %804 = vmatmul.mubr.f32.gmra.mxu0 %v614
        %v805 = vpop.f32.mrf.mxu0
        %v806 = vadd.f32 %v565, %v805
        %v807 = vpop.f32.mrf.mxu0
        %808 = vmatprep.mubr.f32.mxu0 0.0
        %809 = vmatmul.mubr.f32.gmra.mxu0 %v617
        %v810 = vpop.f32.mrf.mxu0
        %v811 = vadd.f32 %v565, %v810
        %v812 = vpop.f32.mrf.mxu0
        %813 = vmatprep.mubr.f32.mxu0 0.0
        %814 = vmatmul.mubr.f32.gmra.mxu0 %v620
        %v815 = vpop.f32.mrf.mxu0
        %v816 = vadd.f32 %v565, %v815
        %v817 = vpop.f32.mrf.mxu0
        %818 = vmatprep.mubr.f32.mxu0 0.0
        %819 = vmatmul.mubr.f32.gmra.mxu0 %v623
        %v820 = vpop.f32.mrf.mxu0
        %v821 = vadd.f32 %v565, %v820
        %v822 = vpop.f32.mrf.mxu0
        %823 = vmatprep.mubr.f32.mxu0 0.0
        %824 = vmatmul.mubr.f32.gmra.mxu0 %v626
        %v825 = vpop.f32.mrf.mxu0
        %v826 = vadd.f32 %v565, %v825
        %v827 = vpop.f32.mrf.mxu0
        %828 = vmatprep.mubr.f32.mxu0 0.0
        %829 = vmatmul.mubr.f32.gmra.mxu0 %v629
        %v830 = vpop.f32.mrf.mxu0
        %v831 = vadd.f32 %v565, %v830
        %v832 = vpop.f32.mrf.mxu0
        %833 = vmatprep.mubr.f32.mxu0 0.0
        %834 = vmatmul.mubr.f32.gmra.mxu0 %v632
        %v835 = vpop.f32.mrf.mxu0
        %v836 = vadd.f32 %v565, %v835
        %v837 = vpop.f32.mrf.mxu0
        %838 = vmatprep.mubr.f32.mxu0 0.0
        %839 = vmatmul.mubr.f32.gmra.mxu0 %v635
        %v840 = vpop.f32.mrf.mxu0
        %v841 = vadd.f32 %v565, %v840
        %v842 = vpop.f32.mrf.mxu0
        %843 = vmatprep.mubr.f32.mxu0 0.0
        %844 = vmatmul.mubr.f32.gmra.mxu0 %v638
        %v845 = vpop.f32.mrf.mxu0
        %v846 = vadd.f32 %v565, %v845
        %v847 = vpop.f32.mrf.mxu0
        %848 = vmatprep.mubr.f32.mxu0 0.0
        %849 = vmatmul.mubr.f32.gmra.mxu0 %v641
        %v850 = vpop.f32.mrf.mxu0
        %v851 = vadd.f32 %v565, %v850
        %v852 = vpop.f32.mrf.mxu0
        %853 = vmatprep.mubr.f32.mxu0 0.0
        %854 = vmatmul.mubr.f32.gmra.mxu0 %v644
        %v855 = vpop.f32.mrf.mxu0
        %v856 = vadd.f32 %v565, %v855
        %v857 = vpop.f32.mrf.mxu0
        %858 = vmatprep.mubr.f32.mxu0 0.0
        %859 = vmatmul.mubr.f32.gmra.mxu0 %v647
        %v860 = vpop.f32.mrf.mxu0
        %v861 = vadd.f32 %v565, %v860
        %v862 = vpop.f32.mrf.mxu0
        %863 = vmatprep.mubr.f32.mxu0 0.0
        %864 = vmatmul.mubr.f32.gmra.mxu0 %v650
        %v865 = vpop.f32.mrf.mxu0
        %v866 = vadd.f32 %v565, %v865
        %v867 = vpop.f32.mrf.mxu0
        %868 = vmatprep.mubr.f32.mxu0 0.0
        %869 = vmatmul.mubr.f32.gmra.mxu0 %v653
        %v870 = vpop.f32.mrf.mxu0
        %v871 = vadd.f32 %v565, %v870
        %v872 = vpop.f32.mrf.mxu0
        %873 = vmatprep.mubr.f32.mxu0 0.0
        %874 = vmatmul.mubr.f32.gmra.mxu0 %v656
        %v875 = vpop.f32.mrf.mxu0
        %v876 = vadd.f32 %v565, %v875
        %v877 = vpop.f32.mrf.mxu0
        %878 = vmatprep.mubr.f32.mxu0 0.0
        %879 = vmatmul.mubr.f32.gmra.mxu0 %v659
        %v880 = vpop.f32.mrf.mxu0
        %v881 = vadd.f32 %v565, %v880
        %v882 = vpop.f32.mrf.mxu0
        %883 = vmatprep.mubr.f32.mxu0 0.0
        %884 = vmatmul.mubr.f32.gmra.mxu0 %v662
        %v885 = vpop.f32.mrf.mxu0
        %v886 = vadd.f32 %v565, %v885
        %v887 = vpop.f32.mrf.mxu0
        %888 = vdwg.mxu0
        %v889 = vmax.f32 %v731, 0.0
        %v890 = vmax.f32 %v736, 0.0
        %v891 = vmax.f32 %v741, 0.0
        %v892 = vmax.f32 %v746, 0.0
        %v893 = vmax.f32 %v751, 0.0
        %v894 = vmax.f32 %v756, 0.0
        %v895 = vmax.f32 %v761, 0.0
        %v896 = vmax.f32 %v766, 0.0
        %v897 = vmax.f32 %v771, 0.0
        %v898 = vmax.f32 %v776, 0.0
        %v899 = vmax.f32 %v781, 0.0
        %v900 = vmax.f32 %v786, 0.0
        %v901 = vmax.f32 %v791, 0.0
        %v902 = vmax.f32 %v796, 0.0
        %v903 = vmax.f32 %v801, 0.0
        %v904 = vmax.f32 %v806, 0.0
        %v905 = vmax.f32 %v811, 0.0
        %v906 = vmax.f32 %v816, 0.0
        %v907 = vmax.f32 %v821, 0.0
        %v908 = vmax.f32 %v826, 0.0
        %v909 = vmax.f32 %v831, 0.0
        %v910 = vmax.f32 %v836, 0.0
        %v911 = vmax.f32 %v841, 0.0
        %v912 = vmax.f32 %v846, 0.0
        %v913 = vmax.f32 %v851, 0.0
        %v914 = vmax.f32 %v856, 0.0
        %v915 = vmax.f32 %v861, 0.0
        %v916 = vmax.f32 %v866, 0.0
        %v917 = vmax.f32 %v871, 0.0
        %v918 = vmax.f32 %v876, 0.0
        %v919 = vmax.f32 %v881, 0.0
        %v920 = vmax.f32 %v886, 0.0
        %v921 = vmin.f32 %v889, 6.0
        %v922 = vmin.f32 %v890, 6.0
        %v923 = vmin.f32 %v891, 6.0
        %v924 = vmin.f32 %v892, 6.0
        %v925 = vmin.f32 %v893, 6.0
        %v926 = vmin.f32 %v894, 6.0
        %v927 = vmin.f32 %v895, 6.0
        %v928 = vmin.f32 %v896, 6.0
        %v929 = vmin.f32 %v897, 6.0
        %v930 = vmin.f32 %v898, 6.0
        %v931 = vmin.f32 %v899, 6.0
        %v932 = vmin.f32 %v900, 6.0
        %v933 = vmin.f32 %v901, 6.0
        %v934 = vmin.f32 %v902, 6.0
        %v935 = vmin.f32 %v903, 6.0
        %v936 = vmin.f32 %v904, 6.0
        %v937 = vmin.f32 %v905, 6.0
        %v938 = vmin.f32 %v906, 6.0
        %v939 = vmin.f32 %v907, 6.0
        %v940 = vmin.f32 %v908, 6.0
        %v941 = vmin.f32 %v909, 6.0
        %v942 = vmin.f32 %v910, 6.0
        %v943 = vmin.f32 %v911, 6.0
        %v944 = vmin.f32 %v912, 6.0
        %v945 = vmin.f32 %v913, 6.0
        %v946 = vmin.f32 %v914, 6.0
        %v947 = vmin.f32 %v915, 6.0
        %v948 = vmin.f32 %v916, 6.0
        %v949 = vmin.f32 %v917, 6.0
        %v950 = vmin.f32 %v918, 6.0
        %v951 = vmin.f32 %v919, 6.0
        %v952 = vmin.f32 %v920, 6.0
        %s953 = scalar_lea.vmem [#allocation2], 24
        %vm954 = vcmask 785408
        %955 = vst.msk [vmem:[%s953 + $0x1] sm:$0xff] %vm954, %v921
        %956 = vst.msk [vmem:[%s953 + $0x9] sm:$0xff] %vm954, %v922
        %957 = vst.msk [vmem:[%s953 + $0x19] sm:$0xff] %vm954, %v923
        %958 = vst.msk [vmem:[%s953 + $0x21] sm:$0xff] %vm954, %v924
        %959 = vst.msk [vmem:[%s953 + $0x31] sm:$0xff] %vm954, %v925
        %960 = vst.msk [vmem:[%s953 + $0x39] sm:$0xff] %vm954, %v926
        %961 = vst.msk [vmem:[%s953 + $0x49] sm:$0xff] %vm954, %v927
        %962 = vst.msk [vmem:[%s953 + $0x51] sm:$0xff] %vm954, %v928
        %963 = vst.msk [vmem:[%s953 + $0x61] sm:$0xff] %vm954, %v929
        %964 = vst.msk [vmem:[%s953 + $0x69] sm:$0xff] %vm954, %v930
        %965 = vst.msk [vmem:[%s953 + $0x79] sm:$0xff] %vm954, %v931
        %966 = vst.msk [vmem:[%s953 + $0x81] sm:$0xff] %vm954, %v932
        %967 = vst.msk [vmem:[%s953 + $0x91] sm:$0xff] %vm954, %v933
        %968 = vst.msk [vmem:[%s953 + $0x99] sm:$0xff] %vm954, %v934
        %969 = vst.msk [vmem:[%s953 + $0xa9] sm:$0xff] %vm954, %v935
        %970 = vst.msk [vmem:[%s953 + $0xb1] sm:$0xff] %vm954, %v936
        %971 = vst.msk [vmem:[%s953 + $0xc1] sm:$0xff] %vm954, %v937
        %972 = vst.msk [vmem:[%s953 + $0xc9] sm:$0xff] %vm954, %v938
        %973 = vst.msk [vmem:[%s953 + $0xd9] sm:$0xff] %vm954, %v939
        %974 = vst.msk [vmem:[%s953 + $0xe1] sm:$0xff] %vm954, %v940
        %975 = vst.msk [vmem:[%s953 + $0xf1] sm:$0xff] %vm954, %v941
        %976 = vst.msk [vmem:[%s953 + $0xf9] sm:$0xff] %vm954, %v942
        %977 = vst.msk [vmem:[%s953 + $0x109] sm:$0xff] %vm954, %v943
        %978 = vst.msk [vmem:[%s953 + $0x111] sm:$0xff] %vm954, %v944
        %979 = vst.msk [vmem:[%s953 + $0x121] sm:$0xff] %vm954, %v945
        %980 = vst.msk [vmem:[%s953 + $0x129] sm:$0xff] %vm954, %v946
        %981 = vst.msk [vmem:[%s953 + $0x139] sm:$0xff] %vm954, %v947
        %982 = vst.msk [vmem:[%s953 + $0x141] sm:$0xff] %vm954, %v948
        %983 = vst.msk [vmem:[%s953 + $0x151] sm:$0xff] %vm954, %v949
        %984 = vst.msk [vmem:[%s953 + $0x159] sm:$0xff] %vm954, %v950
        %985 = vst.msk [vmem:[%s953 + $0x169] sm:$0xff] %vm954, %v951
        %986 = vst.msk [vmem:[%s953 + $0x171] sm:$0xff] %vm954, %v952
        %v987 = vld [vmem:[%s425] sm:$0xff]
        %v988 = vld [vmem:[%s425 + $0x8] sm:$0xff]
        %v989 = vld [vmem:[%s3] sm:$0xff]
        %v990 = vld [vmem:[%s3 + $0x8] sm:$0xff]
        %v991 = vld [vmem:[%s4] sm:$0x1]
        %v993 = vlaneseq
        %v994 = vshrl.u32 %v993, 7
        %v995 = vsub.s32 0, %v994
        %v996 = vrot.slane %v991, %v995
        %v999 = vsel %vm567, %v987, 0
        %v1002 = vsel %vm567, %v988, 0
        %1004 = vmatprep.subr.mxu0 0.0
        %1005 = vmatpush1.msra.mxu0 0.0
        %1006 = vmatprep.subr.mxu0 0.0
        %1007 = vmatpush1.msra.mxu0 0.0
        %1008 = vmatprep.subr.mxu0 0.0
        %1009 = vmatpush1.msra.mxu0 0.0
        %1010 = vmatprep.subr.mxu0 0.0
        %1011 = vmatpush1.msra.mxu0 0.0
        %1012 = vmatprep.subr.mxu0 0.0
        %1013 = vmatpush1.msra.mxu0 0.0
        %1014 = vmatprep.subr.mxu0 0.0
        %1015 = vmatpush1.msra.mxu0 0.0
        %1016 = vmatprep.subr.mxu0 0.0
        %1017 = vmatpush1.msra.mxu0 0.0
        %1018 = vmatprep.subr.mxu0 0.0
        %1019 = vmatpush1.msra.mxu0 0.0
        %1020 = vmatprep.subr.mxu0 0.0
        %1021 = vmatpush1.msra.mxu0 0.0
        %1022 = vmatprep.subr.mxu0 0.0
        %1023 = vmatpush1.msra.mxu0 0.0
        %1024 = vmatprep.subr.mxu0 0.0
        %1025 = vmatpush1.msra.mxu0 0.0
        %1026 = vmatprep.subr.mxu0 0.0
        %1027 = vmatpush1.msra.mxu0 0.0
        %1028 = vmatprep.subr.mxu0 0.0
        %1029 = vmatpush1.msra.mxu0 0.0
        %1030 = vmatprep.subr.mxu0 0.0
        %1031 = vmatpush1.msra.mxu0 0.0
        %1032 = vmatprep.subr.mxu0 0.0
        %1033 = vmatpush1.msra.mxu0 %v990
        %1034 = vmatprep.subr.mxu0 0.0
        %1035 = vmatpush1.msra.mxu0 %v989
        %1036 = vmatprep.subr.mxu0 0.0
        %1037 = vmatpush2.msra.mxu0 0.0
        %1038 = vmatprep.subr.mxu0 0.0
        %1039 = vmatpush2.msra.mxu0 0.0
        %1040 = vmatprep.subr.mxu0 0.0
        %1041 = vmatpush2.msra.mxu0 0.0
        %1042 = vmatprep.subr.mxu0 0.0
        %1043 = vmatpush2.msra.mxu0 0.0
        %1044 = vmatprep.subr.mxu0 0.0
        %1045 = vmatpush2.msra.mxu0 0.0
        %1046 = vmatprep.subr.mxu0 0.0
        %1047 = vmatpush2.msra.mxu0 0.0
        %1048 = vmatprep.subr.mxu0 0.0
        %1049 = vmatpush2.msra.mxu0 0.0
        %1050 = vmatprep.subr.mxu0 0.0
        %1051 = vmatpush2.msra.mxu0 0.0
        %1052 = vmatprep.subr.mxu0 0.0
        %1053 = vmatpush2.msra.mxu0 0.0
        %1054 = vmatprep.subr.mxu0 0.0
        %1055 = vmatpush2.msra.mxu0 0.0
        %1056 = vmatprep.subr.mxu0 0.0
        %1057 = vmatpush2.msra.mxu0 0.0
        %1058 = vmatprep.subr.mxu0 0.0
        %1059 = vmatpush2.msra.mxu0 0.0
        %1060 = vmatprep.subr.mxu0 0.0
        %1061 = vmatpush2.msra.mxu0 0.0
        %1062 = vmatprep.subr.mxu0 0.0
        %1063 = vmatpush2.msra.mxu0 0.0
        %1064 = vmatprep.subr.mxu0 0.0
        %1065 = vmatpush2.msra.mxu0 0.0
        %1066 = vmatprep.subr.mxu0 0.0
        %1067 = vmatpush2.msra.mxu0 0.0
        %1068 = vmatprep.mubr.f32.mxu0 0.0
        %1069 = vmatmul.mubr.f32.gmra.mxu0 %v999
        %v1070 = vpop.f32.mrf.mxu0
        %v1071 = vadd.f32 %v996, %v1070
        %v1072 = vpop.f32.mrf.mxu0
        %1073 = vmatprep.mubr.f32.mxu0 0.0
        %1074 = vmatmul.mubr.f32.gmra.mxu0 %v1002
        %v1075 = vpop.f32.mrf.mxu0
        %v1076 = vadd.f32 %v996, %v1075
        %v1077 = vpop.f32.mrf.mxu0
        %1078 = vdwg.mxu0
        %v1079 = vmax.f32 %v1071, 0.0
        %v1080 = vmax.f32 %v1076, 0.0
        %v1081 = vmin.f32 %v1079, 6.0
        %v1082 = vmin.f32 %v1080, 6.0
        %p1083 = scmp.gt.s32.totalorder %s34, 0
        %s1084 = scalar_select %p1083, 1, 0
        %v1085 = vstv %s1084
        %vm1086 = vcmp.eq.s32.totalorder %v1085, 1
        %v1087 = vsel %vm1086, %v1081, 0.0
        %v1088 = vsel %vm1086, %v1082, 0.0
        %1089 = vst.msk [vmem:[#allocation2 + $0x1] sm:$0xff] %vm954, %v1087
        %1090 = vst.msk [vmem:[#allocation2 + $0x9] sm:$0xff] %vm954, %v1088
        %v1091 = vld [vmem:[%s434] sm:$0xff]
        %v1092 = vld [vmem:[%s434 + $0x8] sm:$0xff]
        %v1093 = vld [vmem:[%s3] sm:$0xff]
        %v1094 = vld [vmem:[%s3 + $0x8] sm:$0xff]
        %v1095 = vld [vmem:[%s4] sm:$0x1]
        %v1097 = vlaneseq
        %v1098 = vshrl.u32 %v1097, 7
        %v1099 = vsub.s32 0, %v1098
        %v1100 = vrot.slane %v1095, %v1099
        %v1103 = vsel %vm567, %v1091, 0
        %v1106 = vsel %vm567, %v1092, 0
        %1108 = vmatprep.subr.mxu0 0.0
        %1109 = vmatpush1.msra.mxu0 0.0
        %1110 = vmatprep.subr.mxu0 0.0
        %1111 = vmatpush1.msra.mxu0 0.0
        %1112 = vmatprep.subr.mxu0 0.0
        %1113 = vmatpush1.msra.mxu0 0.0
        %1114 = vmatprep.subr.mxu0 0.0
        %1115 = vmatpush1.msra.mxu0 0.0
        %1116 = vmatprep.subr.mxu0 0.0
        %1117 = vmatpush1.msra.mxu0 0.0
        %1118 = vmatprep.subr.mxu0 0.0
        %1119 = vmatpush1.msra.mxu0 0.0
        %1120 = vmatprep.subr.mxu0 0.0
        %1121 = vmatpush1.msra.mxu0 0.0
        %1122 = vmatprep.subr.mxu0 0.0
        %1123 = vmatpush1.msra.mxu0 0.0
        %1124 = vmatprep.subr.mxu0 0.0
        %1125 = vmatpush1.msra.mxu0 0.0
        %1126 = vmatprep.subr.mxu0 0.0
        %1127 = vmatpush1.msra.mxu0 0.0
        %1128 = vmatprep.subr.mxu0 0.0
        %1129 = vmatpush1.msra.mxu0 0.0
        %1130 = vmatprep.subr.mxu0 0.0
        %1131 = vmatpush1.msra.mxu0 0.0
        %1132 = vmatprep.subr.mxu0 0.0
        %1133 = vmatpush1.msra.mxu0 0.0
        %1134 = vmatprep.subr.mxu0 0.0
        %1135 = vmatpush1.msra.mxu0 0.0
        %1136 = vmatprep.subr.mxu0 0.0
        %1137 = vmatpush1.msra.mxu0 %v1094
        %1138 = vmatprep.subr.mxu0 0.0
        %1139 = vmatpush1.msra.mxu0 %v1093
        %1140 = vmatprep.subr.mxu0 0.0
        %1141 = vmatpush2.msra.mxu0 0.0
        %1142 = vmatprep.subr.mxu0 0.0
        %1143 = vmatpush2.msra.mxu0 0.0
        %1144 = vmatprep.subr.mxu0 0.0
        %1145 = vmatpush2.msra.mxu0 0.0
        %1146 = vmatprep.subr.mxu0 0.0
        %1147 = vmatpush2.msra.mxu0 0.0
        %1148 = vmatprep.subr.mxu0 0.0
        %1149 = vmatpush2.msra.mxu0 0.0
        %1150 = vmatprep.subr.mxu0 0.0
        %1151 = vmatpush2.msra.mxu0 0.0
        %1152 = vmatprep.subr.mxu0 0.0
        %1153 = vmatpush2.msra.mxu0 0.0
        %1154 = vmatprep.subr.mxu0 0.0
        %1155 = vmatpush2.msra.mxu0 0.0
        %1156 = vmatprep.subr.mxu0 0.0
        %1157 = vmatpush2.msra.mxu0 0.0
        %1158 = vmatprep.subr.mxu0 0.0
        %1159 = vmatpush2.msra.mxu0 0.0
        %1160 = vmatprep.subr.mxu0 0.0
        %1161 = vmatpush2.msra.mxu0 0.0
        %1162 = vmatprep.subr.mxu0 0.0
        %1163 = vmatpush2.msra.mxu0 0.0
        %1164 = vmatprep.subr.mxu0 0.0
        %1165 = vmatpush2.msra.mxu0 0.0
        %1166 = vmatprep.subr.mxu0 0.0
        %1167 = vmatpush2.msra.mxu0 0.0
        %1168 = vmatprep.subr.mxu0 0.0
        %1169 = vmatpush2.msra.mxu0 0.0
        %1170 = vmatprep.subr.mxu0 0.0
        %1171 = vmatpush2.msra.mxu0 0.0
        %1172 = vmatprep.mubr.f32.mxu0 0.0
        %1173 = vmatmul.mubr.f32.gmra.mxu0 %v1103
        %v1174 = vpop.f32.mrf.mxu0
        %v1175 = vadd.f32 %v1100, %v1174
        %v1176 = vpop.f32.mrf.mxu0
        %1177 = vmatprep.mubr.f32.mxu0 0.0
        %1178 = vmatmul.mubr.f32.gmra.mxu0 %v1106
        %v1179 = vpop.f32.mrf.mxu0
        %v1180 = vadd.f32 %v1100, %v1179
        %v1181 = vpop.f32.mrf.mxu0
        %1182 = vdwg.mxu0
        %v1183 = vmax.f32 %v1175, 0.0
        %v1184 = vmax.f32 %v1180, 0.0
        %v1185 = vmin.f32 %v1183, 6.0
        %v1186 = vmin.f32 %v1184, 6.0
        %p1187 = scmp.lt.s32.totalorder %s34, 0
        %s1188 = scalar_select %p1187, 1, 0
        %v1189 = vstv %s1188
        %vm1190 = vcmp.eq.s32.totalorder %v1189, 1
        %v1191 = vsel %vm1190, %v1185, 0.0
        %v1192 = vsel %vm1190, %v1186, 0.0
        %s1193 = scalar_lea.vmem [#allocation2], 408
        %1194 = vst.msk [vmem:[%s1193 + $0x1] sm:$0xff] %vm954, %v1191
        %1195 = vst.msk [vmem:[%s1193 + $0x9] sm:$0xff] %vm954, %v1192
        %v1196 = vld [vmem:[%s5] sm:$0xff]
        %v1197 = vld [vmem:[%s5 + $0x8] sm:$0x1]
        %v1198 = vld [vmem:[#allocation2] sm:$0xff]
        %v1199 = vld [vmem:[#allocation2 + $0x8] sm:$0xff]
        %v1200 = vld [vmem:[#allocation2 + $0x18] sm:$0xff]
        %v1201 = vld [vmem:[#allocation2 + $0x20] sm:$0xff]
        %v1202 = vld [vmem:[#allocation2 + $0x30] sm:$0xff]
        %v1203 = vld [vmem:[#allocation2 + $0x38] sm:$0xff]
        %v1204 = vld [vmem:[#allocation2 + $0x48] sm:$0xff]
        %v1205 = vld [vmem:[#allocation2 + $0x50] sm:$0xff]
        %v1206 = vld [vmem:[#allocation2 + $0x60] sm:$0xff]
        %v1207 = vld [vmem:[#allocation2 + $0x68] sm:$0xff]
        %v1208 = vld [vmem:[#allocation2 + $0x78] sm:$0xff]
        %v1209 = vld [vmem:[#allocation2 + $0x80] sm:$0xff]
        %v1210 = vld [vmem:[#allocation2 + $0x90] sm:$0xff]
        %v1211 = vld [vmem:[#allocation2 + $0x98] sm:$0xff]
        %v1212 = vld [vmem:[#allocation2 + $0xa8] sm:$0xff]
        %v1213 = vld [vmem:[#allocation2 + $0xb0] sm:$0xff]
        %v1214 = vld [vmem:[#allocation2 + $0xc0] sm:$0xff]
        %v1215 = vld [vmem:[#allocation2 + $0xc8] sm:$0xff]
        %v1216 = vld [vmem:[#allocation2 + $0xd8] sm:$0xff]
        %v1217 = vld [vmem:[#allocation2 + $0xe0] sm:$0xff]
        %v1218 = vld [vmem:[#allocation2 + $0xf0] sm:$0xff]
        %v1219 = vld [vmem:[#allocation2 + $0xf8] sm:$0xff]
        %v1220 = vld [vmem:[#allocation2 + $0x108] sm:$0xff]
        %v1221 = vld [vmem:[#allocation2 + $0x110] sm:$0xff]
        %v1222 = vld [vmem:[#allocation2 + $0x120] sm:$0xff]
        %v1223 = vld [vmem:[#allocation2 + $0x128] sm:$0xff]
        %v1224 = vld [vmem:[#allocation2 + $0x138] sm:$0xff]
        %v1225 = vld [vmem:[#allocation2 + $0x140] sm:$0xff]
        %v1226 = vld [vmem:[#allocation2 + $0x150] sm:$0xff]
        %v1227 = vld [vmem:[#allocation2 + $0x158] sm:$0xff]
        %v1228 = vld [vmem:[#allocation2 + $0x168] sm:$0xff]
        %v1229 = vld [vmem:[#allocation2 + $0x170] sm:$0xff]
        %v1230 = vlaneseq
        %v1231 = vshrl.u32 %v1230, 7
        %v1232 = vsub.s32 0, %v1231
        %v1233 = vrot.slane %v1196, %v1232
        %v1234 = vmul.f32 %v1198, %v1233
        %v1235 = vmul.f32 %v1199, %v1233
        %v1236 = vmul.f32 %v1200, %v1233
        %v1237 = vmul.f32 %v1201, %v1233
        %v1238 = vmul.f32 %v1202, %v1233
        %v1239 = vmul.f32 %v1203, %v1233
        %v1240 = vmul.f32 %v1204, %v1233
        %v1241 = vmul.f32 %v1205, %v1233
        %v1242 = vmul.f32 %v1206, %v1233
        %v1243 = vmul.f32 %v1207, %v1233
        %v1244 = vmul.f32 %v1208, %v1233
        %v1245 = vmul.f32 %v1209, %v1233
        %v1246 = vmul.f32 %v1210, %v1233
        %v1247 = vmul.f32 %v1211, %v1233
        %v1248 = vmul.f32 %v1212, %v1233
        %v1249 = vmul.f32 %v1213, %v1233
        %v1250 = vmul.f32 %v1214, %v1233
        %v1251 = vmul.f32 %v1215, %v1233
        %v1252 = vmul.f32 %v1216, %v1233
        %v1253 = vmul.f32 %v1217, %v1233
        %v1254 = vmul.f32 %v1218, %v1233
        %v1255 = vmul.f32 %v1219, %v1233
        %v1256 = vmul.f32 %v1220, %v1233
        %v1257 = vmul.f32 %v1221, %v1233
        %v1258 = vmul.f32 %v1222, %v1233
        %v1259 = vmul.f32 %v1223, %v1233
        %v1260 = vmul.f32 %v1224, %v1233
        %v1261 = vmul.f32 %v1225, %v1233
        %v1262 = vmul.f32 %v1226, %v1233
        %v1263 = vmul.f32 %v1227, %v1233
        %v1264 = vmul.f32 %v1228, %v1233
        %v1265 = vmul.f32 %v1229, %v1233
        %v1266 = vadd.f32 %v1234, 0.0
        %v1267 = vadd.f32 %v1235, 0.0
        %v1268 = vadd.f32 %v1236, 0.0
        %v1269 = vadd.f32 %v1237, 0.0
        %v1270 = vadd.f32 %v1238, 0.0
        %v1271 = vadd.f32 %v1239, 0.0
        %v1272 = vadd.f32 %v1240, 0.0
        %v1273 = vadd.f32 %v1241, 0.0
        %v1274 = vadd.f32 %v1242, 0.0
        %v1275 = vadd.f32 %v1243, 0.0
        %v1276 = vadd.f32 %v1244, 0.0
        %v1277 = vadd.f32 %v1245, 0.0
        %v1278 = vadd.f32 %v1246, 0.0
        %v1279 = vadd.f32 %v1247, 0.0
        %v1280 = vadd.f32 %v1248, 0.0
        %v1281 = vadd.f32 %v1249, 0.0
        %v1282 = vadd.f32 %v1250, 0.0
        %v1283 = vadd.f32 %v1251, 0.0
        %v1284 = vadd.f32 %v1252, 0.0
        %v1285 = vadd.f32 %v1253, 0.0
        %v1286 = vadd.f32 %v1254, 0.0
        %v1287 = vadd.f32 %v1255, 0.0
        %v1288 = vadd.f32 %v1256, 0.0
        %v1289 = vadd.f32 %v1257, 0.0
        %v1290 = vadd.f32 %v1258, 0.0
        %v1291 = vadd.f32 %v1259, 0.0
        %v1292 = vadd.f32 %v1260, 0.0
        %v1293 = vadd.f32 %v1261, 0.0
        %v1294 = vadd.f32 %v1262, 0.0
        %v1295 = vadd.f32 %v1263, 0.0
        %v1296 = vadd.f32 %v1264, 0.0
        %v1297 = vadd.f32 %v1265, 0.0
        %v1298 = vld [vmem:[#allocation2 + $0x1] sm:$0xff]
        %v1299 = vld [vmem:[#allocation2 + $0x9] sm:$0xff]
        %v1300 = vld [vmem:[#allocation2 + $0x19] sm:$0xff]
        %v1301 = vld [vmem:[#allocation2 + $0x21] sm:$0xff]
        %v1302 = vld [vmem:[#allocation2 + $0x31] sm:$0xff]
        %v1303 = vld [vmem:[#allocation2 + $0x39] sm:$0xff]
        %v1304 = vld [vmem:[#allocation2 + $0x49] sm:$0xff]
        %v1305 = vld [vmem:[#allocation2 + $0x51] sm:$0xff]
        %v1306 = vld [vmem:[#allocation2 + $0x61] sm:$0xff]
        %v1307 = vld [vmem:[#allocation2 + $0x69] sm:$0xff]
        %v1308 = vld [vmem:[#allocation2 + $0x79] sm:$0xff]
        %v1309 = vld [vmem:[#allocation2 + $0x81] sm:$0xff]
        %v1310 = vld [vmem:[#allocation2 + $0x91] sm:$0xff]
        %v1311 = vld [vmem:[#allocation2 + $0x99] sm:$0xff]
        %v1312 = vld [vmem:[#allocation2 + $0xa9] sm:$0xff]
        %v1313 = vld [vmem:[#allocation2 + $0xb1] sm:$0xff]
        %v1314 = vld [vmem:[#allocation2 + $0xc1] sm:$0xff]
        %v1315 = vld [vmem:[#allocation2 + $0xc9] sm:$0xff]
        %v1316 = vld [vmem:[#allocation2 + $0xd9] sm:$0xff]
        %v1317 = vld [vmem:[#allocation2 + $0xe1] sm:$0xff]
        %v1318 = vld [vmem:[#allocation2 + $0xf1] sm:$0xff]
        %v1319 = vld [vmem:[#allocation2 + $0xf9] sm:$0xff]
        %v1320 = vld [vmem:[#allocation2 + $0x109] sm:$0xff]
        %v1321 = vld [vmem:[#allocation2 + $0x111] sm:$0xff]
        %v1322 = vld [vmem:[#allocation2 + $0x121] sm:$0xff]
        %v1323 = vld [vmem:[#allocation2 + $0x129] sm:$0xff]
        %v1324 = vld [vmem:[#allocation2 + $0x139] sm:$0xff]
        %v1325 = vld [vmem:[#allocation2 + $0x141] sm:$0xff]
        %v1326 = vld [vmem:[#allocation2 + $0x151] sm:$0xff]
        %v1327 = vld [vmem:[#allocation2 + $0x159] sm:$0xff]
        %v1328 = vld [vmem:[#allocation2 + $0x169] sm:$0xff]
        %v1329 = vld [vmem:[#allocation2 + $0x171] sm:$0xff]
        %v1330 = vlaneseq
        %v1331 = vshrl.u32 %v1330, 7
        %v1332 = vsub.s32 1, %v1331
        %v1333 = vrot.slane %v1196, %v1332
        %v1334 = vmul.f32 %v1298, %v1333
        %v1335 = vmul.f32 %v1299, %v1333
        %v1336 = vmul.f32 %v1300, %v1333
        %v1337 = vmul.f32 %v1301, %v1333
        %v1338 = vmul.f32 %v1302, %v1333
        %v1339 = vmul.f32 %v1303, %v1333
        %v1340 = vmul.f32 %v1304, %v1333
        %v1341 = vmul.f32 %v1305, %v1333
        %v1342 = vmul.f32 %v1306, %v1333
        %v1343 = vmul.f32 %v1307, %v1333
        %v1344 = vmul.f32 %v1308, %v1333
        %v1345 = vmul.f32 %v1309, %v1333
        %v1346 = vmul.f32 %v1310, %v1333
        %v1347 = vmul.f32 %v1311, %v1333
        %v1348 = vmul.f32 %v1312, %v1333
        %v1349 = vmul.f32 %v1313, %v1333
        %v1350 = vmul.f32 %v1314, %v1333
        %v1351 = vmul.f32 %v1315, %v1333
        %v1352 = vmul.f32 %v1316, %v1333
        %v1353 = vmul.f32 %v1317, %v1333
        %v1354 = vmul.f32 %v1318, %v1333
        %v1355 = vmul.f32 %v1319, %v1333
        %v1356 = vmul.f32 %v1320, %v1333
        %v1357 = vmul.f32 %v1321, %v1333
        %v1358 = vmul.f32 %v1322, %v1333
        %v1359 = vmul.f32 %v1323, %v1333
        %v1360 = vmul.f32 %v1324, %v1333
        %v1361 = vmul.f32 %v1325, %v1333
        %v1362 = vmul.f32 %v1326, %v1333
        %v1363 = vmul.f32 %v1327, %v1333
        %v1364 = vmul.f32 %v1328, %v1333
        %v1365 = vmul.f32 %v1329, %v1333
        %v1366 = vadd.f32 %v1266, %v1334
        %v1367 = vadd.f32 %v1267, %v1335
        %v1368 = vadd.f32 %v1268, %v1336
        %v1369 = vadd.f32 %v1269, %v1337
        %v1370 = vadd.f32 %v1270, %v1338
        %v1371 = vadd.f32 %v1271, %v1339
        %v1372 = vadd.f32 %v1272, %v1340
        %v1373 = vadd.f32 %v1273, %v1341
        %v1374 = vadd.f32 %v1274, %v1342
        %v1375 = vadd.f32 %v1275, %v1343
        %v1376 = vadd.f32 %v1276, %v1344
        %v1377 = vadd.f32 %v1277, %v1345
        %v1378 = vadd.f32 %v1278, %v1346
        %v1379 = vadd.f32 %v1279, %v1347
        %v1380 = vadd.f32 %v1280, %v1348
        %v1381 = vadd.f32 %v1281, %v1349
        %v1382 = vadd.f32 %v1282, %v1350
        %v1383 = vadd.f32 %v1283, %v1351
        %v1384 = vadd.f32 %v1284, %v1352
        %v1385 = vadd.f32 %v1285, %v1353
        %v1386 = vadd.f32 %v1286, %v1354
        %v1387 = vadd.f32 %v1287, %v1355
        %v1388 = vadd.f32 %v1288, %v1356
        %v1389 = vadd.f32 %v1289, %v1357
        %v1390 = vadd.f32 %v1290, %v1358
        %v1391 = vadd.f32 %v1291, %v1359
        %v1392 = vadd.f32 %v1292, %v1360
        %v1393 = vadd.f32 %v1293, %v1361
        %v1394 = vadd.f32 %v1294, %v1362
        %v1395 = vadd.f32 %v1295, %v1363
        %v1396 = vadd.f32 %v1296, %v1364
        %v1397 = vadd.f32 %v1297, %v1365
        %v1398 = vld [vmem:[#allocation2 + $0x2] sm:$0xff]
        %v1399 = vld [vmem:[#allocation2 + $0xa] sm:$0xff]
        %v1400 = vld [vmem:[#allocation2 + $0x1a] sm:$0xff]
        %v1401 = vld [vmem:[#allocation2 + $0x22] sm:$0xff]
        %v1402 = vld [vmem:[#allocation2 + $0x32] sm:$0xff]
        %v1403 = vld [vmem:[#allocation2 + $0x3a] sm:$0xff]
        %v1404 = vld [vmem:[#allocation2 + $0x4a] sm:$0xff]
        %v1405 = vld [vmem:[#allocation2 + $0x52] sm:$0xff]
        %v1406 = vld [vmem:[#allocation2 + $0x62] sm:$0xff]
        %v1407 = vld [vmem:[#allocation2 + $0x6a] sm:$0xff]
        %v1408 = vld [vmem:[#allocation2 + $0x7a] sm:$0xff]
        %v1409 = vld [vmem:[#allocation2 + $0x82] sm:$0xff]
        %v1410 = vld [vmem:[#allocation2 + $0x92] sm:$0xff]
        %v1411 = vld [vmem:[#allocation2 + $0x9a] sm:$0xff]
        %v1412 = vld [vmem:[#allocation2 + $0xaa] sm:$0xff]
        %v1413 = vld [vmem:[#allocation2 + $0xb2] sm:$0xff]
        %v1414 = vld [vmem:[#allocation2 + $0xc2] sm:$0xff]
        %v1415 = vld [vmem:[#allocation2 + $0xca] sm:$0xff]
        %v1416 = vld [vmem:[#allocation2 + $0xda] sm:$0xff]
        %v1417 = vld [vmem:[#allocation2 + $0xe2] sm:$0xff]
        %v1418 = vld [vmem:[#allocation2 + $0xf2] sm:$0xff]
        %v1419 = vld [vmem:[#allocation2 + $0xfa] sm:$0xff]
        %v1420 = vld [vmem:[#allocation2 + $0x10a] sm:$0xff]
        %v1421 = vld [vmem:[#allocation2 + $0x112] sm:$0xff]
        %v1422 = vld [vmem:[#allocation2 + $0x122] sm:$0xff]
        %v1423 = vld [vmem:[#allocation2 + $0x12a] sm:$0xff]
        %v1424 = vld [vmem:[#allocation2 + $0x13a] sm:$0xff]
        %v1425 = vld [vmem:[#allocation2 + $0x142] sm:$0xff]
        %v1426 = vld [vmem:[#allocation2 + $0x152] sm:$0xff]
        %v1427 = vld [vmem:[#allocation2 + $0x15a] sm:$0xff]
        %v1428 = vld [vmem:[#allocation2 + $0x16a] sm:$0xff]
        %v1429 = vld [vmem:[#allocation2 + $0x172] sm:$0xff]
        %v1430 = vlaneseq
        %v1431 = vshrl.u32 %v1430, 7
        %v1432 = vsub.s32 2, %v1431
        %v1433 = vrot.slane %v1196, %v1432
        %v1434 = vmul.f32 %v1398, %v1433
        %v1435 = vmul.f32 %v1399, %v1433
        %v1436 = vmul.f32 %v1400, %v1433
        %v1437 = vmul.f32 %v1401, %v1433
        %v1438 = vmul.f32 %v1402, %v1433
        %v1439 = vmul.f32 %v1403, %v1433
        %v1440 = vmul.f32 %v1404, %v1433
        %v1441 = vmul.f32 %v1405, %v1433
        %v1442 = vmul.f32 %v1406, %v1433
        %v1443 = vmul.f32 %v1407, %v1433
        %v1444 = vmul.f32 %v1408, %v1433
        %v1445 = vmul.f32 %v1409, %v1433
        %v1446 = vmul.f32 %v1410, %v1433
        %v1447 = vmul.f32 %v1411, %v1433
        %v1448 = vmul.f32 %v1412, %v1433
        %v1449 = vmul.f32 %v1413, %v1433
        %v1450 = vmul.f32 %v1414, %v1433
        %v1451 = vmul.f32 %v1415, %v1433
        %v1452 = vmul.f32 %v1416, %v1433
        %v1453 = vmul.f32 %v1417, %v1433
        %v1454 = vmul.f32 %v1418, %v1433
        %v1455 = vmul.f32 %v1419, %v1433
        %v1456 = vmul.f32 %v1420, %v1433
        %v1457 = vmul.f32 %v1421, %v1433
        %v1458 = vmul.f32 %v1422, %v1433
        %v1459 = vmul.f32 %v1423, %v1433
        %v1460 = vmul.f32 %v1424, %v1433
        %v1461 = vmul.f32 %v1425, %v1433
        %v1462 = vmul.f32 %v1426, %v1433
        %v1463 = vmul.f32 %v1427, %v1433
        %v1464 = vmul.f32 %v1428, %v1433
        %v1465 = vmul.f32 %v1429, %v1433
        %v1466 = vadd.f32 %v1366, %v1434
        %v1467 = vadd.f32 %v1367, %v1435
        %v1468 = vadd.f32 %v1368, %v1436
        %v1469 = vadd.f32 %v1369, %v1437
        %v1470 = vadd.f32 %v1370, %v1438
        %v1471 = vadd.f32 %v1371, %v1439
        %v1472 = vadd.f32 %v1372, %v1440
        %v1473 = vadd.f32 %v1373, %v1441
        %v1474 = vadd.f32 %v1374, %v1442
        %v1475 = vadd.f32 %v1375, %v1443
        %v1476 = vadd.f32 %v1376, %v1444
        %v1477 = vadd.f32 %v1377, %v1445
        %v1478 = vadd.f32 %v1378, %v1446
        %v1479 = vadd.f32 %v1379, %v1447
        %v1480 = vadd.f32 %v1380, %v1448
        %v1481 = vadd.f32 %v1381, %v1449
        %v1482 = vadd.f32 %v1382, %v1450
        %v1483 = vadd.f32 %v1383, %v1451
        %v1484 = vadd.f32 %v1384, %v1452
        %v1485 = vadd.f32 %v1385, %v1453
        %v1486 = vadd.f32 %v1386, %v1454
        %v1487 = vadd.f32 %v1387, %v1455
        %v1488 = vadd.f32 %v1388, %v1456
        %v1489 = vadd.f32 %v1389, %v1457
        %v1490 = vadd.f32 %v1390, %v1458
        %v1491 = vadd.f32 %v1391, %v1459
        %v1492 = vadd.f32 %v1392, %v1460
        %v1493 = vadd.f32 %v1393, %v1461
        %v1494 = vadd.f32 %v1394, %v1462
        %v1495 = vadd.f32 %v1395, %v1463
        %v1496 = vadd.f32 %v1396, %v1464
        %v1497 = vadd.f32 %v1397, %v1465
        %v1498 = vld [vmem:[%s953] sm:$0xff]
        %v1499 = vld [vmem:[%s953 + $0x8] sm:$0xff]
        %v1500 = vld [vmem:[%s953 + $0x18] sm:$0xff]
        %v1501 = vld [vmem:[%s953 + $0x20] sm:$0xff]
        %v1502 = vld [vmem:[%s953 + $0x30] sm:$0xff]
        %v1503 = vld [vmem:[%s953 + $0x38] sm:$0xff]
        %v1504 = vld [vmem:[%s953 + $0x48] sm:$0xff]
        %v1505 = vld [vmem:[%s953 + $0x50] sm:$0xff]
        %v1506 = vld [vmem:[%s953 + $0x60] sm:$0xff]
        %v1507 = vld [vmem:[%s953 + $0x68] sm:$0xff]
        %v1508 = vld [vmem:[%s953 + $0x78] sm:$0xff]
        %v1509 = vld [vmem:[%s953 + $0x80] sm:$0xff]
        %v1510 = vld [vmem:[%s953 + $0x90] sm:$0xff]
        %v1511 = vld [vmem:[%s953 + $0x98] sm:$0xff]
        %v1512 = vld [vmem:[%s953 + $0xa8] sm:$0xff]
        %v1513 = vld [vmem:[%s953 + $0xb0] sm:$0xff]
        %v1514 = vld [vmem:[%s953 + $0xc0] sm:$0xff]
        %v1515 = vld [vmem:[%s953 + $0xc8] sm:$0xff]
        %v1516 = vld [vmem:[%s953 + $0xd8] sm:$0xff]
        %v1517 = vld [vmem:[%s953 + $0xe0] sm:$0xff]
        %v1518 = vld [vmem:[%s953 + $0xf0] sm:$0xff]
        %v1519 = vld [vmem:[%s953 + $0xf8] sm:$0xff]
        %v1520 = vld [vmem:[%s953 + $0x108] sm:$0xff]
        %v1521 = vld [vmem:[%s953 + $0x110] sm:$0xff]
        %v1522 = vld [vmem:[%s953 + $0x120] sm:$0xff]
        %v1523 = vld [vmem:[%s953 + $0x128] sm:$0xff]
        %v1524 = vld [vmem:[%s953 + $0x138] sm:$0xff]
        %v1525 = vld [vmem:[%s953 + $0x140] sm:$0xff]
        %v1526 = vld [vmem:[%s953 + $0x150] sm:$0xff]
        %v1527 = vld [vmem:[%s953 + $0x158] sm:$0xff]
        %v1528 = vld [vmem:[%s953 + $0x168] sm:$0xff]
        %v1529 = vld [vmem:[%s953 + $0x170] sm:$0xff]
        %v1530 = vlaneseq
        %v1531 = vshrl.u32 %v1530, 7
        %v1532 = vsub.s32 3, %v1531
        %v1533 = vrot.slane %v1196, %v1532
        %v1534 = vmul.f32 %v1498, %v1533
        %v1535 = vmul.f32 %v1499, %v1533
        %v1536 = vmul.f32 %v1500, %v1533
        %v1537 = vmul.f32 %v1501, %v1533
        %v1538 = vmul.f32 %v1502, %v1533
        %v1539 = vmul.f32 %v1503, %v1533
        %v1540 = vmul.f32 %v1504, %v1533
        %v1541 = vmul.f32 %v1505, %v1533
        %v1542 = vmul.f32 %v1506, %v1533
        %v1543 = vmul.f32 %v1507, %v1533
        %v1544 = vmul.f32 %v1508, %v1533
        %v1545 = vmul.f32 %v1509, %v1533
        %v1546 = vmul.f32 %v1510, %v1533
        %v1547 = vmul.f32 %v1511, %v1533
        %v1548 = vmul.f32 %v1512, %v1533
        %v1549 = vmul.f32 %v1513, %v1533
        %v1550 = vmul.f32 %v1514, %v1533
        %v1551 = vmul.f32 %v1515, %v1533
        %v1552 = vmul.f32 %v1516, %v1533
        %v1553 = vmul.f32 %v1517, %v1533
        %v1554 = vmul.f32 %v1518, %v1533
        %v1555 = vmul.f32 %v1519, %v1533
        %v1556 = vmul.f32 %v1520, %v1533
        %v1557 = vmul.f32 %v1521, %v1533
        %v1558 = vmul.f32 %v1522, %v1533
        %v1559 = vmul.f32 %v1523, %v1533
        %v1560 = vmul.f32 %v1524, %v1533
        %v1561 = vmul.f32 %v1525, %v1533
        %v1562 = vmul.f32 %v1526, %v1533
        %v1563 = vmul.f32 %v1527, %v1533
        %v1564 = vmul.f32 %v1528, %v1533
        %v1565 = vmul.f32 %v1529, %v1533
        %v1566 = vadd.f32 %v1466, %v1534
        %v1567 = vadd.f32 %v1467, %v1535
        %v1568 = vadd.f32 %v1468, %v1536
        %v1569 = vadd.f32 %v1469, %v1537
        %v1570 = vadd.f32 %v1470, %v1538
        %v1571 = vadd.f32 %v1471, %v1539
        %v1572 = vadd.f32 %v1472, %v1540
        %v1573 = vadd.f32 %v1473, %v1541
        %v1574 = vadd.f32 %v1474, %v1542
        %v1575 = vadd.f32 %v1475, %v1543
        %v1576 = vadd.f32 %v1476, %v1544
        %v1577 = vadd.f32 %v1477, %v1545
        %v1578 = vadd.f32 %v1478, %v1546
        %v1579 = vadd.f32 %v1479, %v1547
        %v1580 = vadd.f32 %v1480, %v1548
        %v1581 = vadd.f32 %v1481, %v1549
        %v1582 = vadd.f32 %v1482, %v1550
        %v1583 = vadd.f32 %v1483, %v1551
        %v1584 = vadd.f32 %v1484, %v1552
        %v1585 = vadd.f32 %v1485, %v1553
        %v1586 = vadd.f32 %v1486, %v1554
        %v1587 = vadd.f32 %v1487, %v1555
        %v1588 = vadd.f32 %v1488, %v1556
        %v1589 = vadd.f32 %v1489, %v1557
        %v1590 = vadd.f32 %v1490, %v1558
        %v1591 = vadd.f32 %v1491, %v1559
        %v1592 = vadd.f32 %v1492, %v1560
        %v1593 = vadd.f32 %v1493, %v1561
        %v1594 = vadd.f32 %v1494, %v1562
        %v1595 = vadd.f32 %v1495, %v1563
        %v1596 = vadd.f32 %v1496, %v1564
        %v1597 = vadd.f32 %v1497, %v1565
        %v1598 = vld [vmem:[%s953 + $0x1] sm:$0xff]
        %v1599 = vld [vmem:[%s953 + $0x9] sm:$0xff]
        %v1600 = vld [vmem:[%s953 + $0x19] sm:$0xff]
        %v1601 = vld [vmem:[%s953 + $0x21] sm:$0xff]
        %v1602 = vld [vmem:[%s953 + $0x31] sm:$0xff]
        %v1603 = vld [vmem:[%s953 + $0x39] sm:$0xff]
        %v1604 = vld [vmem:[%s953 + $0x49] sm:$0xff]
        %v1605 = vld [vmem:[%s953 + $0x51] sm:$0xff]
        %v1606 = vld [vmem:[%s953 + $0x61] sm:$0xff]
        %v1607 = vld [vmem:[%s953 + $0x69] sm:$0xff]
        %v1608 = vld [vmem:[%s953 + $0x79] sm:$0xff]
        %v1609 = vld [vmem:[%s953 + $0x81] sm:$0xff]
        %v1610 = vld [vmem:[%s953 + $0x91] sm:$0xff]
        %v1611 = vld [vmem:[%s953 + $0x99] sm:$0xff]
        %v1612 = vld [vmem:[%s953 + $0xa9] sm:$0xff]
        %v1613 = vld [vmem:[%s953 + $0xb1] sm:$0xff]
        %v1614 = vld [vmem:[%s953 + $0xc1] sm:$0xff]
        %v1615 = vld [vmem:[%s953 + $0xc9] sm:$0xff]
        %v1616 = vld [vmem:[%s953 + $0xd9] sm:$0xff]
        %v1617 = vld [vmem:[%s953 + $0xe1] sm:$0xff]
        %v1618 = vld [vmem:[%s953 + $0xf1] sm:$0xff]
        %v1619 = vld [vmem:[%s953 + $0xf9] sm:$0xff]
        %v1620 = vld [vmem:[%s953 + $0x109] sm:$0xff]
        %v1621 = vld [vmem:[%s953 + $0x111] sm:$0xff]
        %v1622 = vld [vmem:[%s953 + $0x121] sm:$0xff]
        %v1623 = vld [vmem:[%s953 + $0x129] sm:$0xff]
        %v1624 = vld [vmem:[%s953 + $0x139] sm:$0xff]
        %v1625 = vld [vmem:[%s953 + $0x141] sm:$0xff]
        %v1626 = vld [vmem:[%s953 + $0x151] sm:$0xff]
        %v1627 = vld [vmem:[%s953 + $0x159] sm:$0xff]
        %v1628 = vld [vmem:[%s953 + $0x169] sm:$0xff]
        %v1629 = vld [vmem:[%s953 + $0x171] sm:$0xff]
        %v1630 = vlaneseq
        %v1631 = vshrl.u32 %v1630, 7
        %v1632 = vsub.s32 4, %v1631
        %v1633 = vrot.slane %v1196, %v1632
        %v1634 = vmul.f32 %v1598, %v1633
        %v1635 = vmul.f32 %v1599, %v1633
        %v1636 = vmul.f32 %v1600, %v1633
        %v1637 = vmul.f32 %v1601, %v1633
        %v1638 = vmul.f32 %v1602, %v1633
        %v1639 = vmul.f32 %v1603, %v1633
        %v1640 = vmul.f32 %v1604, %v1633
        %v1641 = vmul.f32 %v1605, %v1633
        %v1642 = vmul.f32 %v1606, %v1633
        %v1643 = vmul.f32 %v1607, %v1633
        %v1644 = vmul.f32 %v1608, %v1633
        %v1645 = vmul.f32 %v1609, %v1633
        %v1646 = vmul.f32 %v1610, %v1633
        %v1647 = vmul.f32 %v1611, %v1633
        %v1648 = vmul.f32 %v1612, %v1633
        %v1649 = vmul.f32 %v1613, %v1633
        %v1650 = vmul.f32 %v1614, %v1633
        %v1651 = vmul.f32 %v1615, %v1633
        %v1652 = vmul.f32 %v1616, %v1633
        %v1653 = vmul.f32 %v1617, %v1633
        %v1654 = vmul.f32 %v1618, %v1633
        %v1655 = vmul.f32 %v1619, %v1633
        %v1656 = vmul.f32 %v1620, %v1633
        %v1657 = vmul.f32 %v1621, %v1633
        %v1658 = vmul.f32 %v1622, %v1633
        %v1659 = vmul.f32 %v1623, %v1633
        %v1660 = vmul.f32 %v1624, %v1633
        %v1661 = vmul.f32 %v1625, %v1633
        %v1662 = vmul.f32 %v1626, %v1633
        %v1663 = vmul.f32 %v1627, %v1633
        %v1664 = vmul.f32 %v1628, %v1633
        %v1665 = vmul.f32 %v1629, %v1633
        %v1666 = vadd.f32 %v1566, %v1634
        %v1667 = vadd.f32 %v1567, %v1635
        %v1668 = vadd.f32 %v1568, %v1636
        %v1669 = vadd.f32 %v1569, %v1637
        %v1670 = vadd.f32 %v1570, %v1638
        %v1671 = vadd.f32 %v1571, %v1639
        %v1672 = vadd.f32 %v1572, %v1640
        %v1673 = vadd.f32 %v1573, %v1641
        %v1674 = vadd.f32 %v1574, %v1642
        %v1675 = vadd.f32 %v1575, %v1643
        %v1676 = vadd.f32 %v1576, %v1644
        %v1677 = vadd.f32 %v1577, %v1645
        %v1678 = vadd.f32 %v1578, %v1646
        %v1679 = vadd.f32 %v1579, %v1647
        %v1680 = vadd.f32 %v1580, %v1648
        %v1681 = vadd.f32 %v1581, %v1649
        %v1682 = vadd.f32 %v1582, %v1650
        %v1683 = vadd.f32 %v1583, %v1651
        %v1684 = vadd.f32 %v1584, %v1652
        %v1685 = vadd.f32 %v1585, %v1653
        %v1686 = vadd.f32 %v1586, %v1654
        %v1687 = vadd.f32 %v1587, %v1655
        %v1688 = vadd.f32 %v1588, %v1656
        %v1689 = vadd.f32 %v1589, %v1657
        %v1690 = vadd.f32 %v1590, %v1658
        %v1691 = vadd.f32 %v1591, %v1659
        %v1692 = vadd.f32 %v1592, %v1660
        %v1693 = vadd.f32 %v1593, %v1661
        %v1694 = vadd.f32 %v1594, %v1662
        %v1695 = vadd.f32 %v1595, %v1663
        %v1696 = vadd.f32 %v1596, %v1664
        %v1697 = vadd.f32 %v1597, %v1665
        %v1698 = vld [vmem:[%s953 + $0x2] sm:$0xff]
        %v1699 = vld [vmem:[%s953 + $0xa] sm:$0xff]
        %v1700 = vld [vmem:[%s953 + $0x1a] sm:$0xff]
        %v1701 = vld [vmem:[%s953 + $0x22] sm:$0xff]
        %v1702 = vld [vmem:[%s953 + $0x32] sm:$0xff]
        %v1703 = vld [vmem:[%s953 + $0x3a] sm:$0xff]
        %v1704 = vld [vmem:[%s953 + $0x4a] sm:$0xff]
        %v1705 = vld [vmem:[%s953 + $0x52] sm:$0xff]
        %v1706 = vld [vmem:[%s953 + $0x62] sm:$0xff]
        %v1707 = vld [vmem:[%s953 + $0x6a] sm:$0xff]
        %v1708 = vld [vmem:[%s953 + $0x7a] sm:$0xff]
        %v1709 = vld [vmem:[%s953 + $0x82] sm:$0xff]
        %v1710 = vld [vmem:[%s953 + $0x92] sm:$0xff]
        %v1711 = vld [vmem:[%s953 + $0x9a] sm:$0xff]
        %v1712 = vld [vmem:[%s953 + $0xaa] sm:$0xff]
        %v1713 = vld [vmem:[%s953 + $0xb2] sm:$0xff]
        %v1714 = vld [vmem:[%s953 + $0xc2] sm:$0xff]
        %v1715 = vld [vmem:[%s953 + $0xca] sm:$0xff]
        %v1716 = vld [vmem:[%s953 + $0xda] sm:$0xff]
        %v1717 = vld [vmem:[%s953 + $0xe2] sm:$0xff]
        %v1718 = vld [vmem:[%s953 + $0xf2] sm:$0xff]
        %v1719 = vld [vmem:[%s953 + $0xfa] sm:$0xff]
        %v1720 = vld [vmem:[%s953 + $0x10a] sm:$0xff]
        %v1721 = vld [vmem:[%s953 + $0x112] sm:$0xff]
        %v1722 = vld [vmem:[%s953 + $0x122] sm:$0xff]
        %v1723 = vld [vmem:[%s953 + $0x12a] sm:$0xff]
        %v1724 = vld [vmem:[%s953 + $0x13a] sm:$0xff]
        %v1725 = vld [vmem:[%s953 + $0x142] sm:$0xff]
        %v1726 = vld [vmem:[%s953 + $0x152] sm:$0xff]
        %v1727 = vld [vmem:[%s953 + $0x15a] sm:$0xff]
        %v1728 = vld [vmem:[%s953 + $0x16a] sm:$0xff]
        %v1729 = vld [vmem:[%s953 + $0x172] sm:$0xff]
        %v1730 = vlaneseq
        %v1731 = vshrl.u32 %v1730, 7
        %v1732 = vsub.s32 5, %v1731
        %v1733 = vrot.slane %v1196, %v1732
        %v1734 = vmul.f32 %v1698, %v1733
        %v1735 = vmul.f32 %v1699, %v1733
        %v1736 = vmul.f32 %v1700, %v1733
        %v1737 = vmul.f32 %v1701, %v1733
        %v1738 = vmul.f32 %v1702, %v1733
        %v1739 = vmul.f32 %v1703, %v1733
        %v1740 = vmul.f32 %v1704, %v1733
        %v1741 = vmul.f32 %v1705, %v1733
        %v1742 = vmul.f32 %v1706, %v1733
        %v1743 = vmul.f32 %v1707, %v1733
        %v1744 = vmul.f32 %v1708, %v1733
        %v1745 = vmul.f32 %v1709, %v1733
        %v1746 = vmul.f32 %v1710, %v1733
        %v1747 = vmul.f32 %v1711, %v1733
        %v1748 = vmul.f32 %v1712, %v1733
        %v1749 = vmul.f32 %v1713, %v1733
        %v1750 = vmul.f32 %v1714, %v1733
        %v1751 = vmul.f32 %v1715, %v1733
        %v1752 = vmul.f32 %v1716, %v1733
        %v1753 = vmul.f32 %v1717, %v1733
        %v1754 = vmul.f32 %v1718, %v1733
        %v1755 = vmul.f32 %v1719, %v1733
        %v1756 = vmul.f32 %v1720, %v1733
        %v1757 = vmul.f32 %v1721, %v1733
        %v1758 = vmul.f32 %v1722, %v1733
        %v1759 = vmul.f32 %v1723, %v1733
        %v1760 = vmul.f32 %v1724, %v1733
        %v1761 = vmul.f32 %v1725, %v1733
        %v1762 = vmul.f32 %v1726, %v1733
        %v1763 = vmul.f32 %v1727, %v1733
        %v1764 = vmul.f32 %v1728, %v1733
        %v1765 = vmul.f32 %v1729, %v1733
        %v1766 = vadd.f32 %v1666, %v1734
        %v1767 = vadd.f32 %v1667, %v1735
        %v1768 = vadd.f32 %v1668, %v1736
        %v1769 = vadd.f32 %v1669, %v1737
        %v1770 = vadd.f32 %v1670, %v1738
        %v1771 = vadd.f32 %v1671, %v1739
        %v1772 = vadd.f32 %v1672, %v1740
        %v1773 = vadd.f32 %v1673, %v1741
        %v1774 = vadd.f32 %v1674, %v1742
        %v1775 = vadd.f32 %v1675, %v1743
        %v1776 = vadd.f32 %v1676, %v1744
        %v1777 = vadd.f32 %v1677, %v1745
        %v1778 = vadd.f32 %v1678, %v1746
        %v1779 = vadd.f32 %v1679, %v1747
        %v1780 = vadd.f32 %v1680, %v1748
        %v1781 = vadd.f32 %v1681, %v1749
        %v1782 = vadd.f32 %v1682, %v1750
        %v1783 = vadd.f32 %v1683, %v1751
        %v1784 = vadd.f32 %v1684, %v1752
        %v1785 = vadd.f32 %v1685, %v1753
        %v1786 = vadd.f32 %v1686, %v1754
        %v1787 = vadd.f32 %v1687, %v1755
        %v1788 = vadd.f32 %v1688, %v1756
        %v1789 = vadd.f32 %v1689, %v1757
        %v1790 = vadd.f32 %v1690, %v1758
        %v1791 = vadd.f32 %v1691, %v1759
        %v1792 = vadd.f32 %v1692, %v1760
        %v1793 = vadd.f32 %v1693, %v1761
        %v1794 = vadd.f32 %v1694, %v1762
        %v1795 = vadd.f32 %v1695, %v1763
        %v1796 = vadd.f32 %v1696, %v1764
        %v1797 = vadd.f32 %v1697, %v1765
        %s1798 = scalar_lea.vmem [#allocation2], 48
        %v1799 = vld [vmem:[%s1798] sm:$0xff]
        %v1800 = vld [vmem:[%s1798 + $0x8] sm:$0xff]
        %v1801 = vld [vmem:[%s1798 + $0x18] sm:$0xff]
        %v1802 = vld [vmem:[%s1798 + $0x20] sm:$0xff]
        %v1803 = vld [vmem:[%s1798 + $0x30] sm:$0xff]
        %v1804 = vld [vmem:[%s1798 + $0x38] sm:$0xff]
        %v1805 = vld [vmem:[%s1798 + $0x48] sm:$0xff]
        %v1806 = vld [vmem:[%s1798 + $0x50] sm:$0xff]
        %v1807 = vld [vmem:[%s1798 + $0x60] sm:$0xff]
        %v1808 = vld [vmem:[%s1798 + $0x68] sm:$0xff]
        %v1809 = vld [vmem:[%s1798 + $0x78] sm:$0xff]
        %v1810 = vld [vmem:[%s1798 + $0x80] sm:$0xff]
        %v1811 = vld [vmem:[%s1798 + $0x90] sm:$0xff]
        %v1812 = vld [vmem:[%s1798 + $0x98] sm:$0xff]
        %v1813 = vld [vmem:[%s1798 + $0xa8] sm:$0xff]
        %v1814 = vld [vmem:[%s1798 + $0xb0] sm:$0xff]
        %v1815 = vld [vmem:[%s1798 + $0xc0] sm:$0xff]
        %v1816 = vld [vmem:[%s1798 + $0xc8] sm:$0xff]
        %v1817 = vld [vmem:[%s1798 + $0xd8] sm:$0xff]
        %v1818 = vld [vmem:[%s1798 + $0xe0] sm:$0xff]
        %v1819 = vld [vmem:[%s1798 + $0xf0] sm:$0xff]
        %v1820 = vld [vmem:[%s1798 + $0xf8] sm:$0xff]
        %v1821 = vld [vmem:[%s1798 + $0x108] sm:$0xff]
        %v1822 = vld [vmem:[%s1798 + $0x110] sm:$0xff]
        %v1823 = vld [vmem:[%s1798 + $0x120] sm:$0xff]
        %v1824 = vld [vmem:[%s1798 + $0x128] sm:$0xff]
        %v1825 = vld [vmem:[%s1798 + $0x138] sm:$0xff]
        %v1826 = vld [vmem:[%s1798 + $0x140] sm:$0xff]
        %v1827 = vld [vmem:[%s1798 + $0x150] sm:$0xff]
        %v1828 = vld [vmem:[%s1798 + $0x158] sm:$0xff]
        %v1829 = vld [vmem:[%s1798 + $0x168] sm:$0xff]
        %v1830 = vld [vmem:[%s1798 + $0x170] sm:$0xff]
        %v1831 = vlaneseq
        %v1832 = vshrl.u32 %v1831, 7
        %v1833 = vsub.s32 6, %v1832
        %v1834 = vrot.slane %v1196, %v1833
        %v1835 = vmul.f32 %v1799, %v1834
        %v1836 = vmul.f32 %v1800, %v1834
        %v1837 = vmul.f32 %v1801, %v1834
        %v1838 = vmul.f32 %v1802, %v1834
        %v1839 = vmul.f32 %v1803, %v1834
        %v1840 = vmul.f32 %v1804, %v1834
        %v1841 = vmul.f32 %v1805, %v1834
        %v1842 = vmul.f32 %v1806, %v1834
        %v1843 = vmul.f32 %v1807, %v1834
        %v1844 = vmul.f32 %v1808, %v1834
        %v1845 = vmul.f32 %v1809, %v1834
        %v1846 = vmul.f32 %v1810, %v1834
        %v1847 = vmul.f32 %v1811, %v1834
        %v1848 = vmul.f32 %v1812, %v1834
        %v1849 = vmul.f32 %v1813, %v1834
        %v1850 = vmul.f32 %v1814, %v1834
        %v1851 = vmul.f32 %v1815, %v1834
        %v1852 = vmul.f32 %v1816, %v1834
        %v1853 = vmul.f32 %v1817, %v1834
        %v1854 = vmul.f32 %v1818, %v1834
        %v1855 = vmul.f32 %v1819, %v1834
        %v1856 = vmul.f32 %v1820, %v1834
        %v1857 = vmul.f32 %v1821, %v1834
        %v1858 = vmul.f32 %v1822, %v1834
        %v1859 = vmul.f32 %v1823, %v1834
        %v1860 = vmul.f32 %v1824, %v1834
        %v1861 = vmul.f32 %v1825, %v1834
        %v1862 = vmul.f32 %v1826, %v1834
        %v1863 = vmul.f32 %v1827, %v1834
        %v1864 = vmul.f32 %v1828, %v1834
        %v1865 = vmul.f32 %v1829, %v1834
        %v1866 = vmul.f32 %v1830, %v1834
        %v1867 = vadd.f32 %v1766, %v1835
        %v1868 = vadd.f32 %v1767, %v1836
        %v1869 = vadd.f32 %v1768, %v1837
        %v1870 = vadd.f32 %v1769, %v1838
        %v1871 = vadd.f32 %v1770, %v1839
        %v1872 = vadd.f32 %v1771, %v1840
        %v1873 = vadd.f32 %v1772, %v1841
        %v1874 = vadd.f32 %v1773, %v1842
        %v1875 = vadd.f32 %v1774, %v1843
        %v1876 = vadd.f32 %v1775, %v1844
        %v1877 = vadd.f32 %v1776, %v1845
        %v1878 = vadd.f32 %v1777, %v1846
        %v1879 = vadd.f32 %v1778, %v1847
        %v1880 = vadd.f32 %v1779, %v1848
        %v1881 = vadd.f32 %v1780, %v1849
        %v1882 = vadd.f32 %v1781, %v1850
        %v1883 = vadd.f32 %v1782, %v1851
        %v1884 = vadd.f32 %v1783, %v1852
        %v1885 = vadd.f32 %v1784, %v1853
        %v1886 = vadd.f32 %v1785, %v1854
        %v1887 = vadd.f32 %v1786, %v1855
        %v1888 = vadd.f32 %v1787, %v1856
        %v1889 = vadd.f32 %v1788, %v1857
        %v1890 = vadd.f32 %v1789, %v1858
        %v1891 = vadd.f32 %v1790, %v1859
        %v1892 = vadd.f32 %v1791, %v1860
        %v1893 = vadd.f32 %v1792, %v1861
        %v1894 = vadd.f32 %v1793, %v1862
        %v1895 = vadd.f32 %v1794, %v1863
        %v1896 = vadd.f32 %v1795, %v1864
        %v1897 = vadd.f32 %v1796, %v1865
        %v1898 = vadd.f32 %v1797, %v1866
        %v1899 = vld [vmem:[%s1798 + $0x1] sm:$0xff]
        %v1900 = vld [vmem:[%s1798 + $0x9] sm:$0xff]
        %v1901 = vld [vmem:[%s1798 + $0x19] sm:$0xff]
        %v1902 = vld [vmem:[%s1798 + $0x21] sm:$0xff]
        %v1903 = vld [vmem:[%s1798 + $0x31] sm:$0xff]
        %v1904 = vld [vmem:[%s1798 + $0x39] sm:$0xff]
        %v1905 = vld [vmem:[%s1798 + $0x49] sm:$0xff]
        %v1906 = vld [vmem:[%s1798 + $0x51] sm:$0xff]
        %v1907 = vld [vmem:[%s1798 + $0x61] sm:$0xff]
        %v1908 = vld [vmem:[%s1798 + $0x69] sm:$0xff]
        %v1909 = vld [vmem:[%s1798 + $0x79] sm:$0xff]
        %v1910 = vld [vmem:[%s1798 + $0x81] sm:$0xff]
        %v1911 = vld [vmem:[%s1798 + $0x91] sm:$0xff]
        %v1912 = vld [vmem:[%s1798 + $0x99] sm:$0xff]
        %v1913 = vld [vmem:[%s1798 + $0xa9] sm:$0xff]
        %v1914 = vld [vmem:[%s1798 + $0xb1] sm:$0xff]
        %v1915 = vld [vmem:[%s1798 + $0xc1] sm:$0xff]
        %v1916 = vld [vmem:[%s1798 + $0xc9] sm:$0xff]
        %v1917 = vld [vmem:[%s1798 + $0xd9] sm:$0xff]
        %v1918 = vld [vmem:[%s1798 + $0xe1] sm:$0xff]
        %v1919 = vld [vmem:[%s1798 + $0xf1] sm:$0xff]
        %v1920 = vld [vmem:[%s1798 + $0xf9] sm:$0xff]
        %v1921 = vld [vmem:[%s1798 + $0x109] sm:$0xff]
        %v1922 = vld [vmem:[%s1798 + $0x111] sm:$0xff]
        %v1923 = vld [vmem:[%s1798 + $0x121] sm:$0xff]
        %v1924 = vld [vmem:[%s1798 + $0x129] sm:$0xff]
        %v1925 = vld [vmem:[%s1798 + $0x139] sm:$0xff]
        %v1926 = vld [vmem:[%s1798 + $0x141] sm:$0xff]
        %v1927 = vld [vmem:[%s1798 + $0x151] sm:$0xff]
        %v1928 = vld [vmem:[%s1798 + $0x159] sm:$0xff]
        %v1929 = vld [vmem:[%s1798 + $0x169] sm:$0xff]
        %v1930 = vld [vmem:[%s1798 + $0x171] sm:$0xff]
        %v1931 = vlaneseq
        %v1932 = vshrl.u32 %v1931, 7
        %v1933 = vsub.s32 7, %v1932
        %v1934 = vrot.slane %v1196, %v1933
        %v1935 = vmul.f32 %v1899, %v1934
        %v1936 = vmul.f32 %v1900, %v1934
        %v1937 = vmul.f32 %v1901, %v1934
        %v1938 = vmul.f32 %v1902, %v1934
        %v1939 = vmul.f32 %v1903, %v1934
        %v1940 = vmul.f32 %v1904, %v1934
        %v1941 = vmul.f32 %v1905, %v1934
        %v1942 = vmul.f32 %v1906, %v1934
        %v1943 = vmul.f32 %v1907, %v1934
        %v1944 = vmul.f32 %v1908, %v1934
        %v1945 = vmul.f32 %v1909, %v1934
        %v1946 = vmul.f32 %v1910, %v1934
        %v1947 = vmul.f32 %v1911, %v1934
        %v1948 = vmul.f32 %v1912, %v1934
        %v1949 = vmul.f32 %v1913, %v1934
        %v1950 = vmul.f32 %v1914, %v1934
        %v1951 = vmul.f32 %v1915, %v1934
        %v1952 = vmul.f32 %v1916, %v1934
        %v1953 = vmul.f32 %v1917, %v1934
        %v1954 = vmul.f32 %v1918, %v1934
        %v1955 = vmul.f32 %v1919, %v1934
        %v1956 = vmul.f32 %v1920, %v1934
        %v1957 = vmul.f32 %v1921, %v1934
        %v1958 = vmul.f32 %v1922, %v1934
        %v1959 = vmul.f32 %v1923, %v1934
        %v1960 = vmul.f32 %v1924, %v1934
        %v1961 = vmul.f32 %v1925, %v1934
        %v1962 = vmul.f32 %v1926, %v1934
        %v1963 = vmul.f32 %v1927, %v1934
        %v1964 = vmul.f32 %v1928, %v1934
        %v1965 = vmul.f32 %v1929, %v1934
        %v1966 = vmul.f32 %v1930, %v1934
        %v1967 = vadd.f32 %v1867, %v1935
        %v1968 = vadd.f32 %v1868, %v1936
        %v1969 = vadd.f32 %v1869, %v1937
        %v1970 = vadd.f32 %v1870, %v1938
        %v1971 = vadd.f32 %v1871, %v1939
        %v1972 = vadd.f32 %v1872, %v1940
        %v1973 = vadd.f32 %v1873, %v1941
        %v1974 = vadd.f32 %v1874, %v1942
        %v1975 = vadd.f32 %v1875, %v1943
        %v1976 = vadd.f32 %v1876, %v1944
        %v1977 = vadd.f32 %v1877, %v1945
        %v1978 = vadd.f32 %v1878, %v1946
        %v1979 = vadd.f32 %v1879, %v1947
        %v1980 = vadd.f32 %v1880, %v1948
        %v1981 = vadd.f32 %v1881, %v1949
        %v1982 = vadd.f32 %v1882, %v1950
        %v1983 = vadd.f32 %v1883, %v1951
        %v1984 = vadd.f32 %v1884, %v1952
        %v1985 = vadd.f32 %v1885, %v1953
        %v1986 = vadd.f32 %v1886, %v1954
        %v1987 = vadd.f32 %v1887, %v1955
        %v1988 = vadd.f32 %v1888, %v1956
        %v1989 = vadd.f32 %v1889, %v1957
        %v1990 = vadd.f32 %v1890, %v1958
        %v1991 = vadd.f32 %v1891, %v1959
        %v1992 = vadd.f32 %v1892, %v1960
        %v1993 = vadd.f32 %v1893, %v1961
        %v1994 = vadd.f32 %v1894, %v1962
        %v1995 = vadd.f32 %v1895, %v1963
        %v1996 = vadd.f32 %v1896, %v1964
        %v1997 = vadd.f32 %v1897, %v1965
        %v1998 = vadd.f32 %v1898, %v1966
        %v1999 = vld [vmem:[%s1798 + $0x2] sm:$0xff]
        %v2000 = vld [vmem:[%s1798 + $0xa] sm:$0xff]
        %v2001 = vld [vmem:[%s1798 + $0x1a] sm:$0xff]
        %v2002 = vld [vmem:[%s1798 + $0x22] sm:$0xff]
        %v2003 = vld [vmem:[%s1798 + $0x32] sm:$0xff]
        %v2004 = vld [vmem:[%s1798 + $0x3a] sm:$0xff]
        %v2005 = vld [vmem:[%s1798 + $0x4a] sm:$0xff]
        %v2006 = vld [vmem:[%s1798 + $0x52] sm:$0xff]
        %v2007 = vld [vmem:[%s1798 + $0x62] sm:$0xff]
        %v2008 = vld [vmem:[%s1798 + $0x6a] sm:$0xff]
        %v2009 = vld [vmem:[%s1798 + $0x7a] sm:$0xff]
        %v2010 = vld [vmem:[%s1798 + $0x82] sm:$0xff]
        %v2011 = vld [vmem:[%s1798 + $0x92] sm:$0xff]
        %v2012 = vld [vmem:[%s1798 + $0x9a] sm:$0xff]
        %v2013 = vld [vmem:[%s1798 + $0xaa] sm:$0xff]
        %v2014 = vld [vmem:[%s1798 + $0xb2] sm:$0xff]
        %v2015 = vld [vmem:[%s1798 + $0xc2] sm:$0xff]
        %v2016 = vld [vmem:[%s1798 + $0xca] sm:$0xff]
        %v2017 = vld [vmem:[%s1798 + $0xda] sm:$0xff]
        %v2018 = vld [vmem:[%s1798 + $0xe2] sm:$0xff]
        %v2019 = vld [vmem:[%s1798 + $0xf2] sm:$0xff]
        %v2020 = vld [vmem:[%s1798 + $0xfa] sm:$0xff]
        %v2021 = vld [vmem:[%s1798 + $0x10a] sm:$0xff]
        %v2022 = vld [vmem:[%s1798 + $0x112] sm:$0xff]
        %v2023 = vld [vmem:[%s1798 + $0x122] sm:$0xff]
        %v2024 = vld [vmem:[%s1798 + $0x12a] sm:$0xff]
        %v2025 = vld [vmem:[%s1798 + $0x13a] sm:$0xff]
        %v2026 = vld [vmem:[%s1798 + $0x142] sm:$0xff]
        %v2027 = vld [vmem:[%s1798 + $0x152] sm:$0xff]
        %v2028 = vld [vmem:[%s1798 + $0x15a] sm:$0xff]
        %v2029 = vld [vmem:[%s1798 + $0x16a] sm:$0xff]
        %v2030 = vld [vmem:[%s1798 + $0x172] sm:$0xff]
        %v2031 = vlaneseq
        %v2032 = vshrl.u32 %v2031, 7
        %v2033 = vsub.s32 0, %v2032
        %v2034 = vrot.slane %v1197, %v2033
        %v2035 = vmul.f32 %v1999, %v2034
        %v2036 = vmul.f32 %v2000, %v2034
        %v2037 = vmul.f32 %v2001, %v2034
        %v2038 = vmul.f32 %v2002, %v2034
        %v2039 = vmul.f32 %v2003, %v2034
        %v2040 = vmul.f32 %v2004, %v2034
        %v2041 = vmul.f32 %v2005, %v2034
        %v2042 = vmul.f32 %v2006, %v2034
        %v2043 = vmul.f32 %v2007, %v2034
        %v2044 = vmul.f32 %v2008, %v2034
        %v2045 = vmul.f32 %v2009, %v2034
        %v2046 = vmul.f32 %v2010, %v2034
        %v2047 = vmul.f32 %v2011, %v2034
        %v2048 = vmul.f32 %v2012, %v2034
        %v2049 = vmul.f32 %v2013, %v2034
        %v2050 = vmul.f32 %v2014, %v2034
        %v2051 = vmul.f32 %v2015, %v2034
        %v2052 = vmul.f32 %v2016, %v2034
        %v2053 = vmul.f32 %v2017, %v2034
        %v2054 = vmul.f32 %v2018, %v2034
        %v2055 = vmul.f32 %v2019, %v2034
        %v2056 = vmul.f32 %v2020, %v2034
        %v2057 = vmul.f32 %v2021, %v2034
        %v2058 = vmul.f32 %v2022, %v2034
        %v2059 = vmul.f32 %v2023, %v2034
        %v2060 = vmul.f32 %v2024, %v2034
        %v2061 = vmul.f32 %v2025, %v2034
        %v2062 = vmul.f32 %v2026, %v2034
        %v2063 = vmul.f32 %v2027, %v2034
        %v2064 = vmul.f32 %v2028, %v2034
        %v2065 = vmul.f32 %v2029, %v2034
        %v2066 = vmul.f32 %v2030, %v2034
        %v2067 = vadd.f32 %v1967, %v2035
        %v2068 = vadd.f32 %v1968, %v2036
        %v2069 = vadd.f32 %v1969, %v2037
        %v2070 = vadd.f32 %v1970, %v2038
        %v2071 = vadd.f32 %v1971, %v2039
        %v2072 = vadd.f32 %v1972, %v2040
        %v2073 = vadd.f32 %v1973, %v2041
        %v2074 = vadd.f32 %v1974, %v2042
        %v2075 = vadd.f32 %v1975, %v2043
        %v2076 = vadd.f32 %v1976, %v2044
        %v2077 = vadd.f32 %v1977, %v2045
        %v2078 = vadd.f32 %v1978, %v2046
        %v2079 = vadd.f32 %v1979, %v2047
        %v2080 = vadd.f32 %v1980, %v2048
        %v2081 = vadd.f32 %v1981, %v2049
        %v2082 = vadd.f32 %v1982, %v2050
        %v2083 = vadd.f32 %v1983, %v2051
        %v2084 = vadd.f32 %v1984, %v2052
        %v2085 = vadd.f32 %v1985, %v2053
        %v2086 = vadd.f32 %v1986, %v2054
        %v2087 = vadd.f32 %v1987, %v2055
        %v2088 = vadd.f32 %v1988, %v2056
        %v2089 = vadd.f32 %v1989, %v2057
        %v2090 = vadd.f32 %v1990, %v2058
        %v2091 = vadd.f32 %v1991, %v2059
        %v2092 = vadd.f32 %v1992, %v2060
        %v2093 = vadd.f32 %v1993, %v2061
        %v2094 = vadd.f32 %v1994, %v2062
        %v2095 = vadd.f32 %v1995, %v2063
        %v2096 = vadd.f32 %v1996, %v2064
        %v2097 = vadd.f32 %v1997, %v2065
        %v2098 = vadd.f32 %v1998, %v2066
        %v2099 = vld [vmem:[%s6] sm:$0x1]
        %v2101 = vlaneseq
        %v2102 = vshrl.u32 %v2101, 7
        %v2103 = vsub.s32 0, %v2102
        %v2104 = vrot.slane %v2099, %v2103
        %v2106 = vadd.f32 %v2067, %v2104
        %v2107 = vadd.f32 %v2068, %v2104
        %v2108 = vadd.f32 %v2069, %v2104
        %v2109 = vadd.f32 %v2070, %v2104
        %v2110 = vadd.f32 %v2071, %v2104
        %v2111 = vadd.f32 %v2072, %v2104
        %v2112 = vadd.f32 %v2073, %v2104
        %v2113 = vadd.f32 %v2074, %v2104
        %v2114 = vadd.f32 %v2075, %v2104
        %v2115 = vadd.f32 %v2076, %v2104
        %v2116 = vadd.f32 %v2077, %v2104
        %v2117 = vadd.f32 %v2078, %v2104
        %v2118 = vadd.f32 %v2079, %v2104
        %v2119 = vadd.f32 %v2080, %v2104
        %v2120 = vadd.f32 %v2081, %v2104
        %v2121 = vadd.f32 %v2082, %v2104
        %v2122 = vadd.f32 %v2083, %v2104
        %v2123 = vadd.f32 %v2084, %v2104
        %v2124 = vadd.f32 %v2085, %v2104
        %v2125 = vadd.f32 %v2086, %v2104
        %v2126 = vadd.f32 %v2087, %v2104
        %v2127 = vadd.f32 %v2088, %v2104
        %v2128 = vadd.f32 %v2089, %v2104
        %v2129 = vadd.f32 %v2090, %v2104
        %v2130 = vadd.f32 %v2091, %v2104
        %v2131 = vadd.f32 %v2092, %v2104
        %v2132 = vadd.f32 %v2093, %v2104
        %v2133 = vadd.f32 %v2094, %v2104
        %v2134 = vadd.f32 %v2095, %v2104
        %v2135 = vadd.f32 %v2096, %v2104
        %v2136 = vadd.f32 %v2097, %v2104
        %v2137 = vadd.f32 %v2098, %v2104
        %v2138 = vmax.f32 %v2106, 0.0
        %v2139 = vmax.f32 %v2107, 0.0
        %v2140 = vmax.f32 %v2108, 0.0
        %v2141 = vmax.f32 %v2109, 0.0
        %v2142 = vmax.f32 %v2110, 0.0
        %v2143 = vmax.f32 %v2111, 0.0
        %v2144 = vmax.f32 %v2112, 0.0
        %v2145 = vmax.f32 %v2113, 0.0
        %v2146 = vmax.f32 %v2114, 0.0
        %v2147 = vmax.f32 %v2115, 0.0
        %v2148 = vmax.f32 %v2116, 0.0
        %v2149 = vmax.f32 %v2117, 0.0
        %v2150 = vmax.f32 %v2118, 0.0
        %v2151 = vmax.f32 %v2119, 0.0
        %v2152 = vmax.f32 %v2120, 0.0
        %v2153 = vmax.f32 %v2121, 0.0
        %v2154 = vmax.f32 %v2122, 0.0
        %v2155 = vmax.f32 %v2123, 0.0
        %v2156 = vmax.f32 %v2124, 0.0
        %v2157 = vmax.f32 %v2125, 0.0
        %v2158 = vmax.f32 %v2126, 0.0
        %v2159 = vmax.f32 %v2127, 0.0
        %v2160 = vmax.f32 %v2128, 0.0
        %v2161 = vmax.f32 %v2129, 0.0
        %v2162 = vmax.f32 %v2130, 0.0
        %v2163 = vmax.f32 %v2131, 0.0
        %v2164 = vmax.f32 %v2132, 0.0
        %v2165 = vmax.f32 %v2133, 0.0
        %v2166 = vmax.f32 %v2134, 0.0
        %v2167 = vmax.f32 %v2135, 0.0
        %v2168 = vmax.f32 %v2136, 0.0
        %v2169 = vmax.f32 %v2137, 0.0
        %v2170 = vmin.f32 %v2138, 6.0
        %v2171 = vmin.f32 %v2139, 6.0
        %v2172 = vmin.f32 %v2140, 6.0
        %v2173 = vmin.f32 %v2141, 6.0
        %v2174 = vmin.f32 %v2142, 6.0
        %v2175 = vmin.f32 %v2143, 6.0
        %v2176 = vmin.f32 %v2144, 6.0
        %v2177 = vmin.f32 %v2145, 6.0
        %v2178 = vmin.f32 %v2146, 6.0
        %v2179 = vmin.f32 %v2147, 6.0
        %v2180 = vmin.f32 %v2148, 6.0
        %v2181 = vmin.f32 %v2149, 6.0
        %v2182 = vmin.f32 %v2150, 6.0
        %v2183 = vmin.f32 %v2151, 6.0
        %v2184 = vmin.f32 %v2152, 6.0
        %v2185 = vmin.f32 %v2153, 6.0
        %v2186 = vmin.f32 %v2154, 6.0
        %v2187 = vmin.f32 %v2155, 6.0
        %v2188 = vmin.f32 %v2156, 6.0
        %v2189 = vmin.f32 %v2157, 6.0
        %v2190 = vmin.f32 %v2158, 6.0
        %v2191 = vmin.f32 %v2159, 6.0
        %v2192 = vmin.f32 %v2160, 6.0
        %v2193 = vmin.f32 %v2161, 6.0
        %v2194 = vmin.f32 %v2162, 6.0
        %v2195 = vmin.f32 %v2163, 6.0
        %v2196 = vmin.f32 %v2164, 6.0
        %v2197 = vmin.f32 %v2165, 6.0
        %v2198 = vmin.f32 %v2166, 6.0
        %v2199 = vmin.f32 %v2167, 6.0
        %v2200 = vmin.f32 %v2168, 6.0
        %v2201 = vmin.f32 %v2169, 6.0
        %v2202 = vld [vmem:[%s7] sm:$0xff]
        %v2203 = vld [vmem:[%s7 + $0x8] sm:$0xff]
        %v2204 = vld [vmem:[%s7 + $0x10] sm:$0xff]
        %v2205 = vld [vmem:[%s7 + $0x18] sm:$0xff]
        %v2206 = vld [vmem:[%s7 + $0x20] sm:$0xff]
        %v2207 = vld [vmem:[%s7 + $0x28] sm:$0xff]
        %v2208 = vld [vmem:[%s7 + $0x30] sm:$0xff]
        %v2209 = vld [vmem:[%s7 + $0x38] sm:$0xff]
        %v2210 = vld [vmem:[%s7 + $0x40] sm:$0xff]
        %v2211 = vld [vmem:[%s7 + $0x48] sm:$0xff]
        %v2212 = vld [vmem:[%s7 + $0x50] sm:$0xff]
        %v2213 = vld [vmem:[%s7 + $0x58] sm:$0xff]
        %v2214 = vld [vmem:[%s8] sm:$0x1]
        %v2216 = vlaneseq
        %v2217 = vshrl.u32 %v2216, 7
        %v2218 = vsub.s32 0, %v2217
        %v2219 = vrot.slane %v2214, %v2218
        %v2222 = vsel %vm954, %v2170, 0
        %v2225 = vsel %vm954, %v2171, 0
        %v2228 = vsel %vm954, %v2172, 0
        %v2231 = vsel %vm954, %v2173, 0
        %v2234 = vsel %vm954, %v2174, 0
        %v2237 = vsel %vm954, %v2175, 0
        %v2240 = vsel %vm954, %v2176, 0
        %v2243 = vsel %vm954, %v2177, 0
        %v2246 = vsel %vm954, %v2178, 0
        %v2249 = vsel %vm954, %v2179, 0
        %v2252 = vsel %vm954, %v2180, 0
        %v2255 = vsel %vm954, %v2181, 0
        %v2258 = vsel %vm954, %v2182, 0
        %v2261 = vsel %vm954, %v2183, 0
        %v2264 = vsel %vm954, %v2184, 0
        %v2267 = vsel %vm954, %v2185, 0
        %v2270 = vsel %vm954, %v2186, 0
        %v2273 = vsel %vm954, %v2187, 0
        %v2276 = vsel %vm954, %v2188, 0
        %v2279 = vsel %vm954, %v2189, 0
        %v2282 = vsel %vm954, %v2190, 0
        %v2285 = vsel %vm954, %v2191, 0
        %v2288 = vsel %vm954, %v2192, 0
        %v2291 = vsel %vm954, %v2193, 0
        %v2294 = vsel %vm954, %v2194, 0
        %v2297 = vsel %vm954, %v2195, 0
        %v2300 = vsel %vm954, %v2196, 0
        %v2303 = vsel %vm954, %v2197, 0
        %v2306 = vsel %vm954, %v2198, 0
        %v2309 = vsel %vm954, %v2199, 0
        %v2312 = vsel %vm954, %v2200, 0
        %v2315 = vsel %vm954, %v2201, 0
        %2317 = vmatprep.subr.mxu0 0.0
        %2318 = vmatpush1.msra.mxu0 0.0
        %2319 = vmatprep.subr.mxu0 0.0
        %2320 = vmatpush1.msra.mxu0 0.0
        %2321 = vmatprep.subr.mxu0 0.0
        %2322 = vmatpush1.msra.mxu0 0.0
        %2323 = vmatprep.subr.mxu0 0.0
        %2324 = vmatpush1.msra.mxu0 0.0
        %2325 = vmatprep.subr.mxu0 0.0
        %2326 = vmatpush1.msra.mxu0 %v2213
        %2327 = vmatprep.subr.mxu0 0.0
        %2328 = vmatpush1.msra.mxu0 %v2212
        %2329 = vmatprep.subr.mxu0 0.0
        %2330 = vmatpush1.msra.mxu0 %v2211
        %2331 = vmatprep.subr.mxu0 0.0
        %2332 = vmatpush1.msra.mxu0 %v2210
        %2333 = vmatprep.subr.mxu0 0.0
        %2334 = vmatpush1.msra.mxu0 %v2209
        %2335 = vmatprep.subr.mxu0 0.0
        %2336 = vmatpush1.msra.mxu0 %v2208
        %2337 = vmatprep.subr.mxu0 0.0
        %2338 = vmatpush1.msra.mxu0 %v2207
        %2339 = vmatprep.subr.mxu0 0.0
        %2340 = vmatpush1.msra.mxu0 %v2206
        %2341 = vmatprep.subr.mxu0 0.0
        %2342 = vmatpush1.msra.mxu0 %v2205
        %2343 = vmatprep.subr.mxu0 0.0
        %2344 = vmatpush1.msra.mxu0 %v2204
        %2345 = vmatprep.subr.mxu0 0.0
        %2346 = vmatpush1.msra.mxu0 %v2203
        %2347 = vmatprep.subr.mxu0 0.0
        %2348 = vmatpush1.msra.mxu0 %v2202
        %2349 = vmatprep.subr.mxu0 0.0
        %2350 = vmatpush2.msra.mxu0 0.0
        %2351 = vmatprep.subr.mxu0 0.0
        %2352 = vmatpush2.msra.mxu0 0.0
        %2353 = vmatprep.subr.mxu0 0.0
        %2354 = vmatpush2.msra.mxu0 0.0
        %2355 = vmatprep.subr.mxu0 0.0
        %2356 = vmatpush2.msra.mxu0 0.0
        %2357 = vmatprep.subr.mxu0 0.0
        %2358 = vmatpush2.msra.mxu0 0.0
        %2359 = vmatprep.subr.mxu0 0.0
        %2360 = vmatpush2.msra.mxu0 0.0
        %2361 = vmatprep.subr.mxu0 0.0
        %2362 = vmatpush2.msra.mxu0 0.0
        %2363 = vmatprep.subr.mxu0 0.0
        %2364 = vmatpush2.msra.mxu0 0.0
        %2365 = vmatprep.subr.mxu0 0.0
        %2366 = vmatpush2.msra.mxu0 0.0
        %2367 = vmatprep.subr.mxu0 0.0
        %2368 = vmatpush2.msra.mxu0 0.0
        %2369 = vmatprep.subr.mxu0 0.0
        %2370 = vmatpush2.msra.mxu0 0.0
        %2371 = vmatprep.subr.mxu0 0.0
        %2372 = vmatpush2.msra.mxu0 0.0
        %2373 = vmatprep.subr.mxu0 0.0
        %2374 = vmatpush2.msra.mxu0 0.0
        %2375 = vmatprep.subr.mxu0 0.0
        %2376 = vmatpush2.msra.mxu0 0.0
        %2377 = vmatprep.subr.mxu0 0.0
        %2378 = vmatpush2.msra.mxu0 0.0
        %2379 = vmatprep.subr.mxu0 0.0
        %2380 = vmatpush2.msra.mxu0 0.0
        %2381 = vmatprep.mubr.f32.mxu0 0.0
        %2382 = vmatmul.mubr.f32.gmra.mxu0 %v2222
        %v2383 = vpop.f32.mrf.mxu0
        %v2384 = vadd.f32 %v2219, %v2383
        %v2385 = vpop.f32.mrf.mxu0
        %2386 = vmatprep.mubr.f32.mxu0 0.0
        %2387 = vmatmul.mubr.f32.gmra.mxu0 %v2225
        %v2388 = vpop.f32.mrf.mxu0
        %v2389 = vadd.f32 %v2219, %v2388
        %v2390 = vpop.f32.mrf.mxu0
        %2391 = vmatprep.mubr.f32.mxu0 0.0
        %2392 = vmatmul.mubr.f32.gmra.mxu0 %v2228
        %v2393 = vpop.f32.mrf.mxu0
        %v2394 = vadd.f32 %v2219, %v2393
        %v2395 = vpop.f32.mrf.mxu0
        %2396 = vmatprep.mubr.f32.mxu0 0.0
        %2397 = vmatmul.mubr.f32.gmra.mxu0 %v2231
        %v2398 = vpop.f32.mrf.mxu0
        %v2399 = vadd.f32 %v2219, %v2398
        %v2400 = vpop.f32.mrf.mxu0
        %2401 = vmatprep.mubr.f32.mxu0 0.0
        %2402 = vmatmul.mubr.f32.gmra.mxu0 %v2234
        %v2403 = vpop.f32.mrf.mxu0
        %v2404 = vadd.f32 %v2219, %v2403
        %v2405 = vpop.f32.mrf.mxu0
        %2406 = vmatprep.mubr.f32.mxu0 0.0
        %2407 = vmatmul.mubr.f32.gmra.mxu0 %v2237
        %v2408 = vpop.f32.mrf.mxu0
        %v2409 = vadd.f32 %v2219, %v2408
        %v2410 = vpop.f32.mrf.mxu0
        %2411 = vmatprep.mubr.f32.mxu0 0.0
        %2412 = vmatmul.mubr.f32.gmra.mxu0 %v2240
        %v2413 = vpop.f32.mrf.mxu0
        %v2414 = vadd.f32 %v2219, %v2413
        %v2415 = vpop.f32.mrf.mxu0
        %2416 = vmatprep.mubr.f32.mxu0 0.0
        %2417 = vmatmul.mubr.f32.gmra.mxu0 %v2243
        %v2418 = vpop.f32.mrf.mxu0
        %v2419 = vadd.f32 %v2219, %v2418
        %v2420 = vpop.f32.mrf.mxu0
        %2421 = vmatprep.mubr.f32.mxu0 0.0
        %2422 = vmatmul.mubr.f32.gmra.mxu0 %v2246
        %v2423 = vpop.f32.mrf.mxu0
        %v2424 = vadd.f32 %v2219, %v2423
        %v2425 = vpop.f32.mrf.mxu0
        %2426 = vmatprep.mubr.f32.mxu0 0.0
        %2427 = vmatmul.mubr.f32.gmra.mxu0 %v2249
        %v2428 = vpop.f32.mrf.mxu0
        %v2429 = vadd.f32 %v2219, %v2428
        %v2430 = vpop.f32.mrf.mxu0
        %2431 = vmatprep.mubr.f32.mxu0 0.0
        %2432 = vmatmul.mubr.f32.gmra.mxu0 %v2252
        %v2433 = vpop.f32.mrf.mxu0
        %v2434 = vadd.f32 %v2219, %v2433
        %v2435 = vpop.f32.mrf.mxu0
        %2436 = vmatprep.mubr.f32.mxu0 0.0
        %2437 = vmatmul.mubr.f32.gmra.mxu0 %v2255
        %v2438 = vpop.f32.mrf.mxu0
        %v2439 = vadd.f32 %v2219, %v2438
        %v2440 = vpop.f32.mrf.mxu0
        %2441 = vmatprep.mubr.f32.mxu0 0.0
        %2442 = vmatmul.mubr.f32.gmra.mxu0 %v2258
        %v2443 = vpop.f32.mrf.mxu0
        %v2444 = vadd.f32 %v2219, %v2443
        %v2445 = vpop.f32.mrf.mxu0
        %2446 = vmatprep.mubr.f32.mxu0 0.0
        %2447 = vmatmul.mubr.f32.gmra.mxu0 %v2261
        %v2448 = vpop.f32.mrf.mxu0
        %v2449 = vadd.f32 %v2219, %v2448
        %v2450 = vpop.f32.mrf.mxu0
        %2451 = vmatprep.mubr.f32.mxu0 0.0
        %2452 = vmatmul.mubr.f32.gmra.mxu0 %v2264
        %v2453 = vpop.f32.mrf.mxu0
        %v2454 = vadd.f32 %v2219, %v2453
        %v2455 = vpop.f32.mrf.mxu0
        %2456 = vmatprep.mubr.f32.mxu0 0.0
        %2457 = vmatmul.mubr.f32.gmra.mxu0 %v2267
        %v2458 = vpop.f32.mrf.mxu0
        %v2459 = vadd.f32 %v2219, %v2458
        %v2460 = vpop.f32.mrf.mxu0
        %2461 = vmatprep.mubr.f32.mxu0 0.0
        %2462 = vmatmul.mubr.f32.gmra.mxu0 %v2270
        %v2463 = vpop.f32.mrf.mxu0
        %v2464 = vadd.f32 %v2219, %v2463
        %v2465 = vpop.f32.mrf.mxu0
        %2466 = vmatprep.mubr.f32.mxu0 0.0
        %2467 = vmatmul.mubr.f32.gmra.mxu0 %v2273
        %v2468 = vpop.f32.mrf.mxu0
        %v2469 = vadd.f32 %v2219, %v2468
        %v2470 = vpop.f32.mrf.mxu0
        %2471 = vmatprep.mubr.f32.mxu0 0.0
        %2472 = vmatmul.mubr.f32.gmra.mxu0 %v2276
        %v2473 = vpop.f32.mrf.mxu0
        %v2474 = vadd.f32 %v2219, %v2473
        %v2475 = vpop.f32.mrf.mxu0
        %2476 = vmatprep.mubr.f32.mxu0 0.0
        %2477 = vmatmul.mubr.f32.gmra.mxu0 %v2279
        %v2478 = vpop.f32.mrf.mxu0
        %v2479 = vadd.f32 %v2219, %v2478
        %v2480 = vpop.f32.mrf.mxu0
        %2481 = vmatprep.mubr.f32.mxu0 0.0
        %2482 = vmatmul.mubr.f32.gmra.mxu0 %v2282
        %v2483 = vpop.f32.mrf.mxu0
        %v2484 = vadd.f32 %v2219, %v2483
        %v2485 = vpop.f32.mrf.mxu0
        %2486 = vmatprep.mubr.f32.mxu0 0.0
        %2487 = vmatmul.mubr.f32.gmra.mxu0 %v2285
        %v2488 = vpop.f32.mrf.mxu0
        %v2489 = vadd.f32 %v2219, %v2488
        %v2490 = vpop.f32.mrf.mxu0
        %2491 = vmatprep.mubr.f32.mxu0 0.0
        %2492 = vmatmul.mubr.f32.gmra.mxu0 %v2288
        %v2493 = vpop.f32.mrf.mxu0
        %v2494 = vadd.f32 %v2219, %v2493
        %v2495 = vpop.f32.mrf.mxu0
        %2496 = vmatprep.mubr.f32.mxu0 0.0
        %2497 = vmatmul.mubr.f32.gmra.mxu0 %v2291
        %v2498 = vpop.f32.mrf.mxu0
        %v2499 = vadd.f32 %v2219, %v2498
        %v2500 = vpop.f32.mrf.mxu0
        %2501 = vmatprep.mubr.f32.mxu0 0.0
        %2502 = vmatmul.mubr.f32.gmra.mxu0 %v2294
        %v2503 = vpop.f32.mrf.mxu0
        %v2504 = vadd.f32 %v2219, %v2503
        %v2505 = vpop.f32.mrf.mxu0
        %2506 = vmatprep.mubr.f32.mxu0 0.0
        %2507 = vmatmul.mubr.f32.gmra.mxu0 %v2297
        %v2508 = vpop.f32.mrf.mxu0
        %v2509 = vadd.f32 %v2219, %v2508
        %v2510 = vpop.f32.mrf.mxu0
        %2511 = vmatprep.mubr.f32.mxu0 0.0
        %2512 = vmatmul.mubr.f32.gmra.mxu0 %v2300
        %v2513 = vpop.f32.mrf.mxu0
        %v2514 = vadd.f32 %v2219, %v2513
        %v2515 = vpop.f32.mrf.mxu0
        %2516 = vmatprep.mubr.f32.mxu0 0.0
        %2517 = vmatmul.mubr.f32.gmra.mxu0 %v2303
        %v2518 = vpop.f32.mrf.mxu0
        %v2519 = vadd.f32 %v2219, %v2518
        %v2520 = vpop.f32.mrf.mxu0
        %2521 = vmatprep.mubr.f32.mxu0 0.0
        %2522 = vmatmul.mubr.f32.gmra.mxu0 %v2306
        %v2523 = vpop.f32.mrf.mxu0
        %v2524 = vadd.f32 %v2219, %v2523
        %v2525 = vpop.f32.mrf.mxu0
        %2526 = vmatprep.mubr.f32.mxu0 0.0
        %2527 = vmatmul.mubr.f32.gmra.mxu0 %v2309
        %v2528 = vpop.f32.mrf.mxu0
        %v2529 = vadd.f32 %v2219, %v2528
        %v2530 = vpop.f32.mrf.mxu0
        %2531 = vmatprep.mubr.f32.mxu0 0.0
        %2532 = vmatmul.mubr.f32.gmra.mxu0 %v2312
        %v2533 = vpop.f32.mrf.mxu0
        %v2534 = vadd.f32 %v2219, %v2533
        %v2535 = vpop.f32.mrf.mxu0
        %2536 = vmatprep.mubr.f32.mxu0 0.0
        %2537 = vmatmul.mubr.f32.gmra.mxu0 %v2315
        %v2538 = vpop.f32.mrf.mxu0
        %v2539 = vadd.f32 %v2219, %v2538
        %v2540 = vpop.f32.mrf.mxu0
        %2541 = vdwg.mxu0
        %v2542 = vld [vmem:[%s416] sm:$0xff]
        %v2543 = vld [vmem:[%s416 + $0x8] sm:$0xff]
        %v2544 = vld [vmem:[%s416 + $0x10] sm:$0xff]
        %v2545 = vld [vmem:[%s416 + $0x18] sm:$0xff]
        %v2546 = vld [vmem:[%s416 + $0x20] sm:$0xff]
        %v2547 = vld [vmem:[%s416 + $0x28] sm:$0xff]
        %v2548 = vld [vmem:[%s416 + $0x30] sm:$0xff]
        %v2549 = vld [vmem:[%s416 + $0x38] sm:$0xff]
        %v2550 = vld [vmem:[%s416 + $0x40] sm:$0xff]
        %v2551 = vld [vmem:[%s416 + $0x48] sm:$0xff]
        %v2552 = vld [vmem:[%s416 + $0x50] sm:$0xff]
        %v2553 = vld [vmem:[%s416 + $0x58] sm:$0xff]
        %v2554 = vld [vmem:[%s416 + $0x60] sm:$0xff]
        %v2555 = vld [vmem:[%s416 + $0x68] sm:$0xff]
        %v2556 = vld [vmem:[%s416 + $0x70] sm:$0xff]
        %v2557 = vld [vmem:[%s416 + $0x78] sm:$0xff]
        %v2558 = vld [vmem:[%s416 + $0x80] sm:$0xff]
        %v2559 = vld [vmem:[%s416 + $0x88] sm:$0xff]
        %v2560 = vld [vmem:[%s416 + $0x90] sm:$0xff]
        %v2561 = vld [vmem:[%s416 + $0x98] sm:$0xff]
        %v2562 = vld [vmem:[%s416 + $0xa0] sm:$0xff]
        %v2563 = vld [vmem:[%s416 + $0xa8] sm:$0xff]
        %v2564 = vld [vmem:[%s416 + $0xb0] sm:$0xff]
        %v2565 = vld [vmem:[%s416 + $0xb8] sm:$0xff]
        %v2566 = vld [vmem:[%s416 + $0xc0] sm:$0xff]
        %v2567 = vld [vmem:[%s416 + $0xc8] sm:$0xff]
        %v2568 = vld [vmem:[%s416 + $0xd0] sm:$0xff]
        %v2569 = vld [vmem:[%s416 + $0xd8] sm:$0xff]
        %v2570 = vld [vmem:[%s416 + $0xe0] sm:$0xff]
        %v2571 = vld [vmem:[%s416 + $0xe8] sm:$0xff]
        %v2572 = vld [vmem:[%s416 + $0xf0] sm:$0xff]
        %v2573 = vld [vmem:[%s416 + $0xf8] sm:$0xff]
        %v2574 = vadd.f32 %v2384, %v2542
        %v2575 = vadd.f32 %v2389, %v2543
        %v2576 = vadd.f32 %v2394, %v2544
        %v2577 = vadd.f32 %v2399, %v2545
        %v2578 = vadd.f32 %v2404, %v2546
        %v2579 = vadd.f32 %v2409, %v2547
        %v2580 = vadd.f32 %v2414, %v2548
        %v2581 = vadd.f32 %v2419, %v2549
        %v2582 = vadd.f32 %v2424, %v2550
        %v2583 = vadd.f32 %v2429, %v2551
        %v2584 = vadd.f32 %v2434, %v2552
        %v2585 = vadd.f32 %v2439, %v2553
        %v2586 = vadd.f32 %v2444, %v2554
        %v2587 = vadd.f32 %v2449, %v2555
        %v2588 = vadd.f32 %v2454, %v2556
        %v2589 = vadd.f32 %v2459, %v2557
        %v2590 = vadd.f32 %v2464, %v2558
        %v2591 = vadd.f32 %v2469, %v2559
        %v2592 = vadd.f32 %v2474, %v2560
        %v2593 = vadd.f32 %v2479, %v2561
        %v2594 = vadd.f32 %v2484, %v2562
        %v2595 = vadd.f32 %v2489, %v2563
        %v2596 = vadd.f32 %v2494, %v2564
        %v2597 = vadd.f32 %v2499, %v2565
        %v2598 = vadd.f32 %v2504, %v2566
        %v2599 = vadd.f32 %v2509, %v2567
        %v2600 = vadd.f32 %v2514, %v2568
        %v2601 = vadd.f32 %v2519, %v2569
        %v2602 = vadd.f32 %v2524, %v2570
        %v2603 = vadd.f32 %v2529, %v2571
        %v2604 = vadd.f32 %v2534, %v2572
        %v2605 = vadd.f32 %v2539, %v2573
        %2606 = vst.msk [vmem:[%s478] sm:$0xff] %vm567, %v2574
        %2607 = vst.msk [vmem:[%s478 + $0x8] sm:$0xff] %vm567, %v2575
        %2608 = vst.msk [vmem:[%s478 + $0x10] sm:$0xff] %vm567, %v2576
        %2609 = vst.msk [vmem:[%s478 + $0x18] sm:$0xff] %vm567, %v2577
        %2610 = vst.msk [vmem:[%s478 + $0x20] sm:$0xff] %vm567, %v2578
        %2611 = vst.msk [vmem:[%s478 + $0x28] sm:$0xff] %vm567, %v2579
        %2612 = vst.msk [vmem:[%s478 + $0x30] sm:$0xff] %vm567, %v2580
        %2613 = vst.msk [vmem:[%s478 + $0x38] sm:$0xff] %vm567, %v2581
        %2614 = vst.msk [vmem:[%s478 + $0x40] sm:$0xff] %vm567, %v2582
        %2615 = vst.msk [vmem:[%s478 + $0x48] sm:$0xff] %vm567, %v2583
        %2616 = vst.msk [vmem:[%s478 + $0x50] sm:$0xff] %vm567, %v2584
        %2617 = vst.msk [vmem:[%s478 + $0x58] sm:$0xff] %vm567, %v2585
        %2618 = vst.msk [vmem:[%s478 + $0x60] sm:$0xff] %vm567, %v2586
        %2619 = vst.msk [vmem:[%s478 + $0x68] sm:$0xff] %vm567, %v2587
        %2620 = vst.msk [vmem:[%s478 + $0x70] sm:$0xff] %vm567, %v2588
        %2621 = vst.msk [vmem:[%s478 + $0x78] sm:$0xff] %vm567, %v2589
        %2622 = vst.msk [vmem:[%s478 + $0x80] sm:$0xff] %vm567, %v2590
        %2623 = vst.msk [vmem:[%s478 + $0x88] sm:$0xff] %vm567, %v2591
        %2624 = vst.msk [vmem:[%s478 + $0x90] sm:$0xff] %vm567, %v2592
        %2625 = vst.msk [vmem:[%s478 + $0x98] sm:$0xff] %vm567, %v2593
        %2626 = vst.msk [vmem:[%s478 + $0xa0] sm:$0xff] %vm567, %v2594
        %2627 = vst.msk [vmem:[%s478 + $0xa8] sm:$0xff] %vm567, %v2595
        %2628 = vst.msk [vmem:[%s478 + $0xb0] sm:$0xff] %vm567, %v2596
        %2629 = vst.msk [vmem:[%s478 + $0xb8] sm:$0xff] %vm567, %v2597
        %2630 = vst.msk [vmem:[%s478 + $0xc0] sm:$0xff] %vm567, %v2598
        %2631 = vst.msk [vmem:[%s478 + $0xc8] sm:$0xff] %vm567, %v2599
        %2632 = vst.msk [vmem:[%s478 + $0xd0] sm:$0xff] %vm567, %v2600
        %2633 = vst.msk [vmem:[%s478 + $0xd8] sm:$0xff] %vm567, %v2601
        %2634 = vst.msk [vmem:[%s478 + $0xe0] sm:$0xff] %vm567, %v2602
        %2635 = vst.msk [vmem:[%s478 + $0xe8] sm:$0xff] %vm567, %v2603
        %2636 = vst.msk [vmem:[%s478 + $0xf0] sm:$0xff] %vm567, %v2604
        %2637 = vst.msk [vmem:[%s478 + $0xf8] sm:$0xff] %vm567, %v2605
        %s2638 = sand.u32 %s277, 1
        %s2639 = scalar_lea.sflag [#allocation5], %s2638
        %s2640 = sand.u32 %s277, 1
        %s2641 = smul.addr %s2640, 256
        %s2642 = scalar_lea.vmem [#allocation9], %s2641
        // Predicated region
        $region69: #{tpu_custom_call.1} parent=55 // pred_check
          %p2643 = pneg %p287
        $region70: #{tpu_custom_call.1} parent=55 // pred_check_branch
          %2645 = sbr.rel (%p2643) target = $region72
        $region71: #{tpu_custom_call.1} parent=55 // pred_region
          %s2646 = smul.u32 16, %s34
          %s2648 = ssub.s32 4096, 4096
          %2649 = vsyncadd %s2639, %s2648
          %s2650 = smul.addr %s2646, 2
          %s2651 = smul.addr %s33, 32
          %s2652 = sadd.s32 %s2650, %s2651
          %s2653 = smul.addr %s2652, 128
          %s2654 = scalar_lea.hbm %s9, %s2653
          %s2655 = sshll.u32 %s2642, 4
          %s2656 = int_to_ptr.vmem [resolvable:$true] %s2655
          %2661 = dma.vmem_to_hbm [thread:$0]  %s2656, 4096, %s2654, %s2639, 128, 128, 8
        $region72: #{tpu_custom_call.1} parent=55 // pred_fallthru
          _
      $region56: #{tpu_custom_call.1} parent=5 // pred_fallthru
        _
      %p2662 = scmp.le.s32.totalorder 2, %s24
      // Predicated region
      $region73: #{tpu_custom_call.1} parent=5 // pred_check
        %p2663 = pneg %p2662
      $region74: #{tpu_custom_call.1} parent=5 // pred_check_branch
        %2665 = sbr.rel (%p2663) target = $region76
      $region75: #{tpu_custom_call.1} parent=5 // pred_region
        %s2666 = ssub.s32 %s24, 2
        // Predicated region
        $region77: #{tpu_custom_call.1} parent=75 // pred_check
          %p2667 = pneg %p293
        $region78: #{tpu_custom_call.1} parent=75 // pred_check_branch
          %2669 = sbr.rel (%p2667) target = $region80
        $region79: #{tpu_custom_call.1} parent=75 // pred_region
          %s2670 = sand.u32 %s278, 1
          %s2671 = scalar_lea.sflag [#allocation5], %s2670
          %s2672 = sand.u32 %s278, 1
          %s2673 = smul.addr %s2672, 256
          %s2674 = scalar_lea.vmem [#allocation9], %s2673
          %2675 = dma.done %s2671, 4096
        $region80: #{tpu_custom_call.1} parent=75 // pred_fallthru
          _
      $region76: #{tpu_custom_call.1} parent=5 // pred_fallthru
        _
    $region6: #{tpu_custom_call.1} parent=1 // loop_footer
      %s28 = sadd.s32 1, %s24
    $region7: #{tpu_custom_call.1} parent=1 // loop_footer_branch
      %23 = sbr.rel target = $region3
    $region8: #{tpu_custom_call.1} parent=1 // loop_exit
      _
    %2676 = vsyncpa [#allocation4], 1
    %s2677 = scalar_lea.sflag [#allocation4], 1
    %2678 = vsyncpa %s2677, 1
    %2679 = vsyncpa [#allocation7], 1
    %s2680 = scalar_lea.sflag [#allocation7], 1
    %2681 = vsyncpa %s2680, 1
    %2682 = vsyncpa [#allocation5], 1
    %s2683 = scalar_lea.sflag [#allocation5], 1
    %2684 = vsyncpa %s2683, 1

</llo_original>
